<compile_context>
chip_gen: v7x
topology: tpu7x:2x2x1
jax: 0.10.0
libtpu: 0.0.40
codegen_flags: <defaults>
</compile_context>

<pallas_src>
import numpy as np
import jax
import jax.numpy as jnp
from jax.experimental import pallas as pl
from jax.experimental.pallas import tpu as pltpu


# ---------------------------------------------------------------------------
# Fused kernel: layer1 -> block1 -> layer2 -> block2 -> GAP -> fc
# ---------------------------------------------------------------------------
def _fused_supernet_kernel(*refs):
    """refs = (x, sdn, sup, band_1, bias_1, ..., band_L, bias_L, gfc, bfc, out)

    x     : (1, H, W*C0)      one image, lane-dense NHWC-flattened
    sdn   : (H, H)            row shift-down matrix (out[h] = in[h-1], row 0 -> 0)
    sup   : (H, H)            row shift-up   matrix (out[h] = in[h+1], last -> 0)
    band_i: (W*Cin, 3*W*Cout) banded 3x3 conv weights, columns [kh=0 | kh=1 | kh=2]
    bias_i: (1, W*Cout)       bias tiled along W
    gfc   : (W*C_last, ncls)  fc weight tiled along W, pre-scaled by 1/(H*W)
    bfc   : (1, ncls)
    out   : (1, 1, ncls)
    """
    x_ref, sdn_ref, sup_ref = refs[:3]
    gfc_ref, bfc_ref, o_ref = refs[-3:]
    conv_refs = refs[3:-3]

    sdn = sdn_ref[...]
    sup = sup_ref[...]
    a = x_ref[0]                                    # (H, W*C0), lane-dense

    for i in range(0, len(conv_refs), 2):
        w_ref, b_ref = conv_refs[i], conv_refs[i + 1]
        n_out = b_ref.shape[1]                      # W*Cout (multiple of 128)
        # One MXU matmul produces the three kh taps side by side (128-aligned).
        p = jnp.dot(a, w_ref[...], preferred_element_type=jnp.float32)
        y = (p[:, n_out:2 * n_out]                                   # kh = 1
             + jnp.dot(sdn, p[:, :n_out],
                       preferred_element_type=jnp.float32)           # kh = 0
             + jnp.dot(sup, p[:, 2 * n_out:],
                       preferred_element_type=jnp.float32))          # kh = 2
        a = jnp.maximum(y + b_ref[...], 0.0)        # bias + ReLU -> (H, W*Cout)

    # Global average pool + fc (the 1/(H*W) factor is folded into gfc).
    colsum = jnp.sum(a, axis=0, keepdims=True)                       # (1, W*C_last)
    logits = jnp.dot(colsum, gfc_ref[...],
                     preferred_element_type=jnp.float32) + bfc_ref[...]
    o_ref[...] = logits.reshape(o_ref.shape).astype(o_ref.dtype)


# ---------------------------------------------------------------------------
# Parameter repacking (done once, outside jit)
# ---------------------------------------------------------------------------
def _band_cat_weight(w, W):
    """(3,3,Cin,Cout) HWIO conv weight -> (W*Cin, 3*W*Cout) banded matrix."""
    w = np.asarray(w, np.float32)
    cin, cout = w.shape[2], w.shape[3]
    band = np.zeros((W * cin, 3 * W * cout), np.float32)
    for kh in range(3):
        col0 = kh * W * cout
        for wo in range(W):
            for kw in range(3):
                wi = wo + kw - 1
                if 0 <= wi < W:                       # SAME padding along W
                    band[wi * cin:(wi + 1) * cin,
                         col0 + wo * cout:col0 + (wo + 1) * cout] = w[kh, kw]
    return jnp.asarray(band)


def prepare_pallas_params(params, H, W):
    """Repack conv/fc parameters into the fused kernel's banded layout."""
    convs = ([params["layer1"]] + list(params["block1"])
             + [params["layer2"]] + list(params["block2"]))
    bands, biases = [], []
    for w, b in convs:
        cout = w.shape[-1]
        bands.append(_band_cat_weight(w, W))
        biases.append(jnp.asarray(
            np.tile(np.asarray(b, np.float32), W).reshape(1, W * cout)))
    wfc, bfc = params["fc"]
    gfc = jnp.asarray(np.tile(np.asarray(wfc, np.float32), (W, 1)) / float(H * W))
    return {
        "bands": bands,
        "biases": biases,
        "gfc": gfc,
        "bfc": jnp.asarray(np.asarray(bfc, np.float32).reshape(1, -1)),
        "sdn": jnp.asarray(np.eye(H, k=-1, dtype=np.float32)),
        "sup": jnp.asarray(np.eye(H, k=1, dtype=np.float32)),
    }


# ---------------------------------------------------------------------------
# Wrapper
# ---------------------------------------------------------------------------
def _const_spec(shape):
    zeros = (0,) * len(shape)
    return pl.BlockSpec(shape, lambda n: zeros)


@jax.jit
def sample_forward(x_nchw, prepped):
    """Pallas forward of Sample. x_nchw: (N, C, H, W) like the PyTorch module."""
    N, C0, H, W = x_nchw.shape
    ncls = prepped["gfc"].shape[-1]
    # NCHW -> lane-dense (N, H, W*C) slab (pure layout plumbing, done once).
    x2d = jnp.transpose(x_nchw, (0, 2, 3, 1)).reshape(N, H, W * C0)

    inputs = [x2d, prepped["sdn"], prepped["sup"]]
    for band, bias in zip(prepped["bands"], prepped["biases"]):
        inputs += [band, bias]
    inputs += [prepped["gfc"], prepped["bfc"]]

    in_specs = [pl.BlockSpec((1, H, W * C0), lambda n: (n, 0, 0))]
    in_specs += [_const_spec(a.shape) for a in inputs[1:]]

    out = pl.pallas_call(
        _fused_supernet_kernel,
        out_shape=jax.ShapeDtypeStruct((N, 1, ncls), x_nchw.dtype),
        grid=(N,),
        in_specs=in_specs,
        out_specs=pl.BlockSpec((1, 1, ncls), lambda n: (n, 0, 0)),
        compiler_params=pltpu.CompilerParams(
            dimension_semantics=("parallel",),       # v7x: one image per TC
            vmem_limit_bytes=32 * 1024 * 1024),
    )(*inputs)
    return out[:, 0, :]


# ---------------------------------------------------------------------------
# Pure-JAX reference (for correctness checking only)
# ---------------------------------------------------------------------------
def _ref_conv3x3_relu(x_nhwc, w, b):
    y = jax.lax.conv_general_dilated(
        x_nhwc, w, window_strides=(1, 1), padding="SAME",
        dimension_numbers=("NHWC", "HWIO", "NHWC"))
    return jnp.maximum(y + b[None, None, None, :], 0.0)


def _ref_forward(x_nchw, params):
    out = jnp.transpose(x_nchw, (0, 2, 3, 1))
    out = _ref_conv3x3_relu(out, *params["layer1"])
    for p in params["block1"]:
        out = _ref_conv3x3_relu(out, *p)
    out = _ref_conv3x3_relu(out, *params["layer2"])
    for p in params["block2"]:
        out = _ref_conv3x3_relu(out, *p)
    pooled = jnp.mean(out, axis=(1, 2))
    return pooled @ params["fc"][0] + params["fc"][1][None, :]


# ---------------------------------------------------------------------------
# Parameter init + main
# ---------------------------------------------------------------------------
def _conv_params(key, cin, cout):
    kw_, kb_ = jax.random.split(key)
    w = jax.random.normal(kw_, (3, 3, cin, cout), jnp.float32) * 0.1
    b = jax.random.normal(kb_, (cout,), jnp.float32) * 0.1
    return (w, b)


def make_params(key):
    ks = jax.random.split(key, 6)
    return {
        "layer1": _conv_params(ks[0], 4, 8),
        "block1": [_conv_params(ks[1], 8, 8), _conv_params(ks[2], 8, 8)],
        "layer2": _conv_params(ks[3], 8, 16),
        "block2": [_conv_params(ks[4], 16, 16)],
        "fc": (jax.random.normal(ks[5], (16, 10), jnp.float32) * 0.1,
               jnp.zeros((10,), jnp.float32)),
    }


if __name__ == "__main__":
    key = jax.random.PRNGKey(0)
    kx, kp = jax.random.split(key)
    x = jax.random.normal(kx, (2, 4, 16, 16), jnp.float32)   # NCHW, like torch
    params = make_params(kp)
    prepped = prepare_pallas_params(params, H=16, W=16)

    out = sample_forward(x, prepped)
    out = jax.block_until_ready(out)
    assert out.shape == (2, 10), out.shape

    ref = _ref_forward(x, params)
    if not jnp.allclose(out, ref, rtol=5e-4, atol=5e-4):
        raise AssertionError("Pallas output does not match JAX reference")

    print("KERNEL_OK")
</pallas_src>

<mosaic_0001>
module attributes {stable_mosaic.version = 11 : i64} {
  func.func @_fused_supernet_kernel(%arg0: i32, %arg1: memref<1x16x64xf32, #tpu.memory_space<vmem>>, %arg2: memref<16x16xf32, #tpu.memory_space<vmem>>, %arg3: memref<16x16xf32, #tpu.memory_space<vmem>>, %arg4: memref<64x384xf32, #tpu.memory_space<vmem>>, %arg5: memref<1x128xf32, #tpu.memory_space<vmem>>, %arg6: memref<128x384xf32, #tpu.memory_space<vmem>>, %arg7: memref<1x128xf32, #tpu.memory_space<vmem>>, %arg8: memref<128x384xf32, #tpu.memory_space<vmem>>, %arg9: memref<1x128xf32, #tpu.memory_space<vmem>>, %arg10: memref<128x768xf32, #tpu.memory_space<vmem>>, %arg11: memref<1x256xf32, #tpu.memory_space<vmem>>, %arg12: memref<256x768xf32, #tpu.memory_space<vmem>>, %arg13: memref<1x256xf32, #tpu.memory_space<vmem>>, %arg14: memref<256x10xf32, #tpu.memory_space<vmem>>, %arg15: memref<1x10xf32, #tpu.memory_space<vmem>>, %arg16: memref<1x1x10xf32, #tpu.memory_space<vmem>>) attributes {dimension_semantics = [#tpu.dimension_semantics<parallel>], iteration_bounds = array<i64: 2>, scalar_prefetch = 0 : i64, scratch_operands = 0 : i64, tpu.core_type = #tpu.core_type<tc>, window_params = [{transform_indices = @transform_0, window_bounds = array<i64: 1, 16, 64>}, {pipeline_mode = #tpu.pipeline_mode<synchronous>, transform_indices = @transform_1, window_bounds = array<i64: 16, 16>}, {pipeline_mode = #tpu.pipeline_mode<synchronous>, transform_indices = @transform_2, window_bounds = array<i64: 16, 16>}, {pipeline_mode = #tpu.pipeline_mode<synchronous>, transform_indices = @transform_3, window_bounds = array<i64: 64, 384>}, {pipeline_mode = #tpu.pipeline_mode<synchronous>, transform_indices = @transform_4, window_bounds = array<i64: 1, 128>}, {pipeline_mode = #tpu.pipeline_mode<synchronous>, transform_indices = @transform_5, window_bounds = array<i64: 128, 384>}, {pipeline_mode = #tpu.pipeline_mode<synchronous>, transform_indices = @transform_6, window_bounds = array<i64: 1, 128>}, {pipeline_mode = #tpu.pipeline_mode<synchronous>, transform_indices = @transform_7, window_bounds = array<i64: 128, 384>}, {pipeline_mode = #tpu.pipeline_mode<synchronous>, transform_indices = @transform_8, window_bounds = array<i64: 1, 128>}, {pipeline_mode = #tpu.pipeline_mode<synchronous>, transform_indices = @transform_9, window_bounds = array<i64: 128, 768>}, {pipeline_mode = #tpu.pipeline_mode<synchronous>, transform_indices = @transform_10, window_bounds = array<i64: 1, 256>}, {pipeline_mode = #tpu.pipeline_mode<synchronous>, transform_indices = @transform_11, window_bounds = array<i64: 256, 768>}, {pipeline_mode = #tpu.pipeline_mode<synchronous>, transform_indices = @transform_12, window_bounds = array<i64: 1, 256>}, {pipeline_mode = #tpu.pipeline_mode<synchronous>, transform_indices = @transform_13, window_bounds = array<i64: 256, 10>}, {pipeline_mode = #tpu.pipeline_mode<synchronous>, transform_indices = @transform_14, window_bounds = array<i64: 1, 10>}, {transform_indices = @transform_15, window_bounds = array<i64: 1, 1, 10>}]} {
    %c0 = arith.constant 0 : index
    %c0_0 = arith.constant 0 : index
    %0 = vector.load %arg2[%c0, %c0_0] : memref<16x16xf32, #tpu.memory_space<vmem>>, vector<16x16xf32>
    %c0_1 = arith.constant 0 : index
    %c0_2 = arith.constant 0 : index
    %1 = vector.load %arg3[%c0_1, %c0_2] : memref<16x16xf32, #tpu.memory_space<vmem>>, vector<16x16xf32>
    %c0_3 = arith.constant 0 : index
    %c0_4 = arith.constant 0 : index
    %c0_5 = arith.constant 0 : index
    %2 = vector.load %arg1[%c0_3, %c0_4, %c0_5] : memref<1x16x64xf32, #tpu.memory_space<vmem>>, vector<1x16x64xf32>
    %3 = vector.shape_cast %2 : vector<1x16x64xf32> to vector<16x64xf32>
    %c0_6 = arith.constant 0 : index
    %c0_7 = arith.constant 0 : index
    %4 = vector.load %arg4[%c0_6, %c0_7] : memref<64x384xf32, #tpu.memory_space<vmem>>, vector<64x384xf32>
    %cst = arith.constant dense<0.000000e+00> : vector<16x384xf32>
    %5 = tpu.matmul %3, %4, %cst {dimension_numbers = #tpu.dot_dimension_numbers<[1], [0], [0], [1], [0, 0, 1, 1], [], []>} : vector<16x64xf32>, vector<64x384xf32>, vector<16x384xf32> -> vector<16x384xf32>
    %6 = vector.extract_strided_slice %5 {offsets = [0, 128], sizes = [16, 128], strides = [1, 1]} : vector<16x384xf32> to vector<16x128xf32>
    %7 = vector.extract_strided_slice %5 {offsets = [0, 0], sizes = [16, 128], strides = [1, 1]} : vector<16x384xf32> to vector<16x128xf32>
    %cst_8 = arith.constant dense<0.000000e+00> : vector<16x128xf32>
    %8 = tpu.matmul %0, %7, %cst_8 {dimension_numbers = #tpu.dot_dimension_numbers<[1], [0], [0], [1], [0, 0, 1, 1], [], []>} : vector<16x16xf32>, vector<16x128xf32>, vector<16x128xf32> -> vector<16x128xf32>
    %9 = arith.addf %6, %8 : vector<16x128xf32>
    %10 = vector.extract_strided_slice %5 {offsets = [0, 256], sizes = [16, 128], strides = [1, 1]} : vector<16x384xf32> to vector<16x128xf32>
    %cst_9 = arith.constant dense<0.000000e+00> : vector<16x128xf32>
    %11 = tpu.matmul %1, %10, %cst_9 {dimension_numbers = #tpu.dot_dimension_numbers<[1], [0], [0], [1], [0, 0, 1, 1], [], []>} : vector<16x16xf32>, vector<16x128xf32>, vector<16x128xf32> -> vector<16x128xf32>
    %12 = arith.addf %9, %11 : vector<16x128xf32>
    %c0_10 = arith.constant 0 : index
    %c0_11 = arith.constant 0 : index
    %13 = vector.load %arg5[%c0_10, %c0_11] : memref<1x128xf32, #tpu.memory_space<vmem>>, vector<1x128xf32>
    %14 = vector.broadcast %13 : vector<1x128xf32> to vector<16x128xf32>
    %15 = arith.addf %12, %14 : vector<16x128xf32>
    %cst_12 = arith.constant 0.000000e+00 : f32
    %16 = vector.broadcast %cst_12 : f32 to vector<16x128xf32>
    %17 = arith.maximumf %15, %16 : vector<16x128xf32>
    %c0_13 = arith.constant 0 : index
    %c0_14 = arith.constant 0 : index
    %18 = vector.load %arg6[%c0_13, %c0_14] : memref<128x384xf32, #tpu.memory_space<vmem>>, vector<128x384xf32>
    %cst_15 = arith.constant dense<0.000000e+00> : vector<16x384xf32>
    %19 = tpu.matmul %17, %18, %cst_15 {dimension_numbers = #tpu.dot_dimension_numbers<[1], [0], [0], [1], [0, 0, 1, 1], [], []>} : vector<16x128xf32>, vector<128x384xf32>, vector<16x384xf32> -> vector<16x384xf32>
    %20 = vector.extract_strided_slice %19 {offsets = [0, 128], sizes = [16, 128], strides = [1, 1]} : vector<16x384xf32> to vector<16x128xf32>
    %21 = vector.extract_strided_slice %19 {offsets = [0, 0], sizes = [16, 128], strides = [1, 1]} : vector<16x384xf32> to vector<16x128xf32>
    %cst_16 = arith.constant dense<0.000000e+00> : vector<16x128xf32>
    %22 = tpu.matmul %0, %21, %cst_16 {dimension_numbers = #tpu.dot_dimension_numbers<[1], [0], [0], [1], [0, 0, 1, 1], [], []>} : vector<16x16xf32>, vector<16x128xf32>, vector<16x128xf32> -> vector<16x128xf32>
    %23 = arith.addf %20, %22 : vector<16x128xf32>
    %24 = vector.extract_strided_slice %19 {offsets = [0, 256], sizes = [16, 128], strides = [1, 1]} : vector<16x384xf32> to vector<16x128xf32>
    %cst_17 = arith.constant dense<0.000000e+00> : vector<16x128xf32>
    %25 = tpu.matmul %1, %24, %cst_17 {dimension_numbers = #tpu.dot_dimension_numbers<[1], [0], [0], [1], [0, 0, 1, 1], [], []>} : vector<16x16xf32>, vector<16x128xf32>, vector<16x128xf32> -> vector<16x128xf32>
    %26 = arith.addf %23, %25 : vector<16x128xf32>
    %c0_18 = arith.constant 0 : index
    %c0_19 = arith.constant 0 : index
    %27 = vector.load %arg7[%c0_18, %c0_19] : memref<1x128xf32, #tpu.memory_space<vmem>>, vector<1x128xf32>
    %28 = vector.broadcast %27 : vector<1x128xf32> to vector<16x128xf32>
    %29 = arith.addf %26, %28 : vector<16x128xf32>
    %cst_20 = arith.constant 0.000000e+00 : f32
    %30 = vector.broadcast %cst_20 : f32 to vector<16x128xf32>
    %31 = arith.maximumf %29, %30 : vector<16x128xf32>
    %c0_21 = arith.constant 0 : index
    %c0_22 = arith.constant 0 : index
    %32 = vector.load %arg8[%c0_21, %c0_22] : memref<128x384xf32, #tpu.memory_space<vmem>>, vector<128x384xf32>
    %cst_23 = arith.constant dense<0.000000e+00> : vector<16x384xf32>
    %33 = tpu.matmul %31, %32, %cst_23 {dimension_numbers = #tpu.dot_dimension_numbers<[1], [0], [0], [1], [0, 0, 1, 1], [], []>} : vector<16x128xf32>, vector<128x384xf32>, vector<16x384xf32> -> vector<16x384xf32>
    %34 = vector.extract_strided_slice %33 {offsets = [0, 128], sizes = [16, 128], strides = [1, 1]} : vector<16x384xf32> to vector<16x128xf32>
    %35 = vector.extract_strided_slice %33 {offsets = [0, 0], sizes = [16, 128], strides = [1, 1]} : vector<16x384xf32> to vector<16x128xf32>
    %cst_24 = arith.constant dense<0.000000e+00> : vector<16x128xf32>
    %36 = tpu.matmul %0, %35, %cst_24 {dimension_numbers = #tpu.dot_dimension_numbers<[1], [0], [0], [1], [0, 0, 1, 1], [], []>} : vector<16x16xf32>, vector<16x128xf32>, vector<16x128xf32> -> vector<16x128xf32>
    %37 = arith.addf %34, %36 : vector<16x128xf32>
    %38 = vector.extract_strided_slice %33 {offsets = [0, 256], sizes = [16, 128], strides = [1, 1]} : vector<16x384xf32> to vector<16x128xf32>
    %cst_25 = arith.constant dense<0.000000e+00> : vector<16x128xf32>
    %39 = tpu.matmul %1, %38, %cst_25 {dimension_numbers = #tpu.dot_dimension_numbers<[1], [0], [0], [1], [0, 0, 1, 1], [], []>} : vector<16x16xf32>, vector<16x128xf32>, vector<16x128xf32> -> vector<16x128xf32>
    %40 = arith.addf %37, %39 : vector<16x128xf32>
    %c0_26 = arith.constant 0 : index
    %c0_27 = arith.constant 0 : index
    %41 = vector.load %arg9[%c0_26, %c0_27] : memref<1x128xf32, #tpu.memory_space<vmem>>, vector<1x128xf32>
    %42 = vector.broadcast %41 : vector<1x128xf32> to vector<16x128xf32>
    %43 = arith.addf %40, %42 : vector<16x128xf32>
    %cst_28 = arith.constant 0.000000e+00 : f32
    %44 = vector.broadcast %cst_28 : f32 to vector<16x128xf32>
    %45 = arith.maximumf %43, %44 : vector<16x128xf32>
    %c0_29 = arith.constant 0 : index
    %c0_30 = arith.constant 0 : index
    %46 = vector.load %arg10[%c0_29, %c0_30] : memref<128x768xf32, #tpu.memory_space<vmem>>, vector<128x768xf32>
    %cst_31 = arith.constant dense<0.000000e+00> : vector<16x768xf32>
    %47 = tpu.matmul %45, %46, %cst_31 {dimension_numbers = #tpu.dot_dimension_numbers<[1], [0], [0], [1], [0, 0, 1, 1], [], []>} : vector<16x128xf32>, vector<128x768xf32>, vector<16x768xf32> -> vector<16x768xf32>
    %48 = vector.extract_strided_slice %47 {offsets = [0, 256], sizes = [16, 256], strides = [1, 1]} : vector<16x768xf32> to vector<16x256xf32>
    %49 = vector.extract_strided_slice %47 {offsets = [0, 0], sizes = [16, 256], strides = [1, 1]} : vector<16x768xf32> to vector<16x256xf32>
    %cst_32 = arith.constant dense<0.000000e+00> : vector<16x256xf32>
    %50 = tpu.matmul %0, %49, %cst_32 {dimension_numbers = #tpu.dot_dimension_numbers<[1], [0], [0], [1], [0, 0, 1, 1], [], []>} : vector<16x16xf32>, vector<16x256xf32>, vector<16x256xf32> -> vector<16x256xf32>
    %51 = arith.addf %48, %50 : vector<16x256xf32>
    %52 = vector.extract_strided_slice %47 {offsets = [0, 512], sizes = [16, 256], strides = [1, 1]} : vector<16x768xf32> to vector<16x256xf32>
    %cst_33 = arith.constant dense<0.000000e+00> : vector<16x256xf32>
    %53 = tpu.matmul %1, %52, %cst_33 {dimension_numbers = #tpu.dot_dimension_numbers<[1], [0], [0], [1], [0, 0, 1, 1], [], []>} : vector<16x16xf32>, vector<16x256xf32>, vector<16x256xf32> -> vector<16x256xf32>
    %54 = arith.addf %51, %53 : vector<16x256xf32>
    %c0_34 = arith.constant 0 : index
    %c0_35 = arith.constant 0 : index
    %55 = vector.load %arg11[%c0_34, %c0_35] : memref<1x256xf32, #tpu.memory_space<vmem>>, vector<1x256xf32>
    %56 = vector.broadcast %55 : vector<1x256xf32> to vector<16x256xf32>
    %57 = arith.addf %54, %56 : vector<16x256xf32>
    %cst_36 = arith.constant 0.000000e+00 : f32
    %58 = vector.broadcast %cst_36 : f32 to vector<16x256xf32>
    %59 = arith.maximumf %57, %58 : vector<16x256xf32>
    %c0_37 = arith.constant 0 : index
    %c0_38 = arith.constant 0 : index
    %60 = vector.load %arg12[%c0_37, %c0_38] : memref<256x768xf32, #tpu.memory_space<vmem>>, vector<256x768xf32>
    %cst_39 = arith.constant dense<0.000000e+00> : vector<16x768xf32>
    %61 = tpu.matmul %59, %60, %cst_39 {dimension_numbers = #tpu.dot_dimension_numbers<[1], [0], [0], [1], [0, 0, 1, 1], [], []>} : vector<16x256xf32>, vector<256x768xf32>, vector<16x768xf32> -> vector<16x768xf32>
    %62 = vector.extract_strided_slice %61 {offsets = [0, 256], sizes = [16, 256], strides = [1, 1]} : vector<16x768xf32> to vector<16x256xf32>
    %63 = vector.extract_strided_slice %61 {offsets = [0, 0], sizes = [16, 256], strides = [1, 1]} : vector<16x768xf32> to vector<16x256xf32>
    %cst_40 = arith.constant dense<0.000000e+00> : vector<16x256xf32>
    %64 = tpu.matmul %0, %63, %cst_40 {dimension_numbers = #tpu.dot_dimension_numbers<[1], [0], [0], [1], [0, 0, 1, 1], [], []>} : vector<16x16xf32>, vector<16x256xf32>, vector<16x256xf32> -> vector<16x256xf32>
    %65 = arith.addf %62, %64 : vector<16x256xf32>
    %66 = vector.extract_strided_slice %61 {offsets = [0, 512], sizes = [16, 256], strides = [1, 1]} : vector<16x768xf32> to vector<16x256xf32>
    %cst_41 = arith.constant dense<0.000000e+00> : vector<16x256xf32>
    %67 = tpu.matmul %1, %66, %cst_41 {dimension_numbers = #tpu.dot_dimension_numbers<[1], [0], [0], [1], [0, 0, 1, 1], [], []>} : vector<16x16xf32>, vector<16x256xf32>, vector<16x256xf32> -> vector<16x256xf32>
    %68 = arith.addf %65, %67 : vector<16x256xf32>
    %c0_42 = arith.constant 0 : index
    %c0_43 = arith.constant 0 : index
    %69 = vector.load %arg13[%c0_42, %c0_43] : memref<1x256xf32, #tpu.memory_space<vmem>>, vector<1x256xf32>
    %70 = vector.broadcast %69 : vector<1x256xf32> to vector<16x256xf32>
    %71 = arith.addf %68, %70 : vector<16x256xf32>
    %cst_44 = arith.constant 0.000000e+00 : f32
    %72 = vector.broadcast %cst_44 : f32 to vector<16x256xf32>
    %73 = arith.maximumf %71, %72 : vector<16x256xf32>
    %cst_45 = arith.constant dense<0.000000e+00> : vector<256xf32>
    %74 = vector.multi_reduction <add>, %73, %cst_45 [0] : vector<16x256xf32> to vector<256xf32>
    %75 = vector.shape_cast %74 : vector<256xf32> to vector<1x256xf32>
    %c0_46 = arith.constant 0 : index
    %c0_47 = arith.constant 0 : index
    %76 = vector.load %arg14[%c0_46, %c0_47] : memref<256x10xf32, #tpu.memory_space<vmem>>, vector<256x10xf32>
    %cst_48 = arith.constant dense<0.000000e+00> : vector<1x10xf32>
    %77 = tpu.matmul %75, %76, %cst_48 {dimension_numbers = #tpu.dot_dimension_numbers<[1], [0], [0], [1], [0, 0, 1, 1], [], []>} : vector<1x256xf32>, vector<256x10xf32>, vector<1x10xf32> -> vector<1x10xf32>
    %c0_49 = arith.constant 0 : index
    %c0_50 = arith.constant 0 : index
    %78 = vector.load %arg15[%c0_49, %c0_50] : memref<1x10xf32, #tpu.memory_space<vmem>>, vector<1x10xf32>
    %79 = arith.addf %77, %78 : vector<1x10xf32>
    %80 = vector.shape_cast %79 : vector<1x10xf32> to vector<1x1x10xf32>
    %c0_51 = arith.constant 0 : index
    %c0_52 = arith.constant 0 : index
    %c0_53 = arith.constant 0 : index
    %81 = vector.load %arg16[%c0_51, %c0_52, %c0_53] : memref<1x1x10xf32, #tpu.memory_space<vmem>>, vector<1x1x10xf32>
    tpu.vector_store %arg16[%c0_51, %c0_52, %c0_53], %80 {strides = array<i32>} : memref<1x1x10xf32, #tpu.memory_space<vmem>>, vector<1x1x10xf32>,
    return
  }
  func.func @transform_0(%arg0: i32) -> (i32, i32, i32) {
    %c0_i32 = arith.constant 0 : i32
    %c0_i32_0 = arith.constant 0 : i32
    %c0_i32_1 = arith.constant 0 : i32
    return %arg0, %c0_i32, %c0_i32_0 : i32, i32, i32
  }
  func.func @transform_1(%arg0: i32) -> (i32, i32) {
    %c0_i32 = arith.constant 0 : i32
    %c0_i32_0 = arith.constant 0 : i32
    %c0_i32_1 = arith.constant 0 : i32
    return %c0_i32, %c0_i32_0 : i32, i32
  }
  func.func @transform_2(%arg0: i32) -> (i32, i32) {
    %c0_i32 = arith.constant 0 : i32
    %c0_i32_0 = arith.constant 0 : i32
    %c0_i32_1 = arith.constant 0 : i32
    return %c0_i32, %c0_i32_0 : i32, i32
  }
  func.func @transform_3(%arg0: i32) -> (i32, i32) {
    %c0_i32 = arith.constant 0 : i32
    %c0_i32_0 = arith.constant 0 : i32
    %c0_i32_1 = arith.constant 0 : i32
    return %c0_i32, %c0_i32_0 : i32, i32
  }
  func.func @transform_4(%arg0: i32) -> (i32, i32) {
    %c0_i32 = arith.constant 0 : i32
    %c0_i32_0 = arith.constant 0 : i32
    %c0_i32_1 = arith.constant 0 : i32
    return %c0_i32, %c0_i32_0 : i32, i32
  }
  func.func @transform_5(%arg0: i32) -> (i32, i32) {
    %c0_i32 = arith.constant 0 : i32
    %c0_i32_0 = arith.constant 0 : i32
    %c0_i32_1 = arith.constant 0 : i32
    return %c0_i32, %c0_i32_0 : i32, i32
  }
  func.func @transform_6(%arg0: i32) -> (i32, i32) {
    %c0_i32 = arith.constant 0 : i32
    %c0_i32_0 = arith.constant 0 : i32
    %c0_i32_1 = arith.constant 0 : i32
    return %c0_i32, %c0_i32_0 : i32, i32
  }
  func.func @transform_7(%arg0: i32) -> (i32, i32) {
    %c0_i32 = arith.constant 0 : i32
    %c0_i32_0 = arith.constant 0 : i32
    %c0_i32_1 = arith.constant 0 : i32
    return %c0_i32, %c0_i32_0 : i32, i32
  }
  func.func @transform_8(%arg0: i32) -> (i32, i32) {
    %c0_i32 = arith.constant 0 : i32
    %c0_i32_0 = arith.constant 0 : i32
    %c0_i32_1 = arith.constant 0 : i32
    return %c0_i32, %c0_i32_0 : i32, i32
  }
  func.func @transform_9(%arg0: i32) -> (i32, i32) {
    %c0_i32 = arith.constant 0 : i32
    %c0_i32_0 = arith.constant 0 : i32
    %c0_i32_1 = arith.constant 0 : i32
    return %c0_i32, %c0_i32_0 : i32, i32
  }
  func.func @transform_10(%arg0: i32) -> (i32, i32) {
    %c0_i32 = arith.constant 0 : i32
    %c0_i32_0 = arith.constant 0 : i32
    %c0_i32_1 = arith.constant 0 : i32
    return %c0_i32, %c0_i32_0 : i32, i32
  }
  func.func @transform_11(%arg0: i32) -> (i32, i32) {
    %c0_i32 = arith.constant 0 : i32
    %c0_i32_0 = arith.constant 0 : i32
    %c0_i32_1 = arith.constant 0 : i32
    return %c0_i32, %c0_i32_0 : i32, i32
  }
  func.func @transform_12(%arg0: i32) -> (i32, i32) {
    %c0_i32 = arith.constant 0 : i32
    %c0_i32_0 = arith.constant 0 : i32
    %c0_i32_1 = arith.constant 0 : i32
    return %c0_i32, %c0_i32_0 : i32, i32
  }
  func.func @transform_13(%arg0: i32) -> (i32, i32) {
    %c0_i32 = arith.constant 0 : i32
    %c0_i32_0 = arith.constant 0 : i32
    %c0_i32_1 = arith.constant 0 : i32
    return %c0_i32, %c0_i32_0 : i32, i32
  }
  func.func @transform_14(%arg0: i32) -> (i32, i32) {
    %c0_i32 = arith.constant 0 : i32
    %c0_i32_0 = arith.constant 0 : i32
    %c0_i32_1 = arith.constant 0 : i32
    return %c0_i32, %c0_i32_0 : i32, i32
  }
  func.func @transform_15(%arg0: i32) -> (i32, i32, i32) {
    %c0_i32 = arith.constant 0 : i32
    %c0_i32_0 = arith.constant 0 : i32
    %c0_i32_1 = arith.constant 0 : i32
    return %arg0, %c0_i32, %c0_i32_0 : i32, i32, i32
  }
}

</mosaic_0001>

<llo_original>
// kernel: sample_forward.1
$region0: #{sample_forward.1}
  #allocation0 [shape = 'u32[]', space=smem, size = 0x4, offset = 0x4, fixed_abs, tag = 'smem constant byte address 0x4 - core index']
  #allocation1 [shape = 'u32[144,128]{1,0:T(1,128)}', space=vmem, size = 0x12000, scoped, tag = 'internal scratch']
  %s0 = inlined_call_operand.vmem [shape: f32[2,16,64], index: 0, kind: input, shape index: {}]
  %s1 = inlined_call_operand.vmem [shape: f32[16,16], index: 1, kind: input, shape index: {}]
  %s2 = inlined_call_operand.vmem [shape: f32[16,16], index: 2, kind: input, shape index: {}]
  %s3 = inlined_call_operand.vmem [shape: f32[64,384], index: 3, kind: input, shape index: {}]
  %s4 = inlined_call_operand.vmem [shape: f32[1,128], index: 4, kind: input, shape index: {}]
  %s5 = inlined_call_operand.vmem [shape: f32[128,384], index: 5, kind: input, shape index: {}]
  %s6 = inlined_call_operand.vmem [shape: f32[1,128], index: 6, kind: input, shape index: {}]
  %s7 = inlined_call_operand.hbm [shape: f32[128,384], index: 7, kind: input, shape index: {}]
  %s8 = inlined_call_operand.vmem [shape: f32[1,128], index: 8, kind: input, shape index: {}]
  %s9 = inlined_call_operand.hbm [shape: f32[128,768], index: 9, kind: input, shape index: {}]
  %s10 = inlined_call_operand.vmem [shape: f32[1,256], index: 10, kind: input, shape index: {}]
  %s11 = inlined_call_operand.hbm [shape: f32[256,768], index: 11, kind: input, shape index: {}]
  %s12 = inlined_call_operand.vmem [shape: f32[1,256], index: 12, kind: input, shape index: {}]
  %s13 = inlined_call_operand.vmem [shape: f32[256,10], index: 13, kind: input, shape index: {}]
  %s14 = inlined_call_operand.vmem [shape: f32[1,10], index: 14, kind: input, shape index: {}]
  %s15 = inlined_call_operand.hbm [shape: f32[2,1,10], index: 15, kind: output, shape index: {}]
  %s16 = sld [smem:[#allocation0]]
  $region105: #{sample_forward.1} parent=0
    _
  %s18 = ssub.s32 1, %s16
  %s19 = scalar_select 0, %s18, %s16
  $region1: #{sample_forward.1} parent=0
    #allocation2 [shape = 'u8[196608]{0}', space=vmem, size = 0x30000, scoped, tag = 'input window, operand 7, single buffered']
    #allocation3 [shape = 's32[2]{0}', space=sflag, size = 0x8, scoped, tag = 'scoped memory for sample_forward.1']
    #allocation4 [shape = 's32[2]{0}', space=sflag, size = 0x8, scoped, tag = 'scoped memory for sample_forward.1']
    #allocation5 [shape = 'u8[393216]{0}', space=vmem, size = 0x60000, scoped, tag = 'input window, operand 9, single buffered']
    #allocation6 [shape = 's32[1]{0}', space=sflag, size = 0x4, scoped, tag = 'scoped memory for sample_forward.1']
    #allocation7 [shape = 'u8[786432]{0}', space=vmem, size = 0xc0000, scoped, tag = 'input window, operand 11, single buffered']
    #allocation8 [shape = 'u8[1024]{0}', space=vmem, size = 0x400, scoped, tag = 'output window, operand 0']
    %20 = vsyncpa [#allocation3], 0
    %21 = vsyncpa [#allocation6], 0
    %22 = vsyncpa [#allocation4], 0
    %s23 = scalar_lea.sflag [#allocation4], 1
    %24 = vsyncpa %s23, 0
    loop: start=0, step=1, limit=4
    $region2: #{sample_forward.1} parent=1 // loop_pre_header
      _
    $region3: #{sample_forward.1} parent=1 // loop_header
      %s26 = sphi 0, %s30
      %p27 = scmp.ge.s32.totalorder %s26, 4
      %s36 = sphi 0, %s38
      %s39 = sphi 0, %s36
      %s40 = sphi 0, %s39
      %s56 = sphi 0, %s40
      %s60 = sphi 0, %s60
      %s62 = sphi 0, %s60
      %s63 = sphi 0, %s62
      %s77 = sphi 0, %s63
      %s81 = sphi 0, %s81
      %s83 = sphi 0, %s81
      %s84 = sphi 0, %s83
      %s98 = sphi 0, %s84
      %s102 = sphi 0, %s102
      %s104 = sphi 0, %s102
      %s105 = sphi 0, %s104
      %s119 = sphi 0, %s105
      %s123 = sphi 0, %s123
      %s125 = sphi 0, %s123
      %s126 = sphi 0, %s125
      %s140 = sphi 0, %s126
      %s144 = sphi 0, %s144
      %s146 = sphi 0, %s144
      %s147 = sphi 0, %s146
      %s161 = sphi 0, %s147
      %s165 = sphi 0, %s165
      %s167 = sphi 0, %s165
      %s168 = sphi 0, %s167
      %s182 = sphi 0, %s168
      %s186 = sphi 0, %s186
      %s188 = sphi 0, %s186
      %s189 = sphi 0, %s188
      %s203 = sphi 0, %s189
      %s207 = sphi 0, %s207
      %s209 = sphi 0, %s207
      %s210 = sphi 0, %s209
      %s224 = sphi 0, %s210
      %s228 = sphi 0, %s228
      %s230 = sphi 0, %s228
      %s231 = sphi 0, %s230
      %s245 = sphi 0, %s231
      %s249 = sphi 0, %s249
      %s251 = sphi 0, %s249
      %s252 = sphi 0, %s251
      %s266 = sphi 0, %s252
      %s270 = sphi 0, %s270
      %s272 = sphi 0, %s270
      %s273 = sphi 0, %s272
      %s287 = sphi 0, %s273
      %s291 = sphi 0, %s291
      %s293 = sphi 0, %s291
      %s294 = sphi 0, %s293
      %s308 = sphi 0, %s294
      %s312 = sphi 0, %s312
      %s314 = sphi 0, %s312
      %s315 = sphi 0, %s314
      %s329 = sphi 0, %s315
      %s333 = sphi 0, %s333
      %s335 = sphi 0, %s333
      %s336 = sphi 0, %s335
      %s350 = sphi 0, %s336
      %s356 = sphi 0, %s358
      %s359 = sphi 0, %s356
      %s360 = sphi 0, %s359
      %s376 = sphi 0, %s360
    $region4: #{sample_forward.1} parent=1 // loop_header_branch
      %29 = sbr.rel (%p27) target = $region8
    $region5: #{sample_forward.1} parent=1 // loop_body
      %s31 = ssub.s32 %s26, 1
      %s32 = ssub.s32 %s26, 2
      %s33 = sadd.s32 %s26, 1
      %s34 = ssub.s32 %s26, %s33
      %p35 = scmp.eq.s32.totalorder %s34, 0
      %s37 = sadd.s32 %s36, 1
      %s38 = scalar_select %p35, %s36, %s37
      %p41 = pneg %p35
      %p42 = scmp.eq.s32.totalorder %s26, 1
      %p43 = por %p41, %p42
      %p44 = scmp.ne.s32.totalorder %s36, %s39
      %p45 = scmp.eq.s32.totalorder %s26, 0
      %p46 = por %p44, %p45
      %p47 = scmp.ne.s32.totalorder %s36, %s39
      %p48 = scmp.eq.s32.totalorder %s31, 1
      %p49 = por %p47, %p48
      %p50 = scmp.ne.s32.totalorder %s39, %s40
      %p51 = scmp.eq.s32.totalorder %s31, 0
      %p52 = por %p50, %p51
      %p53 = scmp.ne.s32.totalorder %s39, %s40
      %p54 = scmp.eq.s32.totalorder %s32, 1
      %p55 = por %p53, %p54
      %p57 = scmp.ne.s32.totalorder %s40, %s56
      %p58 = scmp.eq.s32.totalorder %s32, 0
      %p59 = por %p57, %p58
      %s61 = sadd.s32 %s60, 1
      %p64 = scmp.eq.s32.totalorder %s26, 1
      %p65 = scmp.ne.s32.totalorder %s60, %s62
      %p66 = scmp.eq.s32.totalorder %s26, 0
      %p67 = por %p65, %p66
      %p68 = scmp.ne.s32.totalorder %s60, %s62
      %p69 = scmp.eq.s32.totalorder %s31, 1
      %p70 = por %p68, %p69
      %p71 = scmp.ne.s32.totalorder %s62, %s63
      %p72 = scmp.eq.s32.totalorder %s31, 0
      %p73 = por %p71, %p72
      %p74 = scmp.ne.s32.totalorder %s62, %s63
      %p75 = scmp.eq.s32.totalorder %s32, 1
      %p76 = por %p74, %p75
      %p78 = scmp.ne.s32.totalorder %s63, %s77
      %p79 = scmp.eq.s32.totalorder %s32, 0
      %p80 = por %p78, %p79
      %s82 = sadd.s32 %s81, 1
      %p85 = scmp.eq.s32.totalorder %s26, 1
      %p86 = scmp.ne.s32.totalorder %s81, %s83
      %p87 = scmp.eq.s32.totalorder %s26, 0
      %p88 = por %p86, %p87
      %p89 = scmp.ne.s32.totalorder %s81, %s83
      %p90 = scmp.eq.s32.totalorder %s31, 1
      %p91 = por %p89, %p90
      %p92 = scmp.ne.s32.totalorder %s83, %s84
      %p93 = scmp.eq.s32.totalorder %s31, 0
      %p94 = por %p92, %p93
      %p95 = scmp.ne.s32.totalorder %s83, %s84
      %p96 = scmp.eq.s32.totalorder %s32, 1
      %p97 = por %p95, %p96
      %p99 = scmp.ne.s32.totalorder %s84, %s98
      %p100 = scmp.eq.s32.totalorder %s32, 0
      %p101 = por %p99, %p100
      %s103 = sadd.s32 %s102, 1
      %p106 = scmp.eq.s32.totalorder %s26, 1
      %p107 = scmp.ne.s32.totalorder %s102, %s104
      %p108 = scmp.eq.s32.totalorder %s26, 0
      %p109 = por %p107, %p108
      %p110 = scmp.ne.s32.totalorder %s102, %s104
      %p111 = scmp.eq.s32.totalorder %s31, 1
      %p112 = por %p110, %p111
      %p113 = scmp.ne.s32.totalorder %s104, %s105
      %p114 = scmp.eq.s32.totalorder %s31, 0
      %p115 = por %p113, %p114
      %p116 = scmp.ne.s32.totalorder %s104, %s105
      %p117 = scmp.eq.s32.totalorder %s32, 1
      %p118 = por %p116, %p117
      %p120 = scmp.ne.s32.totalorder %s105, %s119
      %p121 = scmp.eq.s32.totalorder %s32, 0
      %p122 = por %p120, %p121
      %s124 = sadd.s32 %s123, 1
      %p127 = scmp.eq.s32.totalorder %s26, 1
      %p128 = scmp.ne.s32.totalorder %s123, %s125
      %p129 = scmp.eq.s32.totalorder %s26, 0
      %p130 = por %p128, %p129
      %p131 = scmp.ne.s32.totalorder %s123, %s125
      %p132 = scmp.eq.s32.totalorder %s31, 1
      %p133 = por %p131, %p132
      %p134 = scmp.ne.s32.totalorder %s125, %s126
      %p135 = scmp.eq.s32.totalorder %s31, 0
      %p136 = por %p134, %p135
      %p137 = scmp.ne.s32.totalorder %s125, %s126
      %p138 = scmp.eq.s32.totalorder %s32, 1
      %p139 = por %p137, %p138
      %p141 = scmp.ne.s32.totalorder %s126, %s140
      %p142 = scmp.eq.s32.totalorder %s32, 0
      %p143 = por %p141, %p142
      %s145 = sadd.s32 %s144, 1
      %p148 = scmp.eq.s32.totalorder %s26, 1
      %p149 = scmp.ne.s32.totalorder %s144, %s146
      %p150 = scmp.eq.s32.totalorder %s26, 0
      %p151 = por %p149, %p150
      %p152 = scmp.ne.s32.totalorder %s144, %s146
      %p153 = scmp.eq.s32.totalorder %s31, 1
      %p154 = por %p152, %p153
      %p155 = scmp.ne.s32.totalorder %s146, %s147
      %p156 = scmp.eq.s32.totalorder %s31, 0
      %p157 = por %p155, %p156
      %p158 = scmp.ne.s32.totalorder %s146, %s147
      %p159 = scmp.eq.s32.totalorder %s32, 1
      %p160 = por %p158, %p159
      %p162 = scmp.ne.s32.totalorder %s147, %s161
      %p163 = scmp.eq.s32.totalorder %s32, 0
      %p164 = por %p162, %p163
      %s166 = sadd.s32 %s165, 1
      %p169 = scmp.eq.s32.totalorder %s26, 1
      %p170 = scmp.ne.s32.totalorder %s165, %s167
      %p171 = scmp.eq.s32.totalorder %s26, 0
      %p172 = por %p170, %p171
      %p173 = scmp.ne.s32.totalorder %s165, %s167
      %p174 = scmp.eq.s32.totalorder %s31, 1
      %p175 = por %p173, %p174
      %p176 = scmp.ne.s32.totalorder %s167, %s168
      %p177 = scmp.eq.s32.totalorder %s31, 0
      %p178 = por %p176, %p177
      %p179 = scmp.ne.s32.totalorder %s167, %s168
      %p180 = scmp.eq.s32.totalorder %s32, 1
      %p181 = por %p179, %p180
      %p183 = scmp.ne.s32.totalorder %s168, %s182
      %p184 = scmp.eq.s32.totalorder %s32, 0
      %p185 = por %p183, %p184
      %s187 = sadd.s32 %s186, 1
      %p190 = scmp.eq.s32.totalorder %s26, 1
      %p191 = scmp.ne.s32.totalorder %s186, %s188
      %p192 = scmp.eq.s32.totalorder %s26, 0
      %p193 = por %p191, %p192
      %p194 = scmp.ne.s32.totalorder %s186, %s188
      %p195 = scmp.eq.s32.totalorder %s31, 1
      %p196 = por %p194, %p195
      %p197 = scmp.ne.s32.totalorder %s188, %s189
      %p198 = scmp.eq.s32.totalorder %s31, 0
      %p199 = por %p197, %p198
      %p200 = scmp.ne.s32.totalorder %s188, %s189
      %p201 = scmp.eq.s32.totalorder %s32, 1
      %p202 = por %p200, %p201
      %p204 = scmp.ne.s32.totalorder %s189, %s203
      %p205 = scmp.eq.s32.totalorder %s32, 0
      %p206 = por %p204, %p205
      %s208 = sadd.s32 %s207, 1
      %p211 = scmp.eq.s32.totalorder %s26, 1
      %p212 = scmp.ne.s32.totalorder %s207, %s209
      %p213 = scmp.eq.s32.totalorder %s26, 0
      %p214 = por %p212, %p213
      %p215 = scmp.ne.s32.totalorder %s207, %s209
      %p216 = scmp.eq.s32.totalorder %s31, 1
      %p217 = por %p215, %p216
      %p218 = scmp.ne.s32.totalorder %s209, %s210
      %p219 = scmp.eq.s32.totalorder %s31, 0
      %p220 = por %p218, %p219
      %p221 = scmp.ne.s32.totalorder %s209, %s210
      %p222 = scmp.eq.s32.totalorder %s32, 1
      %p223 = por %p221, %p222
      %p225 = scmp.ne.s32.totalorder %s210, %s224
      %p226 = scmp.eq.s32.totalorder %s32, 0
      %p227 = por %p225, %p226
      %s229 = sadd.s32 %s228, 1
      %p232 = scmp.eq.s32.totalorder %s26, 1
      %p233 = scmp.ne.s32.totalorder %s228, %s230
      %p234 = scmp.eq.s32.totalorder %s26, 0
      %p235 = por %p233, %p234
      %p236 = scmp.ne.s32.totalorder %s228, %s230
      %p237 = scmp.eq.s32.totalorder %s31, 1
      %p238 = por %p236, %p237
      %p239 = scmp.ne.s32.totalorder %s230, %s231
      %p240 = scmp.eq.s32.totalorder %s31, 0
      %p241 = por %p239, %p240
      %p242 = scmp.ne.s32.totalorder %s230, %s231
      %p243 = scmp.eq.s32.totalorder %s32, 1
      %p244 = por %p242, %p243
      %p246 = scmp.ne.s32.totalorder %s231, %s245
      %p247 = scmp.eq.s32.totalorder %s32, 0
      %p248 = por %p246, %p247
      %s250 = sadd.s32 %s249, 1
      %p253 = scmp.eq.s32.totalorder %s26, 1
      %p254 = scmp.ne.s32.totalorder %s249, %s251
      %p255 = scmp.eq.s32.totalorder %s26, 0
      %p256 = por %p254, %p255
      %p257 = scmp.ne.s32.totalorder %s249, %s251
      %p258 = scmp.eq.s32.totalorder %s31, 1
      %p259 = por %p257, %p258
      %p260 = scmp.ne.s32.totalorder %s251, %s252
      %p261 = scmp.eq.s32.totalorder %s31, 0
      %p262 = por %p260, %p261
      %p263 = scmp.ne.s32.totalorder %s251, %s252
      %p264 = scmp.eq.s32.totalorder %s32, 1
      %p265 = por %p263, %p264
      %p267 = scmp.ne.s32.totalorder %s252, %s266
      %p268 = scmp.eq.s32.totalorder %s32, 0
      %p269 = por %p267, %p268
      %s271 = sadd.s32 %s270, 1
      %p274 = scmp.eq.s32.totalorder %s26, 1
      %p275 = scmp.ne.s32.totalorder %s270, %s272
      %p276 = scmp.eq.s32.totalorder %s26, 0
      %p277 = por %p275, %p276
      %p278 = scmp.ne.s32.totalorder %s270, %s272
      %p279 = scmp.eq.s32.totalorder %s31, 1
      %p280 = por %p278, %p279
      %p281 = scmp.ne.s32.totalorder %s272, %s273
      %p282 = scmp.eq.s32.totalorder %s31, 0
      %p283 = por %p281, %p282
      %p284 = scmp.ne.s32.totalorder %s272, %s273
      %p285 = scmp.eq.s32.totalorder %s32, 1
      %p286 = por %p284, %p285
      %p288 = scmp.ne.s32.totalorder %s273, %s287
      %p289 = scmp.eq.s32.totalorder %s32, 0
      %p290 = por %p288, %p289
      %s292 = sadd.s32 %s291, 1
      %p295 = scmp.eq.s32.totalorder %s26, 1
      %p296 = scmp.ne.s32.totalorder %s291, %s293
      %p297 = scmp.eq.s32.totalorder %s26, 0
      %p298 = por %p296, %p297
      %p299 = scmp.ne.s32.totalorder %s291, %s293
      %p300 = scmp.eq.s32.totalorder %s31, 1
      %p301 = por %p299, %p300
      %p302 = scmp.ne.s32.totalorder %s293, %s294
      %p303 = scmp.eq.s32.totalorder %s31, 0
      %p304 = por %p302, %p303
      %p305 = scmp.ne.s32.totalorder %s293, %s294
      %p306 = scmp.eq.s32.totalorder %s32, 1
      %p307 = por %p305, %p306
      %p309 = scmp.ne.s32.totalorder %s294, %s308
      %p310 = scmp.eq.s32.totalorder %s32, 0
      %p311 = por %p309, %p310
      %s313 = sadd.s32 %s312, 1
      %p316 = scmp.eq.s32.totalorder %s26, 1
      %p317 = scmp.ne.s32.totalorder %s312, %s314
      %p318 = scmp.eq.s32.totalorder %s26, 0
      %p319 = por %p317, %p318
      %p320 = scmp.ne.s32.totalorder %s312, %s314
      %p321 = scmp.eq.s32.totalorder %s31, 1
      %p322 = por %p320, %p321
      %p323 = scmp.ne.s32.totalorder %s314, %s315
      %p324 = scmp.eq.s32.totalorder %s31, 0
      %p325 = por %p323, %p324
      %p326 = scmp.ne.s32.totalorder %s314, %s315
      %p327 = scmp.eq.s32.totalorder %s32, 1
      %p328 = por %p326, %p327
      %p330 = scmp.ne.s32.totalorder %s315, %s329
      %p331 = scmp.eq.s32.totalorder %s32, 0
      %p332 = por %p330, %p331
      %s334 = sadd.s32 %s333, 1
      %p337 = scmp.eq.s32.totalorder %s26, 1
      %p338 = scmp.ne.s32.totalorder %s333, %s335
      %p339 = scmp.eq.s32.totalorder %s26, 0
      %p340 = por %p338, %p339
      %p341 = scmp.ne.s32.totalorder %s333, %s335
      %p342 = scmp.eq.s32.totalorder %s31, 1
      %p343 = por %p341, %p342
      %p344 = scmp.ne.s32.totalorder %s335, %s336
      %p345 = scmp.eq.s32.totalorder %s31, 0
      %p346 = por %p344, %p345
      %p347 = scmp.ne.s32.totalorder %s335, %s336
      %p348 = scmp.eq.s32.totalorder %s32, 1
      %p349 = por %p347, %p348
      %p351 = scmp.ne.s32.totalorder %s336, %s350
      %p352 = scmp.eq.s32.totalorder %s32, 0
      %p353 = por %p351, %p352
      %s354 = ssub.s32 %s26, %s33
      %p355 = scmp.eq.s32.totalorder %s354, 0
      %s357 = sadd.s32 %s356, 1
      %s358 = scalar_select %p355, %s356, %s357
      %p361 = pneg %p355
      %p362 = scmp.eq.s32.totalorder %s26, 1
      %p363 = por %p361, %p362
      %p364 = scmp.ne.s32.totalorder %s356, %s359
      %p365 = scmp.eq.s32.totalorder %s26, 0
      %p366 = por %p364, %p365
      %p367 = scmp.ne.s32.totalorder %s356, %s359
      %p368 = scmp.eq.s32.totalorder %s31, 1
      %p369 = por %p367, %p368
      %p370 = scmp.ne.s32.totalorder %s359, %s360
      %p371 = scmp.eq.s32.totalorder %s31, 0
      %p372 = por %p370, %p371
      %p373 = scmp.ne.s32.totalorder %s359, %s360
      %p374 = scmp.eq.s32.totalorder %s32, 1
      %p375 = por %p373, %p374
      %p377 = scmp.ne.s32.totalorder %s360, %s376
      %p378 = scmp.eq.s32.totalorder %s32, 0
      %p379 = por %p377, %p378
      %p380 = scmp.le.s32.totalorder 1, %s26
      %p381 = scmp.lt.s32.totalorder %s26, 3
      %p382 = pnand %p380, %p381
      %p383 = pneg %p382
      // Predicated region
      $region9: #{sample_forward.1} parent=5 // pred_check
        _
      $region10: #{sample_forward.1} parent=5 // pred_check_branch
        %385 = sbr.rel (%p382) target = $region12
      $region11: #{sample_forward.1} parent=5 // pred_region
        %s386 = ssub.s32 %s26, 1
        // Predicated region
        $region13: #{sample_forward.1} parent=11 // pred_check
          %p387 = pneg %p73
        $region14: #{sample_forward.1} parent=11 // pred_check_branch
          %389 = sbr.rel (%p387) target = $region16
        $region15: #{sample_forward.1} parent=11 // pred_region
          _
        $region16: #{sample_forward.1} parent=11 // pred_fallthru
          _
        // Predicated region
        $region17: #{sample_forward.1} parent=11 // pred_check
          %p390 = pneg %p94
        $region18: #{sample_forward.1} parent=11 // pred_check_branch
          %392 = sbr.rel (%p390) target = $region20
        $region19: #{sample_forward.1} parent=11 // pred_region
          _
        $region20: #{sample_forward.1} parent=11 // pred_fallthru
          _
        // Predicated region
        $region21: #{sample_forward.1} parent=11 // pred_check
          %p393 = pneg %p115
        $region22: #{sample_forward.1} parent=11 // pred_check_branch
          %395 = sbr.rel (%p393) target = $region24
        $region23: #{sample_forward.1} parent=11 // pred_region
          _
        $region24: #{sample_forward.1} parent=11 // pred_fallthru
          _
        // Predicated region
        $region25: #{sample_forward.1} parent=11 // pred_check
          %p396 = pneg %p136
        $region26: #{sample_forward.1} parent=11 // pred_check_branch
          %398 = sbr.rel (%p396) target = $region28
        $region27: #{sample_forward.1} parent=11 // pred_region
          _
        $region28: #{sample_forward.1} parent=11 // pred_fallthru
          _
        // Predicated region
        $region29: #{sample_forward.1} parent=11 // pred_check
          %p399 = pneg %p157
        $region30: #{sample_forward.1} parent=11 // pred_check_branch
          %401 = sbr.rel (%p399) target = $region32
        $region31: #{sample_forward.1} parent=11 // pred_region
          _
        $region32: #{sample_forward.1} parent=11 // pred_fallthru
          _
        // Predicated region
        $region33: #{sample_forward.1} parent=11 // pred_check
          %p402 = pneg %p178
        $region34: #{sample_forward.1} parent=11 // pred_check_branch
          %404 = sbr.rel (%p402) target = $region36
        $region35: #{sample_forward.1} parent=11 // pred_region
          _
        $region36: #{sample_forward.1} parent=11 // pred_fallthru
          _
        // Predicated region
        $region37: #{sample_forward.1} parent=11 // pred_check
          %p405 = pneg %p199
        $region38: #{sample_forward.1} parent=11 // pred_check_branch
          %407 = sbr.rel (%p405) target = $region40
        $region39: #{sample_forward.1} parent=11 // pred_region
          %s409 = ssub.s32 6144, 6144
          %410 = vsyncadd [#allocation3], %s409
          %s411 = sshll.u32 [#allocation2], 4
          %s412 = int_to_ptr.vmem [resolvable:$true] %s411
          %417 = dma.hbm_to_vmem [thread:$0]  %s7, 6144, %s412, [#allocation3], 384, 384, 24
        $region40: #{sample_forward.1} parent=11 // pred_fallthru
          _
        // Predicated region
        $region41: #{sample_forward.1} parent=11 // pred_check
          %p418 = pneg %p220
        $region42: #{sample_forward.1} parent=11 // pred_check_branch
          %420 = sbr.rel (%p418) target = $region44
        $region43: #{sample_forward.1} parent=11 // pred_region
          _
        $region44: #{sample_forward.1} parent=11 // pred_fallthru
          _
        // Predicated region
        $region45: #{sample_forward.1} parent=11 // pred_check
          %p421 = pneg %p241
        $region46: #{sample_forward.1} parent=11 // pred_check_branch
          %423 = sbr.rel (%p421) target = $region48
        $region47: #{sample_forward.1} parent=11 // pred_region
          %s425 = ssub.s32 12288, 12288
          %426 = vsyncadd [#allocation6], %s425
          %s427 = sshll.u32 [#allocation5], 4
          %s428 = int_to_ptr.vmem [resolvable:$true] %s427
          %433 = dma.hbm_to_vmem [thread:$0]  %s9, 12288, %s428, [#allocation6], 768, 768, 48
        $region48: #{sample_forward.1} parent=11 // pred_fallthru
          _
        // Predicated region
        $region49: #{sample_forward.1} parent=11 // pred_check
          %p434 = pneg %p262
        $region50: #{sample_forward.1} parent=11 // pred_check_branch
          %436 = sbr.rel (%p434) target = $region52
        $region51: #{sample_forward.1} parent=11 // pred_region
          _
        $region52: #{sample_forward.1} parent=11 // pred_fallthru
          _
        // Predicated region
        $region53: #{sample_forward.1} parent=11 // pred_check
          %p437 = pneg %p283
        $region54: #{sample_forward.1} parent=11 // pred_check_branch
          %439 = sbr.rel (%p437) target = $region56
        $region55: #{sample_forward.1} parent=11 // pred_region
          %s441 = ssub.s32 24576, 24576
          %442 = vsyncadd [#allocation6], %s441
          %s443 = sshll.u32 [#allocation7], 4
          %s444 = int_to_ptr.vmem [resolvable:$true] %s443
          %449 = dma.hbm_to_vmem [thread:$0]  %s11, 24576, %s444, [#allocation6], 768, 768, 48
        $region56: #{sample_forward.1} parent=11 // pred_fallthru
          _
        // Predicated region
        $region57: #{sample_forward.1} parent=11 // pred_check
          %p450 = pneg %p304
        $region58: #{sample_forward.1} parent=11 // pred_check_branch
          %452 = sbr.rel (%p450) target = $region60
        $region59: #{sample_forward.1} parent=11 // pred_region
          _
        $region60: #{sample_forward.1} parent=11 // pred_fallthru
          _
        // Predicated region
        $region61: #{sample_forward.1} parent=11 // pred_check
          %p453 = pneg %p325
        $region62: #{sample_forward.1} parent=11 // pred_check_branch
          %455 = sbr.rel (%p453) target = $region64
        $region63: #{sample_forward.1} parent=11 // pred_region
          _
        $region64: #{sample_forward.1} parent=11 // pred_fallthru
          _
        // Predicated region
        $region65: #{sample_forward.1} parent=11 // pred_check
          %p456 = pneg %p346
        $region66: #{sample_forward.1} parent=11 // pred_check_branch
          %458 = sbr.rel (%p456) target = $region68
        $region67: #{sample_forward.1} parent=11 // pred_region
          _
        $region68: #{sample_forward.1} parent=11 // pred_fallthru
          _
      $region12: #{sample_forward.1} parent=5 // pred_fallthru
        _
      %p459 = scmp.lt.s32.totalorder %s26, 2
      // Predicated region
      $region69: #{sample_forward.1} parent=5 // pred_check
        %p460 = pneg %p459
      $region70: #{sample_forward.1} parent=5 // pred_check_branch
        %462 = sbr.rel (%p460) target = $region72
      $region71: #{sample_forward.1} parent=5 // pred_region
        // Predicated region
        $region73: #{sample_forward.1} parent=71 // pred_check
          %p463 = pneg %p46
        $region74: #{sample_forward.1} parent=71 // pred_check_branch
          %465 = sbr.rel (%p463) target = $region76
        $region75: #{sample_forward.1} parent=71 // pred_region
          %p466 = scmp.lt.s32.totalorder %s26, 1
          %s467 = scalar_select %p466, %s26, 1
          %s468 = smul.addr %s467, 2
          %s469 = smul.addr %s468, 8
          %s470 = scalar_lea.vmem %s0, %s469
        $region76: #{sample_forward.1} parent=71 // pred_fallthru
          _
      $region72: #{sample_forward.1} parent=5 // pred_fallthru
        _
      %p471 = scmp.le.s32.totalorder 1, %s26
      %p472 = scmp.lt.s32.totalorder %s26, 3
      %p473 = pnand %p471, %p472
      %p474 = pneg %p473
      // Predicated region
      $region77: #{sample_forward.1} parent=5 // pred_check
        _
      $region78: #{sample_forward.1} parent=5 // pred_check_branch
        %476 = sbr.rel (%p473) target = $region80
      $region79: #{sample_forward.1} parent=5 // pred_region
        %s477 = ssub.s32 %s26, 1
        // Predicated region
        $region81: #{sample_forward.1} parent=79 // pred_check
          %p478 = pneg %p199
        $region82: #{sample_forward.1} parent=79 // pred_check_branch
          %480 = sbr.rel (%p478) target = $region84
        $region83: #{sample_forward.1} parent=79 // pred_region
          %481 = dma.done [#allocation3], 6144
        $region84: #{sample_forward.1} parent=79 // pred_fallthru
          _
        // Predicated region
        $region85: #{sample_forward.1} parent=79 // pred_check
          %p482 = pneg %p241
        $region86: #{sample_forward.1} parent=79 // pred_check_branch
          %484 = sbr.rel (%p482) target = $region88
        $region87: #{sample_forward.1} parent=79 // pred_region
          %485 = dma.done [#allocation6], 12288
        $region88: #{sample_forward.1} parent=79 // pred_fallthru
          _
        // Predicated region
        $region89: #{sample_forward.1} parent=79 // pred_check
          %p486 = pneg %p283
        $region90: #{sample_forward.1} parent=79 // pred_check_branch
          %488 = sbr.rel (%p486) target = $region92
        $region91: #{sample_forward.1} parent=79 // pred_region
          %489 = dma.done [#allocation6], 24576
        $region92: #{sample_forward.1} parent=79 // pred_fallthru
          _
        %p490 = scmp.lt.s32.totalorder %s31, 1
        %s491 = scalar_select %p490, %s31, 1
        %s492 = smul.addr %s491, 2
        %s493 = smul.addr %s492, 8
        %s494 = scalar_lea.vmem %s0, %s493
        %p495 = pneg %p52
        %p496 = pneg %p49
        %p497 = pneg %p73
        %p498 = pneg %p70
        %p499 = pneg %p94
        %p500 = pneg %p91
        %p501 = pneg %p115
        %p502 = pneg %p112
        %p503 = pneg %p136
        %p504 = pneg %p133
        %p505 = pneg %p157
        %p506 = pneg %p154
        %p507 = pneg %p178
        %p508 = pneg %p175
        %p509 = pneg %p199
        %p510 = pneg %p196
        %p511 = pneg %p220
        %p512 = pneg %p217
        %p513 = pneg %p241
        %p514 = pneg %p238
        %p515 = pneg %p262
        %p516 = pneg %p259
        %p517 = pneg %p283
        %p518 = pneg %p280
        %p519 = pneg %p304
        %p520 = pneg %p301
        %p521 = pneg %p325
        %p522 = pneg %p322
        %p523 = pneg %p346
        %p524 = pneg %p343
        %p525 = pneg %p372
        %p526 = pneg %p369
        %s527 = sand.u32 %s359, 1
        %s528 = scalar_lea.sflag [#allocation4], %s527
        %s529 = sand.u32 %s359, 1
        %s530 = scalar_lea.vmem [#allocation8], %s529
        %p531 = scmp.lt.s32.totalorder %s31, 1
        %s532 = scalar_select %p531, %s31, 1
        %s533 = smul.addr %s532, 2
        %s534 = smul.addr %s533, 8
        %s535 = scalar_lea.vmem %s0, %s534
        %v536 = vld [vmem:[%s1] sm:$0xff]
        %v537 = vld [vmem:[%s1 + $0x8] sm:$0xff]
        %v538 = vld [vmem:[%s2] sm:$0xff]
        %v539 = vld [vmem:[%s2 + $0x8] sm:$0xff]
        %v540 = vld [vmem:[%s535] sm:$0xff]
        %v541 = vld [vmem:[%s535 + $0x8] sm:$0xff]
        %v542 = vld [vmem:[%s3] sm:$0xff]
        %v543 = vld [vmem:[%s3 + $0x8] sm:$0xff]
        %v544 = vld [vmem:[%s3 + $0x10] sm:$0xff]
        %v545 = vld [vmem:[%s3 + $0x18] sm:$0xff]
        %v546 = vld [vmem:[%s3 + $0x20] sm:$0xff]
        %v547 = vld [vmem:[%s3 + $0x28] sm:$0xff]
        %v548 = vld [vmem:[%s3 + $0x30] sm:$0xff]
        %v549 = vld [vmem:[%s3 + $0x38] sm:$0xff]
        %v550 = vld [vmem:[%s3 + $0x40] sm:$0xff]
        %v551 = vld [vmem:[%s3 + $0x48] sm:$0xff]
        %v552 = vld [vmem:[%s3 + $0x50] sm:$0xff]
        %v553 = vld [vmem:[%s3 + $0x58] sm:$0xff]
        %v554 = vld [vmem:[%s3 + $0x60] sm:$0xff]
        %v555 = vld [vmem:[%s3 + $0x68] sm:$0xff]
        %v556 = vld [vmem:[%s3 + $0x70] sm:$0xff]
        %v557 = vld [vmem:[%s3 + $0x78] sm:$0xff]
        %v558 = vld [vmem:[%s3 + $0x80] sm:$0xff]
        %v559 = vld [vmem:[%s3 + $0x88] sm:$0xff]
        %v560 = vld [vmem:[%s3 + $0x90] sm:$0xff]
        %v561 = vld [vmem:[%s3 + $0x98] sm:$0xff]
        %v562 = vld [vmem:[%s3 + $0xa0] sm:$0xff]
        %v563 = vld [vmem:[%s3 + $0xa8] sm:$0xff]
        %v564 = vld [vmem:[%s3 + $0xb0] sm:$0xff]
        %v565 = vld [vmem:[%s3 + $0xb8] sm:$0xff]
        %vm566 = vcmask 523264
        %v568 = vsel %vm566, %v540, 0
        %v571 = vsel %vm566, %v541, 0
        %573 = vmatprep.subr.mxu0 %v543
        %574 = vmatpush1.msra.mxu0 %v542
        %575 = vmatprep.subr.mxu0 %v546
        %576 = vmatpush1.msra.mxu0 %v545
        %577 = vmatprep.subr.mxu0 %v549
        %578 = vmatpush1.msra.mxu0 %v548
        %579 = vmatprep.subr.mxu0 %v552
        %580 = vmatpush1.msra.mxu0 %v551
        %581 = vmatprep.subr.mxu0 %v555
        %582 = vmatpush1.msra.mxu0 %v554
        %583 = vmatprep.subr.mxu0 %v558
        %584 = vmatpush1.msra.mxu0 %v557
        %585 = vmatprep.subr.mxu0 %v561
        %586 = vmatpush1.msra.mxu0 %v560
        %587 = vmatprep.subr.mxu0 %v564
        %588 = vmatpush1.msra.mxu0 %v563
        %589 = vmatprep.subr.mxu0 0.0
        %590 = vmatpush1.msra.mxu0 0.0
        %591 = vmatprep.subr.mxu0 0.0
        %592 = vmatpush1.msra.mxu0 0.0
        %593 = vmatprep.subr.mxu0 0.0
        %594 = vmatpush1.msra.mxu0 0.0
        %595 = vmatprep.subr.mxu0 0.0
        %596 = vmatpush1.msra.mxu0 0.0
        %597 = vmatprep.subr.mxu0 0.0
        %598 = vmatpush1.msra.mxu0 0.0
        %599 = vmatprep.subr.mxu0 0.0
        %600 = vmatpush1.msra.mxu0 0.0
        %601 = vmatprep.subr.mxu0 0.0
        %602 = vmatpush1.msra.mxu0 0.0
        %603 = vmatprep.subr.mxu0 0.0
        %604 = vmatpush1.msra.mxu0 0.0
        %605 = vmatprep.subr.mxu0 0.0
        %606 = vmatpush1.msra.mxu0 0.0
        %607 = vmatprep.subr.mxu0 0.0
        %608 = vmatpush1.msra.mxu0 0.0
        %609 = vmatprep.subr.mxu0 0.0
        %610 = vmatpush1.msra.mxu0 0.0
        %611 = vmatprep.subr.mxu0 0.0
        %612 = vmatpush1.msra.mxu0 0.0
        %613 = vmatprep.subr.mxu0 0.0
        %614 = vmatpush1.msra.mxu0 0.0
        %615 = vmatprep.subr.mxu0 0.0
        %616 = vmatpush1.msra.mxu0 0.0
        %617 = vmatprep.subr.mxu0 0.0
        %618 = vmatpush1.msra.mxu0 0.0
        %619 = vmatprep.subr.mxu0 0.0
        %620 = vmatpush1.msra.mxu0 0.0
        %621 = vmatprep.subr.mxu0 0.0
        %622 = vmatpush1.msra.mxu0 0.0
        %623 = vmatprep.subr.mxu0 0.0
        %624 = vmatpush1.msra.mxu0 0.0
        %625 = vmatprep.subr.mxu0 0.0
        %626 = vmatpush1.msra.mxu0 0.0
        %627 = vmatprep.subr.mxu0 0.0
        %628 = vmatpush1.msra.mxu0 0.0
        %629 = vmatprep.subr.mxu0 0.0
        %630 = vmatpush1.msra.mxu0 0.0
        %631 = vmatprep.subr.mxu0 0.0
        %632 = vmatpush1.msra.mxu0 0.0
        %633 = vmatprep.subr.mxu0 0.0
        %634 = vmatpush1.msra.mxu0 0.0
        %635 = vmatprep.subr.mxu0 0.0
        %636 = vmatpush1.msra.mxu0 0.0
        %637 = vmatprep.mubr.f32.mxu0 0.0
        %638 = vmatmul.mubr.f32.gmra.mrb[0].mxu0 %v568
        %v639 = vpop.f32.mrb[0].mxu0
        %v640 = vadd.f32 0.0, %v639
        %v641 = vpop.f32.mrb[0].mxu0
        %v642 = vadd.f32 0.0, %v641
        %643 = vmatprep.mubr.f32.mxu0 0.0
        %644 = vmatmul.mubr.f32.gmra.mrb[0].mxu0 %v571
        %v645 = vpop.f32.mrb[0].mxu0
        %v646 = vadd.f32 0.0, %v645
        %v647 = vpop.f32.mrb[0].mxu0
        %v648 = vadd.f32 0.0, %v647
        %649 = vdwg.mxu0
        %650 = vmatprep.subr.mxu0 0.0
        %651 = vmatpush1.msra.mxu0 %v544
        %652 = vmatprep.subr.mxu0 0.0
        %653 = vmatpush1.msra.mxu0 %v547
        %654 = vmatprep.subr.mxu0 0.0
        %655 = vmatpush1.msra.mxu0 %v550
        %656 = vmatprep.subr.mxu0 0.0
        %657 = vmatpush1.msra.mxu0 %v553
        %658 = vmatprep.subr.mxu0 0.0
        %659 = vmatpush1.msra.mxu0 %v556
        %660 = vmatprep.subr.mxu0 0.0
        %661 = vmatpush1.msra.mxu0 %v559
        %662 = vmatprep.subr.mxu0 0.0
        %663 = vmatpush1.msra.mxu0 %v562
        %664 = vmatprep.subr.mxu0 0.0
        %665 = vmatpush1.msra.mxu0 %v565
        %666 = vmatprep.subr.mxu0 0.0
        %667 = vmatpush1.msra.mxu0 0.0
        %668 = vmatprep.subr.mxu0 0.0
        %669 = vmatpush1.msra.mxu0 0.0
        %670 = vmatprep.subr.mxu0 0.0
        %671 = vmatpush1.msra.mxu0 0.0
        %672 = vmatprep.subr.mxu0 0.0
        %673 = vmatpush1.msra.mxu0 0.0
        %674 = vmatprep.subr.mxu0 0.0
        %675 = vmatpush1.msra.mxu0 0.0
        %676 = vmatprep.subr.mxu0 0.0
        %677 = vmatpush1.msra.mxu0 0.0
        %678 = vmatprep.subr.mxu0 0.0
        %679 = vmatpush1.msra.mxu0 0.0
        %680 = vmatprep.subr.mxu0 0.0
        %681 = vmatpush1.msra.mxu0 0.0
        %682 = vmatprep.subr.mxu0 0.0
        %683 = vmatpush1.msra.mxu0 0.0
        %684 = vmatprep.subr.mxu0 0.0
        %685 = vmatpush1.msra.mxu0 0.0
        %686 = vmatprep.subr.mxu0 0.0
        %687 = vmatpush1.msra.mxu0 0.0
        %688 = vmatprep.subr.mxu0 0.0
        %689 = vmatpush1.msra.mxu0 0.0
        %690 = vmatprep.subr.mxu0 0.0
        %691 = vmatpush1.msra.mxu0 0.0
        %692 = vmatprep.subr.mxu0 0.0
        %693 = vmatpush1.msra.mxu0 0.0
        %694 = vmatprep.subr.mxu0 0.0
        %695 = vmatpush1.msra.mxu0 0.0
        %696 = vmatprep.subr.mxu0 0.0
        %697 = vmatpush1.msra.mxu0 0.0
        %698 = vmatprep.subr.mxu0 0.0
        %699 = vmatpush1.msra.mxu0 0.0
        %700 = vmatprep.subr.mxu0 0.0
        %701 = vmatpush1.msra.mxu0 0.0
        %702 = vmatprep.subr.mxu0 0.0
        %703 = vmatpush1.msra.mxu0 0.0
        %704 = vmatprep.subr.mxu0 0.0
        %705 = vmatpush1.msra.mxu0 0.0
        %706 = vmatprep.subr.mxu0 0.0
        %707 = vmatpush1.msra.mxu0 0.0
        %708 = vmatprep.subr.mxu0 0.0
        %709 = vmatpush1.msra.mxu0 0.0
        %710 = vmatprep.subr.mxu0 0.0
        %711 = vmatpush1.msra.mxu0 0.0
        %712 = vmatprep.subr.mxu0 0.0
        %713 = vmatpush1.msra.mxu0 0.0
        %714 = vmatprep.mubr.f32.mxu0 0.0
        %715 = vmatmul.mubr.f32.gmra.mrb[0].mxu0 %v568
        %v716 = vpop.f32.mrb[0].mxu0
        %v717 = vadd.f32 0.0, %v716
        %v718 = vpop.f32.mrb[0].mxu0
        %719 = vmatprep.mubr.f32.mxu0 0.0
        %720 = vmatmul.mubr.f32.gmra.mrb[0].mxu0 %v571
        %v721 = vpop.f32.mrb[0].mxu0
        %v722 = vadd.f32 0.0, %v721
        %v723 = vpop.f32.mrb[0].mxu0
        %724 = vdwg.mxu0
        %vm725 = vcmask 130048
        %v727 = vsel %vm725, %v536, 0
        %v730 = vsel %vm725, %v537, 0
        %732 = vmatprep.subr.mxu0 0.0
        %733 = vmatpush1.msra.mxu0 %v640
        %734 = vmatprep.subr.mxu0 0.0
        %735 = vmatpush1.msra.mxu0 %v646
        %736 = vmatprep.subr.mxu0 0.0
        %737 = vmatpush1.msra.mxu0 0.0
        %738 = vmatprep.subr.mxu0 0.0
        %739 = vmatpush1.msra.mxu0 0.0
        %740 = vmatprep.subr.mxu0 0.0
        %741 = vmatpush1.msra.mxu0 0.0
        %742 = vmatprep.subr.mxu0 0.0
        %743 = vmatpush1.msra.mxu0 0.0
        %744 = vmatprep.subr.mxu0 0.0
        %745 = vmatpush1.msra.mxu0 0.0
        %746 = vmatprep.subr.mxu0 0.0
        %747 = vmatpush1.msra.mxu0 0.0
        %748 = vmatprep.subr.mxu0 0.0
        %749 = vmatpush1.msra.mxu0 0.0
        %750 = vmatprep.subr.mxu0 0.0
        %751 = vmatpush1.msra.mxu0 0.0
        %752 = vmatprep.subr.mxu0 0.0
        %753 = vmatpush1.msra.mxu0 0.0
        %754 = vmatprep.subr.mxu0 0.0
        %755 = vmatpush1.msra.mxu0 0.0
        %756 = vmatprep.subr.mxu0 0.0
        %757 = vmatpush1.msra.mxu0 0.0
        %758 = vmatprep.subr.mxu0 0.0
        %759 = vmatpush1.msra.mxu0 0.0
        %760 = vmatprep.subr.mxu0 0.0
        %761 = vmatpush1.msra.mxu0 0.0
        %762 = vmatprep.subr.mxu0 0.0
        %763 = vmatpush1.msra.mxu0 0.0
        %764 = vmatprep.subr.mxu0 0.0
        %765 = vmatpush1.msra.mxu0 0.0
        %766 = vmatprep.subr.mxu0 0.0
        %767 = vmatpush1.msra.mxu0 0.0
        %768 = vmatprep.subr.mxu0 0.0
        %769 = vmatpush1.msra.mxu0 0.0
        %770 = vmatprep.subr.mxu0 0.0
        %771 = vmatpush1.msra.mxu0 0.0
        %772 = vmatprep.subr.mxu0 0.0
        %773 = vmatpush1.msra.mxu0 0.0
        %774 = vmatprep.subr.mxu0 0.0
        %775 = vmatpush1.msra.mxu0 0.0
        %776 = vmatprep.subr.mxu0 0.0
        %777 = vmatpush1.msra.mxu0 0.0
        %778 = vmatprep.subr.mxu0 0.0
        %779 = vmatpush1.msra.mxu0 0.0
        %780 = vmatprep.subr.mxu0 0.0
        %781 = vmatpush1.msra.mxu0 0.0
        %782 = vmatprep.subr.mxu0 0.0
        %783 = vmatpush1.msra.mxu0 0.0
        %784 = vmatprep.subr.mxu0 0.0
        %785 = vmatpush1.msra.mxu0 0.0
        %786 = vmatprep.subr.mxu0 0.0
        %787 = vmatpush1.msra.mxu0 0.0
        %788 = vmatprep.subr.mxu0 0.0
        %789 = vmatpush1.msra.mxu0 0.0
        %790 = vmatprep.subr.mxu0 0.0
        %791 = vmatpush1.msra.mxu0 0.0
        %792 = vmatprep.subr.mxu0 0.0
        %793 = vmatpush1.msra.mxu0 0.0
        %794 = vmatprep.subr.mxu0 0.0
        %795 = vmatpush1.msra.mxu0 0.0
        %796 = vmatprep.mubr.f32.mxu0 0.0
        %797 = vmatmul.mubr.f32.gmra.mrb[0].mxu0 %v727
        %v798 = vpop.f32.mrb[0].mxu0
        %v799 = vadd.f32 0.0, %v798
        %v800 = vpop.f32.mrb[0].mxu0
        %801 = vmatprep.mubr.f32.mxu0 0.0
        %802 = vmatmul.mubr.f32.gmra.mrb[0].mxu0 %v730
        %v803 = vpop.f32.mrb[0].mxu0
        %v804 = vadd.f32 0.0, %v803
        %v805 = vpop.f32.mrb[0].mxu0
        %806 = vdwg.mxu0
        %v807 = vadd.f32 %v642, %v799
        %v808 = vadd.f32 %v648, %v804
        %v810 = vsel %vm725, %v538, 0
        %v813 = vsel %vm725, %v539, 0
        %815 = vmatprep.subr.mxu0 0.0
        %816 = vmatpush1.msra.mxu0 %v717
        %817 = vmatprep.subr.mxu0 0.0
        %818 = vmatpush1.msra.mxu0 %v722
        %819 = vmatprep.subr.mxu0 0.0
        %820 = vmatpush1.msra.mxu0 0.0
        %821 = vmatprep.subr.mxu0 0.0
        %822 = vmatpush1.msra.mxu0 0.0
        %823 = vmatprep.subr.mxu0 0.0
        %824 = vmatpush1.msra.mxu0 0.0
        %825 = vmatprep.subr.mxu0 0.0
        %826 = vmatpush1.msra.mxu0 0.0
        %827 = vmatprep.subr.mxu0 0.0
        %828 = vmatpush1.msra.mxu0 0.0
        %829 = vmatprep.subr.mxu0 0.0
        %830 = vmatpush1.msra.mxu0 0.0
        %831 = vmatprep.subr.mxu0 0.0
        %832 = vmatpush1.msra.mxu0 0.0
        %833 = vmatprep.subr.mxu0 0.0
        %834 = vmatpush1.msra.mxu0 0.0
        %835 = vmatprep.subr.mxu0 0.0
        %836 = vmatpush1.msra.mxu0 0.0
        %837 = vmatprep.subr.mxu0 0.0
        %838 = vmatpush1.msra.mxu0 0.0
        %839 = vmatprep.subr.mxu0 0.0
        %840 = vmatpush1.msra.mxu0 0.0
        %841 = vmatprep.subr.mxu0 0.0
        %842 = vmatpush1.msra.mxu0 0.0
        %843 = vmatprep.subr.mxu0 0.0
        %844 = vmatpush1.msra.mxu0 0.0
        %845 = vmatprep.subr.mxu0 0.0
        %846 = vmatpush1.msra.mxu0 0.0
        %847 = vmatprep.subr.mxu0 0.0
        %848 = vmatpush1.msra.mxu0 0.0
        %849 = vmatprep.subr.mxu0 0.0
        %850 = vmatpush1.msra.mxu0 0.0
        %851 = vmatprep.subr.mxu0 0.0
        %852 = vmatpush1.msra.mxu0 0.0
        %853 = vmatprep.subr.mxu0 0.0
        %854 = vmatpush1.msra.mxu0 0.0
        %855 = vmatprep.subr.mxu0 0.0
        %856 = vmatpush1.msra.mxu0 0.0
        %857 = vmatprep.subr.mxu0 0.0
        %858 = vmatpush1.msra.mxu0 0.0
        %859 = vmatprep.subr.mxu0 0.0
        %860 = vmatpush1.msra.mxu0 0.0
        %861 = vmatprep.subr.mxu0 0.0
        %862 = vmatpush1.msra.mxu0 0.0
        %863 = vmatprep.subr.mxu0 0.0
        %864 = vmatpush1.msra.mxu0 0.0
        %865 = vmatprep.subr.mxu0 0.0
        %866 = vmatpush1.msra.mxu0 0.0
        %867 = vmatprep.subr.mxu0 0.0
        %868 = vmatpush1.msra.mxu0 0.0
        %869 = vmatprep.subr.mxu0 0.0
        %870 = vmatpush1.msra.mxu0 0.0
        %871 = vmatprep.subr.mxu0 0.0
        %872 = vmatpush1.msra.mxu0 0.0
        %873 = vmatprep.subr.mxu0 0.0
        %874 = vmatpush1.msra.mxu0 0.0
        %875 = vmatprep.subr.mxu0 0.0
        %876 = vmatpush1.msra.mxu0 0.0
        %877 = vmatprep.subr.mxu0 0.0
        %878 = vmatpush1.msra.mxu0 0.0
        %879 = vmatprep.mubr.f32.mxu0 0.0
        %880 = vmatmul.mubr.f32.gmra.mrb[0].mxu0 %v810
        %v881 = vpop.f32.mrb[0].mxu0
        %v882 = vadd.f32 0.0, %v881
        %v883 = vpop.f32.mrb[0].mxu0
        %884 = vmatprep.mubr.f32.mxu0 0.0
        %885 = vmatmul.mubr.f32.gmra.mrb[0].mxu0 %v813
        %v886 = vpop.f32.mrb[0].mxu0
        %v887 = vadd.f32 0.0, %v886
        %v888 = vpop.f32.mrb[0].mxu0
        %889 = vdwg.mxu0
        %v890 = vadd.f32 %v807, %v882
        %v891 = vadd.f32 %v808, %v887
        %v892 = vld [vmem:[%s4] sm:$0x1]
        %v894 = vlaneseq
        %v895 = vshrl.u32 %v894, 7
        %v896 = vsub.s32 0, %v895
        %v897 = vrot.slane %v892, %v896
        %v899 = vadd.f32 %v890, %v897
        %v900 = vadd.f32 %v891, %v897
        %v901 = vmax.f32 %v899, 0.0
        %v902 = vmax.f32 %v900, 0.0
        %v903 = vld [vmem:[%s5] sm:$0xff]
        %v904 = vld [vmem:[%s5 + $0x8] sm:$0xff]
        %v905 = vld [vmem:[%s5 + $0x10] sm:$0xff]
        %v906 = vld [vmem:[%s5 + $0x18] sm:$0xff]
        %v907 = vld [vmem:[%s5 + $0x20] sm:$0xff]
        %v908 = vld [vmem:[%s5 + $0x28] sm:$0xff]
        %v909 = vld [vmem:[%s5 + $0x30] sm:$0xff]
        %v910 = vld [vmem:[%s5 + $0x38] sm:$0xff]
        %v911 = vld [vmem:[%s5 + $0x40] sm:$0xff]
        %v912 = vld [vmem:[%s5 + $0x48] sm:$0xff]
        %v913 = vld [vmem:[%s5 + $0x50] sm:$0xff]
        %v914 = vld [vmem:[%s5 + $0x58] sm:$0xff]
        %v915 = vld [vmem:[%s5 + $0x60] sm:$0xff]
        %v916 = vld [vmem:[%s5 + $0x68] sm:$0xff]
        %v917 = vld [vmem:[%s5 + $0x70] sm:$0xff]
        %v918 = vld [vmem:[%s5 + $0x78] sm:$0xff]
        %v919 = vld [vmem:[%s5 + $0x80] sm:$0xff]
        %v920 = vld [vmem:[%s5 + $0x88] sm:$0xff]
        %v921 = vld [vmem:[%s5 + $0x90] sm:$0xff]
        %v922 = vld [vmem:[%s5 + $0x98] sm:$0xff]
        %v923 = vld [vmem:[%s5 + $0xa0] sm:$0xff]
        %v924 = vld [vmem:[%s5 + $0xa8] sm:$0xff]
        %v925 = vld [vmem:[%s5 + $0xb0] sm:$0xff]
        %v926 = vld [vmem:[%s5 + $0xb8] sm:$0xff]
        %v927 = vld [vmem:[%s5 + $0xc0] sm:$0xff]
        %v928 = vld [vmem:[%s5 + $0xc8] sm:$0xff]
        %v929 = vld [vmem:[%s5 + $0xd0] sm:$0xff]
        %v930 = vld [vmem:[%s5 + $0xd8] sm:$0xff]
        %v931 = vld [vmem:[%s5 + $0xe0] sm:$0xff]
        %v932 = vld [vmem:[%s5 + $0xe8] sm:$0xff]
        %v933 = vld [vmem:[%s5 + $0xf0] sm:$0xff]
        %v934 = vld [vmem:[%s5 + $0xf8] sm:$0xff]
        %v935 = vld [vmem:[%s5 + $0x100] sm:$0xff]
        %v936 = vld [vmem:[%s5 + $0x108] sm:$0xff]
        %v937 = vld [vmem:[%s5 + $0x110] sm:$0xff]
        %v938 = vld [vmem:[%s5 + $0x118] sm:$0xff]
        %v939 = vld [vmem:[%s5 + $0x120] sm:$0xff]
        %v940 = vld [vmem:[%s5 + $0x128] sm:$0xff]
        %v941 = vld [vmem:[%s5 + $0x130] sm:$0xff]
        %v942 = vld [vmem:[%s5 + $0x138] sm:$0xff]
        %v943 = vld [vmem:[%s5 + $0x140] sm:$0xff]
        %v944 = vld [vmem:[%s5 + $0x148] sm:$0xff]
        %v945 = vld [vmem:[%s5 + $0x150] sm:$0xff]
        %v946 = vld [vmem:[%s5 + $0x158] sm:$0xff]
        %v947 = vld [vmem:[%s5 + $0x160] sm:$0xff]
        %v948 = vld [vmem:[%s5 + $0x168] sm:$0xff]
        %v949 = vld [vmem:[%s5 + $0x170] sm:$0xff]
        %v950 = vld [vmem:[%s5 + $0x178] sm:$0xff]
        %951 = vmatprep.subr.mxu0 %v904
        %952 = vmatpush1.msra.mxu0 %v903
        %953 = vmatprep.subr.mxu0 %v907
        %954 = vmatpush1.msra.mxu0 %v906
        %955 = vmatprep.subr.mxu0 %v910
        %956 = vmatpush1.msra.mxu0 %v909
        %957 = vmatprep.subr.mxu0 %v913
        %958 = vmatpush1.msra.mxu0 %v912
        %959 = vmatprep.subr.mxu0 %v916
        %960 = vmatpush1.msra.mxu0 %v915
        %961 = vmatprep.subr.mxu0 %v919
        %962 = vmatpush1.msra.mxu0 %v918
        %963 = vmatprep.subr.mxu0 %v922
        %964 = vmatpush1.msra.mxu0 %v921
        %965 = vmatprep.subr.mxu0 %v925
        %966 = vmatpush1.msra.mxu0 %v924
        %967 = vmatprep.subr.mxu0 %v928
        %968 = vmatpush1.msra.mxu0 %v927
        %969 = vmatprep.subr.mxu0 %v931
        %970 = vmatpush1.msra.mxu0 %v930
        %971 = vmatprep.subr.mxu0 %v934
        %972 = vmatpush1.msra.mxu0 %v933
        %973 = vmatprep.subr.mxu0 %v937
        %974 = vmatpush1.msra.mxu0 %v936
        %975 = vmatprep.subr.mxu0 %v940
        %976 = vmatpush1.msra.mxu0 %v939
        %977 = vmatprep.subr.mxu0 %v943
        %978 = vmatpush1.msra.mxu0 %v942
        %979 = vmatprep.subr.mxu0 %v946
        %980 = vmatpush1.msra.mxu0 %v945
        %981 = vmatprep.subr.mxu0 %v949
        %982 = vmatpush1.msra.mxu0 %v948
        %983 = vmatprep.subr.mxu0 0.0
        %984 = vmatpush1.msra.mxu0 0.0
        %985 = vmatprep.subr.mxu0 0.0
        %986 = vmatpush1.msra.mxu0 0.0
        %987 = vmatprep.subr.mxu0 0.0
        %988 = vmatpush1.msra.mxu0 0.0
        %989 = vmatprep.subr.mxu0 0.0
        %990 = vmatpush1.msra.mxu0 0.0
        %991 = vmatprep.subr.mxu0 0.0
        %992 = vmatpush1.msra.mxu0 0.0
        %993 = vmatprep.subr.mxu0 0.0
        %994 = vmatpush1.msra.mxu0 0.0
        %995 = vmatprep.subr.mxu0 0.0
        %996 = vmatpush1.msra.mxu0 0.0
        %997 = vmatprep.subr.mxu0 0.0
        %998 = vmatpush1.msra.mxu0 0.0
        %999 = vmatprep.subr.mxu0 0.0
        %1000 = vmatpush1.msra.mxu0 0.0
        %1001 = vmatprep.subr.mxu0 0.0
        %1002 = vmatpush1.msra.mxu0 0.0
        %1003 = vmatprep.subr.mxu0 0.0
        %1004 = vmatpush1.msra.mxu0 0.0
        %1005 = vmatprep.subr.mxu0 0.0
        %1006 = vmatpush1.msra.mxu0 0.0
        %1007 = vmatprep.subr.mxu0 0.0
        %1008 = vmatpush1.msra.mxu0 0.0
        %1009 = vmatprep.subr.mxu0 0.0
        %1010 = vmatpush1.msra.mxu0 0.0
        %1011 = vmatprep.subr.mxu0 0.0
        %1012 = vmatpush1.msra.mxu0 0.0
        %1013 = vmatprep.subr.mxu0 0.0
        %1014 = vmatpush1.msra.mxu0 0.0
        %1015 = vmatprep.mubr.f32.mxu0 0.0
        %1016 = vmatmul.mubr.f32.gmra.mrb[0].mxu0 %v901
        %v1017 = vpop.f32.mrb[0].mxu0
        %v1018 = vadd.f32 0.0, %v1017
        %v1019 = vpop.f32.mrb[0].mxu0
        %v1020 = vadd.f32 0.0, %v1019
        %1021 = vmatprep.mubr.f32.mxu0 0.0
        %1022 = vmatmul.mubr.f32.gmra.mrb[0].mxu0 %v902
        %v1023 = vpop.f32.mrb[0].mxu0
        %v1024 = vadd.f32 0.0, %v1023
        %v1025 = vpop.f32.mrb[0].mxu0
        %v1026 = vadd.f32 0.0, %v1025
        %1027 = vdwg.mxu0
        %1028 = vmatprep.subr.mxu0 0.0
        %1029 = vmatpush1.msra.mxu0 %v905
        %1030 = vmatprep.subr.mxu0 0.0
        %1031 = vmatpush1.msra.mxu0 %v908
        %1032 = vmatprep.subr.mxu0 0.0
        %1033 = vmatpush1.msra.mxu0 %v911
        %1034 = vmatprep.subr.mxu0 0.0
        %1035 = vmatpush1.msra.mxu0 %v914
        %1036 = vmatprep.subr.mxu0 0.0
        %1037 = vmatpush1.msra.mxu0 %v917
        %1038 = vmatprep.subr.mxu0 0.0
        %1039 = vmatpush1.msra.mxu0 %v920
        %1040 = vmatprep.subr.mxu0 0.0
        %1041 = vmatpush1.msra.mxu0 %v923
        %1042 = vmatprep.subr.mxu0 0.0
        %1043 = vmatpush1.msra.mxu0 %v926
        %1044 = vmatprep.subr.mxu0 0.0
        %1045 = vmatpush1.msra.mxu0 %v929
        %1046 = vmatprep.subr.mxu0 0.0
        %1047 = vmatpush1.msra.mxu0 %v932
        %1048 = vmatprep.subr.mxu0 0.0
        %1049 = vmatpush1.msra.mxu0 %v935
        %1050 = vmatprep.subr.mxu0 0.0
        %1051 = vmatpush1.msra.mxu0 %v938
        %1052 = vmatprep.subr.mxu0 0.0
        %1053 = vmatpush1.msra.mxu0 %v941
        %1054 = vmatprep.subr.mxu0 0.0
        %1055 = vmatpush1.msra.mxu0 %v944
        %1056 = vmatprep.subr.mxu0 0.0
        %1057 = vmatpush1.msra.mxu0 %v947
        %1058 = vmatprep.subr.mxu0 0.0
        %1059 = vmatpush1.msra.mxu0 %v950
        %1060 = vmatprep.subr.mxu0 0.0
        %1061 = vmatpush1.msra.mxu0 0.0
        %1062 = vmatprep.subr.mxu0 0.0
        %1063 = vmatpush1.msra.mxu0 0.0
        %1064 = vmatprep.subr.mxu0 0.0
        %1065 = vmatpush1.msra.mxu0 0.0
        %1066 = vmatprep.subr.mxu0 0.0
        %1067 = vmatpush1.msra.mxu0 0.0
        %1068 = vmatprep.subr.mxu0 0.0
        %1069 = vmatpush1.msra.mxu0 0.0
        %1070 = vmatprep.subr.mxu0 0.0
        %1071 = vmatpush1.msra.mxu0 0.0
        %1072 = vmatprep.subr.mxu0 0.0
        %1073 = vmatpush1.msra.mxu0 0.0
        %1074 = vmatprep.subr.mxu0 0.0
        %1075 = vmatpush1.msra.mxu0 0.0
        %1076 = vmatprep.subr.mxu0 0.0
        %1077 = vmatpush1.msra.mxu0 0.0
        %1078 = vmatprep.subr.mxu0 0.0
        %1079 = vmatpush1.msra.mxu0 0.0
        %1080 = vmatprep.subr.mxu0 0.0
        %1081 = vmatpush1.msra.mxu0 0.0
        %1082 = vmatprep.subr.mxu0 0.0
        %1083 = vmatpush1.msra.mxu0 0.0
        %1084 = vmatprep.subr.mxu0 0.0
        %1085 = vmatpush1.msra.mxu0 0.0
        %1086 = vmatprep.subr.mxu0 0.0
        %1087 = vmatpush1.msra.mxu0 0.0
        %1088 = vmatprep.subr.mxu0 0.0
        %1089 = vmatpush1.msra.mxu0 0.0
        %1090 = vmatprep.subr.mxu0 0.0
        %1091 = vmatpush1.msra.mxu0 0.0
        %1092 = vmatprep.mubr.f32.mxu0 0.0
        %1093 = vmatmul.mubr.f32.gmra.mrb[0].mxu0 %v901
        %v1094 = vpop.f32.mrb[0].mxu0
        %v1095 = vadd.f32 0.0, %v1094
        %v1096 = vpop.f32.mrb[0].mxu0
        %1097 = vmatprep.mubr.f32.mxu0 0.0
        %1098 = vmatmul.mubr.f32.gmra.mrb[0].mxu0 %v902
        %v1099 = vpop.f32.mrb[0].mxu0
        %v1100 = vadd.f32 0.0, %v1099
        %v1101 = vpop.f32.mrb[0].mxu0
        %1102 = vdwg.mxu0
        %1103 = vmatprep.subr.mxu0 0.0
        %1104 = vmatpush1.msra.mxu0 %v1018
        %1105 = vmatprep.subr.mxu0 0.0
        %1106 = vmatpush1.msra.mxu0 %v1024
        %1107 = vmatprep.subr.mxu0 0.0
        %1108 = vmatpush1.msra.mxu0 0.0
        %1109 = vmatprep.subr.mxu0 0.0
        %1110 = vmatpush1.msra.mxu0 0.0
        %1111 = vmatprep.subr.mxu0 0.0
        %1112 = vmatpush1.msra.mxu0 0.0
        %1113 = vmatprep.subr.mxu0 0.0
        %1114 = vmatpush1.msra.mxu0 0.0
        %1115 = vmatprep.subr.mxu0 0.0
        %1116 = vmatpush1.msra.mxu0 0.0
        %1117 = vmatprep.subr.mxu0 0.0
        %1118 = vmatpush1.msra.mxu0 0.0
        %1119 = vmatprep.subr.mxu0 0.0
        %1120 = vmatpush1.msra.mxu0 0.0
        %1121 = vmatprep.subr.mxu0 0.0
        %1122 = vmatpush1.msra.mxu0 0.0
        %1123 = vmatprep.subr.mxu0 0.0
        %1124 = vmatpush1.msra.mxu0 0.0
        %1125 = vmatprep.subr.mxu0 0.0
        %1126 = vmatpush1.msra.mxu0 0.0
        %1127 = vmatprep.subr.mxu0 0.0
        %1128 = vmatpush1.msra.mxu0 0.0
        %1129 = vmatprep.subr.mxu0 0.0
        %1130 = vmatpush1.msra.mxu0 0.0
        %1131 = vmatprep.subr.mxu0 0.0
        %1132 = vmatpush1.msra.mxu0 0.0
        %1133 = vmatprep.subr.mxu0 0.0
        %1134 = vmatpush1.msra.mxu0 0.0
        %1135 = vmatprep.subr.mxu0 0.0
        %1136 = vmatpush1.msra.mxu0 0.0
        %1137 = vmatprep.subr.mxu0 0.0
        %1138 = vmatpush1.msra.mxu0 0.0
        %1139 = vmatprep.subr.mxu0 0.0
        %1140 = vmatpush1.msra.mxu0 0.0
        %1141 = vmatprep.subr.mxu0 0.0
        %1142 = vmatpush1.msra.mxu0 0.0
        %1143 = vmatprep.subr.mxu0 0.0
        %1144 = vmatpush1.msra.mxu0 0.0
        %1145 = vmatprep.subr.mxu0 0.0
        %1146 = vmatpush1.msra.mxu0 0.0
        %1147 = vmatprep.subr.mxu0 0.0
        %1148 = vmatpush1.msra.mxu0 0.0
        %1149 = vmatprep.subr.mxu0 0.0
        %1150 = vmatpush1.msra.mxu0 0.0
        %1151 = vmatprep.subr.mxu0 0.0
        %1152 = vmatpush1.msra.mxu0 0.0
        %1153 = vmatprep.subr.mxu0 0.0
        %1154 = vmatpush1.msra.mxu0 0.0
        %1155 = vmatprep.subr.mxu0 0.0
        %1156 = vmatpush1.msra.mxu0 0.0
        %1157 = vmatprep.subr.mxu0 0.0
        %1158 = vmatpush1.msra.mxu0 0.0
        %1159 = vmatprep.subr.mxu0 0.0
        %1160 = vmatpush1.msra.mxu0 0.0
        %1161 = vmatprep.subr.mxu0 0.0
        %1162 = vmatpush1.msra.mxu0 0.0
        %1163 = vmatprep.subr.mxu0 0.0
        %1164 = vmatpush1.msra.mxu0 0.0
        %1165 = vmatprep.subr.mxu0 0.0
        %1166 = vmatpush1.msra.mxu0 0.0
        %1167 = vmatprep.mubr.f32.mxu0 0.0
        %1168 = vmatmul.mubr.f32.gmra.mrb[0].mxu0 %v727
        %v1169 = vpop.f32.mrb[0].mxu0
        %v1170 = vadd.f32 0.0, %v1169
        %v1171 = vpop.f32.mrb[0].mxu0
        %1172 = vmatprep.mubr.f32.mxu0 0.0
        %1173 = vmatmul.mubr.f32.gmra.mrb[0].mxu0 %v730
        %v1174 = vpop.f32.mrb[0].mxu0
        %v1175 = vadd.f32 0.0, %v1174
        %v1176 = vpop.f32.mrb[0].mxu0
        %1177 = vdwg.mxu0
        %v1178 = vadd.f32 %v1020, %v1170
        %v1179 = vadd.f32 %v1026, %v1175
        %1180 = vmatprep.subr.mxu0 0.0
        %1181 = vmatpush1.msra.mxu0 %v1095
        %1182 = vmatprep.subr.mxu0 0.0
        %1183 = vmatpush1.msra.mxu0 %v1100
        %1184 = vmatprep.subr.mxu0 0.0
        %1185 = vmatpush1.msra.mxu0 0.0
        %1186 = vmatprep.subr.mxu0 0.0
        %1187 = vmatpush1.msra.mxu0 0.0
        %1188 = vmatprep.subr.mxu0 0.0
        %1189 = vmatpush1.msra.mxu0 0.0
        %1190 = vmatprep.subr.mxu0 0.0
        %1191 = vmatpush1.msra.mxu0 0.0
        %1192 = vmatprep.subr.mxu0 0.0
        %1193 = vmatpush1.msra.mxu0 0.0
        %1194 = vmatprep.subr.mxu0 0.0
        %1195 = vmatpush1.msra.mxu0 0.0
        %1196 = vmatprep.subr.mxu0 0.0
        %1197 = vmatpush1.msra.mxu0 0.0
        %1198 = vmatprep.subr.mxu0 0.0
        %1199 = vmatpush1.msra.mxu0 0.0
        %1200 = vmatprep.subr.mxu0 0.0
        %1201 = vmatpush1.msra.mxu0 0.0
        %1202 = vmatprep.subr.mxu0 0.0
        %1203 = vmatpush1.msra.mxu0 0.0
        %1204 = vmatprep.subr.mxu0 0.0
        %1205 = vmatpush1.msra.mxu0 0.0
        %1206 = vmatprep.subr.mxu0 0.0
        %1207 = vmatpush1.msra.mxu0 0.0
        %1208 = vmatprep.subr.mxu0 0.0
        %1209 = vmatpush1.msra.mxu0 0.0
        %1210 = vmatprep.subr.mxu0 0.0
        %1211 = vmatpush1.msra.mxu0 0.0
        %1212 = vmatprep.subr.mxu0 0.0
        %1213 = vmatpush1.msra.mxu0 0.0
        %1214 = vmatprep.subr.mxu0 0.0
        %1215 = vmatpush1.msra.mxu0 0.0
        %1216 = vmatprep.subr.mxu0 0.0
        %1217 = vmatpush1.msra.mxu0 0.0
        %1218 = vmatprep.subr.mxu0 0.0
        %1219 = vmatpush1.msra.mxu0 0.0
        %1220 = vmatprep.subr.mxu0 0.0
        %1221 = vmatpush1.msra.mxu0 0.0
        %1222 = vmatprep.subr.mxu0 0.0
        %1223 = vmatpush1.msra.mxu0 0.0
        %1224 = vmatprep.subr.mxu0 0.0
        %1225 = vmatpush1.msra.mxu0 0.0
        %1226 = vmatprep.subr.mxu0 0.0
        %1227 = vmatpush1.msra.mxu0 0.0
        %1228 = vmatprep.subr.mxu0 0.0
        %1229 = vmatpush1.msra.mxu0 0.0
        %1230 = vmatprep.subr.mxu0 0.0
        %1231 = vmatpush1.msra.mxu0 0.0
        %1232 = vmatprep.subr.mxu0 0.0
        %1233 = vmatpush1.msra.mxu0 0.0
        %1234 = vmatprep.subr.mxu0 0.0
        %1235 = vmatpush1.msra.mxu0 0.0
        %1236 = vmatprep.subr.mxu0 0.0
        %1237 = vmatpush1.msra.mxu0 0.0
        %1238 = vmatprep.subr.mxu0 0.0
        %1239 = vmatpush1.msra.mxu0 0.0
        %1240 = vmatprep.subr.mxu0 0.0
        %1241 = vmatpush1.msra.mxu0 0.0
        %1242 = vmatprep.subr.mxu0 0.0
        %1243 = vmatpush1.msra.mxu0 0.0
        %1244 = vmatprep.mubr.f32.mxu0 0.0
        %1245 = vmatmul.mubr.f32.gmra.mrb[0].mxu0 %v810
        %v1246 = vpop.f32.mrb[0].mxu0
        %v1247 = vadd.f32 0.0, %v1246
        %v1248 = vpop.f32.mrb[0].mxu0
        %1249 = vmatprep.mubr.f32.mxu0 0.0
        %1250 = vmatmul.mubr.f32.gmra.mrb[0].mxu0 %v813
        %v1251 = vpop.f32.mrb[0].mxu0
        %v1252 = vadd.f32 0.0, %v1251
        %v1253 = vpop.f32.mrb[0].mxu0
        %1254 = vdwg.mxu0
        %v1255 = vadd.f32 %v1178, %v1247
        %v1256 = vadd.f32 %v1179, %v1252
        %v1257 = vld [vmem:[%s6] sm:$0x1]
        %v1259 = vlaneseq
        %v1260 = vshrl.u32 %v1259, 7
        %v1261 = vsub.s32 0, %v1260
        %v1262 = vrot.slane %v1257, %v1261
        %v1264 = vadd.f32 %v1255, %v1262
        %v1265 = vadd.f32 %v1256, %v1262
        %v1266 = vmax.f32 %v1264, 0.0
        %v1267 = vmax.f32 %v1265, 0.0
        %v1268 = vld [vmem:[#allocation2] sm:$0xff]
        %v1269 = vld [vmem:[#allocation2 + $0x8] sm:$0xff]
        %v1270 = vld [vmem:[#allocation2 + $0x10] sm:$0xff]
        %v1271 = vld [vmem:[#allocation2 + $0x18] sm:$0xff]
        %v1272 = vld [vmem:[#allocation2 + $0x20] sm:$0xff]
        %v1273 = vld [vmem:[#allocation2 + $0x28] sm:$0xff]
        %v1274 = vld [vmem:[#allocation2 + $0x30] sm:$0xff]
        %v1275 = vld [vmem:[#allocation2 + $0x38] sm:$0xff]
        %v1276 = vld [vmem:[#allocation2 + $0x40] sm:$0xff]
        %v1277 = vld [vmem:[#allocation2 + $0x48] sm:$0xff]
        %v1278 = vld [vmem:[#allocation2 + $0x50] sm:$0xff]
        %v1279 = vld [vmem:[#allocation2 + $0x58] sm:$0xff]
        %v1280 = vld [vmem:[#allocation2 + $0x60] sm:$0xff]
        %v1281 = vld [vmem:[#allocation2 + $0x68] sm:$0xff]
        %v1282 = vld [vmem:[#allocation2 + $0x70] sm:$0xff]
        %v1283 = vld [vmem:[#allocation2 + $0x78] sm:$0xff]
        %v1284 = vld [vmem:[#allocation2 + $0x80] sm:$0xff]
        %v1285 = vld [vmem:[#allocation2 + $0x88] sm:$0xff]
        %v1286 = vld [vmem:[#allocation2 + $0x90] sm:$0xff]
        %v1287 = vld [vmem:[#allocation2 + $0x98] sm:$0xff]
        %v1288 = vld [vmem:[#allocation2 + $0xa0] sm:$0xff]
        %v1289 = vld [vmem:[#allocation2 + $0xa8] sm:$0xff]
        %v1290 = vld [vmem:[#allocation2 + $0xb0] sm:$0xff]
        %v1291 = vld [vmem:[#allocation2 + $0xb8] sm:$0xff]
        %v1292 = vld [vmem:[#allocation2 + $0xc0] sm:$0xff]
        %v1293 = vld [vmem:[#allocation2 + $0xc8] sm:$0xff]
        %v1294 = vld [vmem:[#allocation2 + $0xd0] sm:$0xff]
        %v1295 = vld [vmem:[#allocation2 + $0xd8] sm:$0xff]
        %v1296 = vld [vmem:[#allocation2 + $0xe0] sm:$0xff]
        %v1297 = vld [vmem:[#allocation2 + $0xe8] sm:$0xff]
        %v1298 = vld [vmem:[#allocation2 + $0xf0] sm:$0xff]
        %v1299 = vld [vmem:[#allocation2 + $0xf8] sm:$0xff]
        %v1300 = vld [vmem:[#allocation2 + $0x100] sm:$0xff]
        %v1301 = vld [vmem:[#allocation2 + $0x108] sm:$0xff]
        %v1302 = vld [vmem:[#allocation2 + $0x110] sm:$0xff]
        %v1303 = vld [vmem:[#allocation2 + $0x118] sm:$0xff]
        %v1304 = vld [vmem:[#allocation2 + $0x120] sm:$0xff]
        %v1305 = vld [vmem:[#allocation2 + $0x128] sm:$0xff]
        %v1306 = vld [vmem:[#allocation2 + $0x130] sm:$0xff]
        %v1307 = vld [vmem:[#allocation2 + $0x138] sm:$0xff]
        %v1308 = vld [vmem:[#allocation2 + $0x140] sm:$0xff]
        %v1309 = vld [vmem:[#allocation2 + $0x148] sm:$0xff]
        %v1310 = vld [vmem:[#allocation2 + $0x150] sm:$0xff]
        %v1311 = vld [vmem:[#allocation2 + $0x158] sm:$0xff]
        %v1312 = vld [vmem:[#allocation2 + $0x160] sm:$0xff]
        %v1313 = vld [vmem:[#allocation2 + $0x168] sm:$0xff]
        %v1314 = vld [vmem:[#allocation2 + $0x170] sm:$0xff]
        %v1315 = vld [vmem:[#allocation2 + $0x178] sm:$0xff]
        %1316 = vmatprep.subr.mxu0 %v1269
        %1317 = vmatpush1.msra.mxu0 %v1268
        %1318 = vmatprep.subr.mxu0 %v1272
        %1319 = vmatpush1.msra.mxu0 %v1271
        %1320 = vmatprep.subr.mxu0 %v1275
        %1321 = vmatpush1.msra.mxu0 %v1274
        %1322 = vmatprep.subr.mxu0 %v1278
        %1323 = vmatpush1.msra.mxu0 %v1277
        %1324 = vmatprep.subr.mxu0 %v1281
        %1325 = vmatpush1.msra.mxu0 %v1280
        %1326 = vmatprep.subr.mxu0 %v1284
        %1327 = vmatpush1.msra.mxu0 %v1283
        %1328 = vmatprep.subr.mxu0 %v1287
        %1329 = vmatpush1.msra.mxu0 %v1286
        %1330 = vmatprep.subr.mxu0 %v1290
        %1331 = vmatpush1.msra.mxu0 %v1289
        %1332 = vmatprep.subr.mxu0 %v1293
        %1333 = vmatpush1.msra.mxu0 %v1292
        %1334 = vmatprep.subr.mxu0 %v1296
        %1335 = vmatpush1.msra.mxu0 %v1295
        %1336 = vmatprep.subr.mxu0 %v1299
        %1337 = vmatpush1.msra.mxu0 %v1298
        %1338 = vmatprep.subr.mxu0 %v1302
        %1339 = vmatpush1.msra.mxu0 %v1301
        %1340 = vmatprep.subr.mxu0 %v1305
        %1341 = vmatpush1.msra.mxu0 %v1304
        %1342 = vmatprep.subr.mxu0 %v1308
        %1343 = vmatpush1.msra.mxu0 %v1307
        %1344 = vmatprep.subr.mxu0 %v1311
        %1345 = vmatpush1.msra.mxu0 %v1310
        %1346 = vmatprep.subr.mxu0 %v1314
        %1347 = vmatpush1.msra.mxu0 %v1313
        %1348 = vmatprep.subr.mxu0 0.0
        %1349 = vmatpush1.msra.mxu0 0.0
        %1350 = vmatprep.subr.mxu0 0.0
        %1351 = vmatpush1.msra.mxu0 0.0
        %1352 = vmatprep.subr.mxu0 0.0
        %1353 = vmatpush1.msra.mxu0 0.0
        %1354 = vmatprep.subr.mxu0 0.0
        %1355 = vmatpush1.msra.mxu0 0.0
        %1356 = vmatprep.subr.mxu0 0.0
        %1357 = vmatpush1.msra.mxu0 0.0
        %1358 = vmatprep.subr.mxu0 0.0
        %1359 = vmatpush1.msra.mxu0 0.0
        %1360 = vmatprep.subr.mxu0 0.0
        %1361 = vmatpush1.msra.mxu0 0.0
        %1362 = vmatprep.subr.mxu0 0.0
        %1363 = vmatpush1.msra.mxu0 0.0
        %1364 = vmatprep.subr.mxu0 0.0
        %1365 = vmatpush1.msra.mxu0 0.0
        %1366 = vmatprep.subr.mxu0 0.0
        %1367 = vmatpush1.msra.mxu0 0.0
        %1368 = vmatprep.subr.mxu0 0.0
        %1369 = vmatpush1.msra.mxu0 0.0
        %1370 = vmatprep.subr.mxu0 0.0
        %1371 = vmatpush1.msra.mxu0 0.0
        %1372 = vmatprep.subr.mxu0 0.0
        %1373 = vmatpush1.msra.mxu0 0.0
        %1374 = vmatprep.subr.mxu0 0.0
        %1375 = vmatpush1.msra.mxu0 0.0
        %1376 = vmatprep.subr.mxu0 0.0
        %1377 = vmatpush1.msra.mxu0 0.0
        %1378 = vmatprep.subr.mxu0 0.0
        %1379 = vmatpush1.msra.mxu0 0.0
        %1380 = vmatprep.mubr.f32.mxu0 0.0
        %1381 = vmatmul.mubr.f32.gmra.mrb[0].mxu0 %v1266
        %v1382 = vpop.f32.mrb[0].mxu0
        %v1383 = vadd.f32 0.0, %v1382
        %v1384 = vpop.f32.mrb[0].mxu0
        %v1385 = vadd.f32 0.0, %v1384
        %1386 = vmatprep.mubr.f32.mxu0 0.0
        %1387 = vmatmul.mubr.f32.gmra.mrb[0].mxu0 %v1267
        %v1388 = vpop.f32.mrb[0].mxu0
        %v1389 = vadd.f32 0.0, %v1388
        %v1390 = vpop.f32.mrb[0].mxu0
        %v1391 = vadd.f32 0.0, %v1390
        %1392 = vdwg.mxu0
        %1393 = vmatprep.subr.mxu0 0.0
        %1394 = vmatpush1.msra.mxu0 %v1270
        %1395 = vmatprep.subr.mxu0 0.0
        %1396 = vmatpush1.msra.mxu0 %v1273
        %1397 = vmatprep.subr.mxu0 0.0
        %1398 = vmatpush1.msra.mxu0 %v1276
        %1399 = vmatprep.subr.mxu0 0.0
        %1400 = vmatpush1.msra.mxu0 %v1279
        %1401 = vmatprep.subr.mxu0 0.0
        %1402 = vmatpush1.msra.mxu0 %v1282
        %1403 = vmatprep.subr.mxu0 0.0
        %1404 = vmatpush1.msra.mxu0 %v1285
        %1405 = vmatprep.subr.mxu0 0.0
        %1406 = vmatpush1.msra.mxu0 %v1288
        %1407 = vmatprep.subr.mxu0 0.0
        %1408 = vmatpush1.msra.mxu0 %v1291
        %1409 = vmatprep.subr.mxu0 0.0
        %1410 = vmatpush1.msra.mxu0 %v1294
        %1411 = vmatprep.subr.mxu0 0.0
        %1412 = vmatpush1.msra.mxu0 %v1297
        %1413 = vmatprep.subr.mxu0 0.0
        %1414 = vmatpush1.msra.mxu0 %v1300
        %1415 = vmatprep.subr.mxu0 0.0
        %1416 = vmatpush1.msra.mxu0 %v1303
        %1417 = vmatprep.subr.mxu0 0.0
        %1418 = vmatpush1.msra.mxu0 %v1306
        %1419 = vmatprep.subr.mxu0 0.0
        %1420 = vmatpush1.msra.mxu0 %v1309
        %1421 = vmatprep.subr.mxu0 0.0
        %1422 = vmatpush1.msra.mxu0 %v1312
        %1423 = vmatprep.subr.mxu0 0.0
        %1424 = vmatpush1.msra.mxu0 %v1315
        %1425 = vmatprep.subr.mxu0 0.0
        %1426 = vmatpush1.msra.mxu0 0.0
        %1427 = vmatprep.subr.mxu0 0.0
        %1428 = vmatpush1.msra.mxu0 0.0
        %1429 = vmatprep.subr.mxu0 0.0
        %1430 = vmatpush1.msra.mxu0 0.0
        %1431 = vmatprep.subr.mxu0 0.0
        %1432 = vmatpush1.msra.mxu0 0.0
        %1433 = vmatprep.subr.mxu0 0.0
        %1434 = vmatpush1.msra.mxu0 0.0
        %1435 = vmatprep.subr.mxu0 0.0
        %1436 = vmatpush1.msra.mxu0 0.0
        %1437 = vmatprep.subr.mxu0 0.0
        %1438 = vmatpush1.msra.mxu0 0.0
        %1439 = vmatprep.subr.mxu0 0.0
        %1440 = vmatpush1.msra.mxu0 0.0
        %1441 = vmatprep.subr.mxu0 0.0
        %1442 = vmatpush1.msra.mxu0 0.0
        %1443 = vmatprep.subr.mxu0 0.0
        %1444 = vmatpush1.msra.mxu0 0.0
        %1445 = vmatprep.subr.mxu0 0.0
        %1446 = vmatpush1.msra.mxu0 0.0
        %1447 = vmatprep.subr.mxu0 0.0
        %1448 = vmatpush1.msra.mxu0 0.0
        %1449 = vmatprep.subr.mxu0 0.0
        %1450 = vmatpush1.msra.mxu0 0.0
        %1451 = vmatprep.subr.mxu0 0.0
        %1452 = vmatpush1.msra.mxu0 0.0
        %1453 = vmatprep.subr.mxu0 0.0
        %1454 = vmatpush1.msra.mxu0 0.0
        %1455 = vmatprep.subr.mxu0 0.0
        %1456 = vmatpush1.msra.mxu0 0.0
        %1457 = vmatprep.mubr.f32.mxu0 0.0
        %1458 = vmatmul.mubr.f32.gmra.mrb[0].mxu0 %v1266
        %v1459 = vpop.f32.mrb[0].mxu0
        %v1460 = vadd.f32 0.0, %v1459
        %v1461 = vpop.f32.mrb[0].mxu0
        %1462 = vmatprep.mubr.f32.mxu0 0.0
        %1463 = vmatmul.mubr.f32.gmra.mrb[0].mxu0 %v1267
        %v1464 = vpop.f32.mrb[0].mxu0
        %v1465 = vadd.f32 0.0, %v1464
        %v1466 = vpop.f32.mrb[0].mxu0
        %1467 = vdwg.mxu0
        %1468 = vmatprep.subr.mxu0 0.0
        %1469 = vmatpush1.msra.mxu0 %v1383
        %1470 = vmatprep.subr.mxu0 0.0
        %1471 = vmatpush1.msra.mxu0 %v1389
        %1472 = vmatprep.subr.mxu0 0.0
        %1473 = vmatpush1.msra.mxu0 0.0
        %1474 = vmatprep.subr.mxu0 0.0
        %1475 = vmatpush1.msra.mxu0 0.0
        %1476 = vmatprep.subr.mxu0 0.0
        %1477 = vmatpush1.msra.mxu0 0.0
        %1478 = vmatprep.subr.mxu0 0.0
        %1479 = vmatpush1.msra.mxu0 0.0
        %1480 = vmatprep.subr.mxu0 0.0
        %1481 = vmatpush1.msra.mxu0 0.0
        %1482 = vmatprep.subr.mxu0 0.0
        %1483 = vmatpush1.msra.mxu0 0.0
        %1484 = vmatprep.subr.mxu0 0.0
        %1485 = vmatpush1.msra.mxu0 0.0
        %1486 = vmatprep.subr.mxu0 0.0
        %1487 = vmatpush1.msra.mxu0 0.0
        %1488 = vmatprep.subr.mxu0 0.0
        %1489 = vmatpush1.msra.mxu0 0.0
        %1490 = vmatprep.subr.mxu0 0.0
        %1491 = vmatpush1.msra.mxu0 0.0
        %1492 = vmatprep.subr.mxu0 0.0
        %1493 = vmatpush1.msra.mxu0 0.0
        %1494 = vmatprep.subr.mxu0 0.0
        %1495 = vmatpush1.msra.mxu0 0.0
        %1496 = vmatprep.subr.mxu0 0.0
        %1497 = vmatpush1.msra.mxu0 0.0
        %1498 = vmatprep.subr.mxu0 0.0
        %1499 = vmatpush1.msra.mxu0 0.0
        %1500 = vmatprep.subr.mxu0 0.0
        %1501 = vmatpush1.msra.mxu0 0.0
        %1502 = vmatprep.subr.mxu0 0.0
        %1503 = vmatpush1.msra.mxu0 0.0
        %1504 = vmatprep.subr.mxu0 0.0
        %1505 = vmatpush1.msra.mxu0 0.0
        %1506 = vmatprep.subr.mxu0 0.0
        %1507 = vmatpush1.msra.mxu0 0.0
        %1508 = vmatprep.subr.mxu0 0.0
        %1509 = vmatpush1.msra.mxu0 0.0
        %1510 = vmatprep.subr.mxu0 0.0
        %1511 = vmatpush1.msra.mxu0 0.0
        %1512 = vmatprep.subr.mxu0 0.0
        %1513 = vmatpush1.msra.mxu0 0.0
        %1514 = vmatprep.subr.mxu0 0.0
        %1515 = vmatpush1.msra.mxu0 0.0
        %1516 = vmatprep.subr.mxu0 0.0
        %1517 = vmatpush1.msra.mxu0 0.0
        %1518 = vmatprep.subr.mxu0 0.0
        %1519 = vmatpush1.msra.mxu0 0.0
        %1520 = vmatprep.subr.mxu0 0.0
        %1521 = vmatpush1.msra.mxu0 0.0
        %1522 = vmatprep.subr.mxu0 0.0
        %1523 = vmatpush1.msra.mxu0 0.0
        %1524 = vmatprep.subr.mxu0 0.0
        %1525 = vmatpush1.msra.mxu0 0.0
        %1526 = vmatprep.subr.mxu0 0.0
        %1527 = vmatpush1.msra.mxu0 0.0
        %1528 = vmatprep.subr.mxu0 0.0
        %1529 = vmatpush1.msra.mxu0 0.0
        %1530 = vmatprep.subr.mxu0 0.0
        %1531 = vmatpush1.msra.mxu0 0.0
        %1532 = vmatprep.mubr.f32.mxu0 0.0
        %1533 = vmatmul.mubr.f32.gmra.mrb[0].mxu0 %v727
        %v1534 = vpop.f32.mrb[0].mxu0
        %v1535 = vadd.f32 0.0, %v1534
        %v1536 = vpop.f32.mrb[0].mxu0
        %1537 = vmatprep.mubr.f32.mxu0 0.0
        %1538 = vmatmul.mubr.f32.gmra.mrb[0].mxu0 %v730
        %v1539 = vpop.f32.mrb[0].mxu0
        %v1540 = vadd.f32 0.0, %v1539
        %v1541 = vpop.f32.mrb[0].mxu0
        %1542 = vdwg.mxu0
        %v1543 = vadd.f32 %v1385, %v1535
        %v1544 = vadd.f32 %v1391, %v1540
        %1545 = vmatprep.subr.mxu0 0.0
        %1546 = vmatpush1.msra.mxu0 %v1460
        %1547 = vmatprep.subr.mxu0 0.0
        %1548 = vmatpush1.msra.mxu0 %v1465
        %1549 = vmatprep.subr.mxu0 0.0
        %1550 = vmatpush1.msra.mxu0 0.0
        %1551 = vmatprep.subr.mxu0 0.0
        %1552 = vmatpush1.msra.mxu0 0.0
        %1553 = vmatprep.subr.mxu0 0.0
        %1554 = vmatpush1.msra.mxu0 0.0
        %1555 = vmatprep.subr.mxu0 0.0
        %1556 = vmatpush1.msra.mxu0 0.0
        %1557 = vmatprep.subr.mxu0 0.0
        %1558 = vmatpush1.msra.mxu0 0.0
        %1559 = vmatprep.subr.mxu0 0.0
        %1560 = vmatpush1.msra.mxu0 0.0
        %1561 = vmatprep.subr.mxu0 0.0
        %1562 = vmatpush1.msra.mxu0 0.0
        %1563 = vmatprep.subr.mxu0 0.0
        %1564 = vmatpush1.msra.mxu0 0.0
        %1565 = vmatprep.subr.mxu0 0.0
        %1566 = vmatpush1.msra.mxu0 0.0
        %1567 = vmatprep.subr.mxu0 0.0
        %1568 = vmatpush1.msra.mxu0 0.0
        %1569 = vmatprep.subr.mxu0 0.0
        %1570 = vmatpush1.msra.mxu0 0.0
        %1571 = vmatprep.subr.mxu0 0.0
        %1572 = vmatpush1.msra.mxu0 0.0
        %1573 = vmatprep.subr.mxu0 0.0
        %1574 = vmatpush1.msra.mxu0 0.0
        %1575 = vmatprep.subr.mxu0 0.0
        %1576 = vmatpush1.msra.mxu0 0.0
        %1577 = vmatprep.subr.mxu0 0.0
        %1578 = vmatpush1.msra.mxu0 0.0
        %1579 = vmatprep.subr.mxu0 0.0
        %1580 = vmatpush1.msra.mxu0 0.0
        %1581 = vmatprep.subr.mxu0 0.0
        %1582 = vmatpush1.msra.mxu0 0.0
        %1583 = vmatprep.subr.mxu0 0.0
        %1584 = vmatpush1.msra.mxu0 0.0
        %1585 = vmatprep.subr.mxu0 0.0
        %1586 = vmatpush1.msra.mxu0 0.0
        %1587 = vmatprep.subr.mxu0 0.0
        %1588 = vmatpush1.msra.mxu0 0.0
        %1589 = vmatprep.subr.mxu0 0.0
        %1590 = vmatpush1.msra.mxu0 0.0
        %1591 = vmatprep.subr.mxu0 0.0
        %1592 = vmatpush1.msra.mxu0 0.0
        %1593 = vmatprep.subr.mxu0 0.0
        %1594 = vmatpush1.msra.mxu0 0.0
        %1595 = vmatprep.subr.mxu0 0.0
        %1596 = vmatpush1.msra.mxu0 0.0
        %1597 = vmatprep.subr.mxu0 0.0
        %1598 = vmatpush1.msra.mxu0 0.0
        %1599 = vmatprep.subr.mxu0 0.0
        %1600 = vmatpush1.msra.mxu0 0.0
        %1601 = vmatprep.subr.mxu0 0.0
        %1602 = vmatpush1.msra.mxu0 0.0
        %1603 = vmatprep.subr.mxu0 0.0
        %1604 = vmatpush1.msra.mxu0 0.0
        %1605 = vmatprep.subr.mxu0 0.0
        %1606 = vmatpush1.msra.mxu0 0.0
        %1607 = vmatprep.subr.mxu0 0.0
        %1608 = vmatpush1.msra.mxu0 0.0
        %1609 = vmatprep.mubr.f32.mxu0 0.0
        %1610 = vmatmul.mubr.f32.gmra.mrb[0].mxu0 %v810
        %v1611 = vpop.f32.mrb[0].mxu0
        %v1612 = vadd.f32 0.0, %v1611
        %v1613 = vpop.f32.mrb[0].mxu0
        %1614 = vmatprep.mubr.f32.mxu0 0.0
        %1615 = vmatmul.mubr.f32.gmra.mrb[0].mxu0 %v813
        %v1616 = vpop.f32.mrb[0].mxu0
        %v1617 = vadd.f32 0.0, %v1616
        %v1618 = vpop.f32.mrb[0].mxu0
        %1619 = vdwg.mxu0
        %v1620 = vadd.f32 %v1543, %v1612
        %v1621 = vadd.f32 %v1544, %v1617
        %v1622 = vld [vmem:[%s8] sm:$0x1]
        %v1624 = vlaneseq
        %v1625 = vshrl.u32 %v1624, 7
        %v1626 = vsub.s32 0, %v1625
        %v1627 = vrot.slane %v1622, %v1626
        %v1629 = vadd.f32 %v1620, %v1627
        %v1630 = vadd.f32 %v1621, %v1627
        %v1631 = vmax.f32 %v1629, 0.0
        %v1632 = vmax.f32 %v1630, 0.0
        %v1633 = vld [vmem:[#allocation5] sm:$0xff]
        %v1634 = vld [vmem:[#allocation5 + $0x8] sm:$0xff]
        %v1635 = vld [vmem:[#allocation5 + $0x10] sm:$0xff]
        %v1636 = vld [vmem:[#allocation5 + $0x18] sm:$0xff]
        %v1637 = vld [vmem:[#allocation5 + $0x20] sm:$0xff]
        %v1638 = vld [vmem:[#allocation5 + $0x28] sm:$0xff]
        %v1639 = vld [vmem:[#allocation5 + $0x30] sm:$0xff]
        %v1640 = vld [vmem:[#allocation5 + $0x38] sm:$0xff]
        %v1641 = vld [vmem:[#allocation5 + $0x40] sm:$0xff]
        %v1642 = vld [vmem:[#allocation5 + $0x48] sm:$0xff]
        %v1643 = vld [vmem:[#allocation5 + $0x50] sm:$0xff]
        %v1644 = vld [vmem:[#allocation5 + $0x58] sm:$0xff]
        %v1645 = vld [vmem:[#allocation5 + $0x60] sm:$0xff]
        %v1646 = vld [vmem:[#allocation5 + $0x68] sm:$0xff]
        %v1647 = vld [vmem:[#allocation5 + $0x70] sm:$0xff]
        %v1648 = vld [vmem:[#allocation5 + $0x78] sm:$0xff]
        %v1649 = vld [vmem:[#allocation5 + $0x80] sm:$0xff]
        %v1650 = vld [vmem:[#allocation5 + $0x88] sm:$0xff]
        %v1651 = vld [vmem:[#allocation5 + $0x90] sm:$0xff]
        %v1652 = vld [vmem:[#allocation5 + $0x98] sm:$0xff]
        %v1653 = vld [vmem:[#allocation5 + $0xa0] sm:$0xff]
        %v1654 = vld [vmem:[#allocation5 + $0xa8] sm:$0xff]
        %v1655 = vld [vmem:[#allocation5 + $0xb0] sm:$0xff]
        %v1656 = vld [vmem:[#allocation5 + $0xb8] sm:$0xff]
        %v1657 = vld [vmem:[#allocation5 + $0xc0] sm:$0xff]
        %v1658 = vld [vmem:[#allocation5 + $0xc8] sm:$0xff]
        %v1659 = vld [vmem:[#allocation5 + $0xd0] sm:$0xff]
        %v1660 = vld [vmem:[#allocation5 + $0xd8] sm:$0xff]
        %v1661 = vld [vmem:[#allocation5 + $0xe0] sm:$0xff]
        %v1662 = vld [vmem:[#allocation5 + $0xe8] sm:$0xff]
        %v1663 = vld [vmem:[#allocation5 + $0xf0] sm:$0xff]
        %v1664 = vld [vmem:[#allocation5 + $0xf8] sm:$0xff]
        %v1665 = vld [vmem:[#allocation5 + $0x100] sm:$0xff]
        %v1666 = vld [vmem:[#allocation5 + $0x108] sm:$0xff]
        %v1667 = vld [vmem:[#allocation5 + $0x110] sm:$0xff]
        %v1668 = vld [vmem:[#allocation5 + $0x118] sm:$0xff]
        %v1669 = vld [vmem:[#allocation5 + $0x120] sm:$0xff]
        %v1670 = vld [vmem:[#allocation5 + $0x128] sm:$0xff]
        %v1671 = vld [vmem:[#allocation5 + $0x130] sm:$0xff]
        %v1672 = vld [vmem:[#allocation5 + $0x138] sm:$0xff]
        %v1673 = vld [vmem:[#allocation5 + $0x140] sm:$0xff]
        %v1674 = vld [vmem:[#allocation5 + $0x148] sm:$0xff]
        %v1675 = vld [vmem:[#allocation5 + $0x150] sm:$0xff]
        %v1676 = vld [vmem:[#allocation5 + $0x158] sm:$0xff]
        %v1677 = vld [vmem:[#allocation5 + $0x160] sm:$0xff]
        %v1678 = vld [vmem:[#allocation5 + $0x168] sm:$0xff]
        %v1679 = vld [vmem:[#allocation5 + $0x170] sm:$0xff]
        %v1680 = vld [vmem:[#allocation5 + $0x178] sm:$0xff]
        %v1681 = vld [vmem:[#allocation5 + $0x180] sm:$0xff]
        %v1682 = vld [vmem:[#allocation5 + $0x188] sm:$0xff]
        %v1683 = vld [vmem:[#allocation5 + $0x190] sm:$0xff]
        %v1684 = vld [vmem:[#allocation5 + $0x198] sm:$0xff]
        %v1685 = vld [vmem:[#allocation5 + $0x1a0] sm:$0xff]
        %v1686 = vld [vmem:[#allocation5 + $0x1a8] sm:$0xff]
        %v1687 = vld [vmem:[#allocation5 + $0x1b0] sm:$0xff]
        %v1688 = vld [vmem:[#allocation5 + $0x1b8] sm:$0xff]
        %v1689 = vld [vmem:[#allocation5 + $0x1c0] sm:$0xff]
        %v1690 = vld [vmem:[#allocation5 + $0x1c8] sm:$0xff]
        %v1691 = vld [vmem:[#allocation5 + $0x1d0] sm:$0xff]
        %v1692 = vld [vmem:[#allocation5 + $0x1d8] sm:$0xff]
        %v1693 = vld [vmem:[#allocation5 + $0x1e0] sm:$0xff]
        %v1694 = vld [vmem:[#allocation5 + $0x1e8] sm:$0xff]
        %v1695 = vld [vmem:[#allocation5 + $0x1f0] sm:$0xff]
        %v1696 = vld [vmem:[#allocation5 + $0x1f8] sm:$0xff]
        %v1697 = vld [vmem:[#allocation5 + $0x200] sm:$0xff]
        %v1698 = vld [vmem:[#allocation5 + $0x208] sm:$0xff]
        %v1699 = vld [vmem:[#allocation5 + $0x210] sm:$0xff]
        %v1700 = vld [vmem:[#allocation5 + $0x218] sm:$0xff]
        %v1701 = vld [vmem:[#allocation5 + $0x220] sm:$0xff]
        %v1702 = vld [vmem:[#allocation5 + $0x228] sm:$0xff]
        %v1703 = vld [vmem:[#allocation5 + $0x230] sm:$0xff]
        %v1704 = vld [vmem:[#allocation5 + $0x238] sm:$0xff]
        %v1705 = vld [vmem:[#allocation5 + $0x240] sm:$0xff]
        %v1706 = vld [vmem:[#allocation5 + $0x248] sm:$0xff]
        %v1707 = vld [vmem:[#allocation5 + $0x250] sm:$0xff]
        %v1708 = vld [vmem:[#allocation5 + $0x258] sm:$0xff]
        %v1709 = vld [vmem:[#allocation5 + $0x260] sm:$0xff]
        %v1710 = vld [vmem:[#allocation5 + $0x268] sm:$0xff]
        %v1711 = vld [vmem:[#allocation5 + $0x270] sm:$0xff]
        %v1712 = vld [vmem:[#allocation5 + $0x278] sm:$0xff]
        %v1713 = vld [vmem:[#allocation5 + $0x280] sm:$0xff]
        %v1714 = vld [vmem:[#allocation5 + $0x288] sm:$0xff]
        %v1715 = vld [vmem:[#allocation5 + $0x290] sm:$0xff]
        %v1716 = vld [vmem:[#allocation5 + $0x298] sm:$0xff]
        %v1717 = vld [vmem:[#allocation5 + $0x2a0] sm:$0xff]
        %v1718 = vld [vmem:[#allocation5 + $0x2a8] sm:$0xff]
        %v1719 = vld [vmem:[#allocation5 + $0x2b0] sm:$0xff]
        %v1720 = vld [vmem:[#allocation5 + $0x2b8] sm:$0xff]
        %v1721 = vld [vmem:[#allocation5 + $0x2c0] sm:$0xff]
        %v1722 = vld [vmem:[#allocation5 + $0x2c8] sm:$0xff]
        %v1723 = vld [vmem:[#allocation5 + $0x2d0] sm:$0xff]
        %v1724 = vld [vmem:[#allocation5 + $0x2d8] sm:$0xff]
        %v1725 = vld [vmem:[#allocation5 + $0x2e0] sm:$0xff]
        %v1726 = vld [vmem:[#allocation5 + $0x2e8] sm:$0xff]
        %v1727 = vld [vmem:[#allocation5 + $0x2f0] sm:$0xff]
        %v1728 = vld [vmem:[#allocation5 + $0x2f8] sm:$0xff]
        %1729 = vmatprep.subr.mxu0 %v1634
        %1730 = vmatpush1.msra.mxu0 %v1633
        %1731 = vmatprep.subr.mxu0 %v1640
        %1732 = vmatpush1.msra.mxu0 %v1639
        %1733 = vmatprep.subr.mxu0 %v1646
        %1734 = vmatpush1.msra.mxu0 %v1645
        %1735 = vmatprep.subr.mxu0 %v1652
        %1736 = vmatpush1.msra.mxu0 %v1651
        %1737 = vmatprep.subr.mxu0 %v1658
        %1738 = vmatpush1.msra.mxu0 %v1657
        %1739 = vmatprep.subr.mxu0 %v1664
        %1740 = vmatpush1.msra.mxu0 %v1663
        %1741 = vmatprep.subr.mxu0 %v1670
        %1742 = vmatpush1.msra.mxu0 %v1669
        %1743 = vmatprep.subr.mxu0 %v1676
        %1744 = vmatpush1.msra.mxu0 %v1675
        %1745 = vmatprep.subr.mxu0 %v1682
        %1746 = vmatpush1.msra.mxu0 %v1681
        %1747 = vmatprep.subr.mxu0 %v1688
        %1748 = vmatpush1.msra.mxu0 %v1687
        %1749 = vmatprep.subr.mxu0 %v1694
        %1750 = vmatpush1.msra.mxu0 %v1693
        %1751 = vmatprep.subr.mxu0 %v1700
        %1752 = vmatpush1.msra.mxu0 %v1699
        %1753 = vmatprep.subr.mxu0 %v1706
        %1754 = vmatpush1.msra.mxu0 %v1705
        %1755 = vmatprep.subr.mxu0 %v1712
        %1756 = vmatpush1.msra.mxu0 %v1711
        %1757 = vmatprep.subr.mxu0 %v1718
        %1758 = vmatpush1.msra.mxu0 %v1717
        %1759 = vmatprep.subr.mxu0 %v1724
        %1760 = vmatpush1.msra.mxu0 %v1723
        %1761 = vmatprep.subr.mxu0 0.0
        %1762 = vmatpush1.msra.mxu0 0.0
        %1763 = vmatprep.subr.mxu0 0.0
        %1764 = vmatpush1.msra.mxu0 0.0
        %1765 = vmatprep.subr.mxu0 0.0
        %1766 = vmatpush1.msra.mxu0 0.0
        %1767 = vmatprep.subr.mxu0 0.0
        %1768 = vmatpush1.msra.mxu0 0.0
        %1769 = vmatprep.subr.mxu0 0.0
        %1770 = vmatpush1.msra.mxu0 0.0
        %1771 = vmatprep.subr.mxu0 0.0
        %1772 = vmatpush1.msra.mxu0 0.0
        %1773 = vmatprep.subr.mxu0 0.0
        %1774 = vmatpush1.msra.mxu0 0.0
        %1775 = vmatprep.subr.mxu0 0.0
        %1776 = vmatpush1.msra.mxu0 0.0
        %1777 = vmatprep.subr.mxu0 0.0
        %1778 = vmatpush1.msra.mxu0 0.0
        %1779 = vmatprep.subr.mxu0 0.0
        %1780 = vmatpush1.msra.mxu0 0.0
        %1781 = vmatprep.subr.mxu0 0.0
        %1782 = vmatpush1.msra.mxu0 0.0
        %1783 = vmatprep.subr.mxu0 0.0
        %1784 = vmatpush1.msra.mxu0 0.0
        %1785 = vmatprep.subr.mxu0 0.0
        %1786 = vmatpush1.msra.mxu0 0.0
        %1787 = vmatprep.subr.mxu0 0.0
        %1788 = vmatpush1.msra.mxu0 0.0
        %1789 = vmatprep.subr.mxu0 0.0
        %1790 = vmatpush1.msra.mxu0 0.0
        %1791 = vmatprep.subr.mxu0 0.0
        %1792 = vmatpush1.msra.mxu0 0.0
        %1793 = vmatprep.mubr.f32.mxu0 0.0
        %1794 = vmatmul.mubr.f32.gmra.mrb[0].mxu0 %v1631
        %v1795 = vpop.f32.mrb[0].mxu0
        %v1796 = vadd.f32 0.0, %v1795
        %v1797 = vpop.f32.mrb[0].mxu0
        %v1798 = vadd.f32 0.0, %v1797
        %1799 = vmatprep.mubr.f32.mxu0 0.0
        %1800 = vmatmul.mubr.f32.gmra.mrb[0].mxu0 %v1632
        %v1801 = vpop.f32.mrb[0].mxu0
        %v1802 = vadd.f32 0.0, %v1801
        %v1803 = vpop.f32.mrb[0].mxu0
        %v1804 = vadd.f32 0.0, %v1803
        %1805 = vdwg.mxu0
        %1806 = vmatprep.subr.mxu0 %v1636
        %1807 = vmatpush1.msra.mxu0 %v1635
        %1808 = vmatprep.subr.mxu0 %v1642
        %1809 = vmatpush1.msra.mxu0 %v1641
        %1810 = vmatprep.subr.mxu0 %v1648
        %1811 = vmatpush1.msra.mxu0 %v1647
        %1812 = vmatprep.subr.mxu0 %v1654
        %1813 = vmatpush1.msra.mxu0 %v1653
        %1814 = vmatprep.subr.mxu0 %v1660
        %1815 = vmatpush1.msra.mxu0 %v1659
        %1816 = vmatprep.subr.mxu0 %v1666
        %1817 = vmatpush1.msra.mxu0 %v1665
        %1818 = vmatprep.subr.mxu0 %v1672
        %1819 = vmatpush1.msra.mxu0 %v1671
        %1820 = vmatprep.subr.mxu0 %v1678
        %1821 = vmatpush1.msra.mxu0 %v1677
        %1822 = vmatprep.subr.mxu0 %v1684
        %1823 = vmatpush1.msra.mxu0 %v1683
        %1824 = vmatprep.subr.mxu0 %v1690
        %1825 = vmatpush1.msra.mxu0 %v1689
        %1826 = vmatprep.subr.mxu0 %v1696
        %1827 = vmatpush1.msra.mxu0 %v1695
        %1828 = vmatprep.subr.mxu0 %v1702
        %1829 = vmatpush1.msra.mxu0 %v1701
        %1830 = vmatprep.subr.mxu0 %v1708
        %1831 = vmatpush1.msra.mxu0 %v1707
        %1832 = vmatprep.subr.mxu0 %v1714
        %1833 = vmatpush1.msra.mxu0 %v1713
        %1834 = vmatprep.subr.mxu0 %v1720
        %1835 = vmatpush1.msra.mxu0 %v1719
        %1836 = vmatprep.subr.mxu0 %v1726
        %1837 = vmatpush1.msra.mxu0 %v1725
        %1838 = vmatprep.subr.mxu0 0.0
        %1839 = vmatpush1.msra.mxu0 0.0
        %1840 = vmatprep.subr.mxu0 0.0
        %1841 = vmatpush1.msra.mxu0 0.0
        %1842 = vmatprep.subr.mxu0 0.0
        %1843 = vmatpush1.msra.mxu0 0.0
        %1844 = vmatprep.subr.mxu0 0.0
        %1845 = vmatpush1.msra.mxu0 0.0
        %1846 = vmatprep.subr.mxu0 0.0
        %1847 = vmatpush1.msra.mxu0 0.0
        %1848 = vmatprep.subr.mxu0 0.0
        %1849 = vmatpush1.msra.mxu0 0.0
        %1850 = vmatprep.subr.mxu0 0.0
        %1851 = vmatpush1.msra.mxu0 0.0
        %1852 = vmatprep.subr.mxu0 0.0
        %1853 = vmatpush1.msra.mxu0 0.0
        %1854 = vmatprep.subr.mxu0 0.0
        %1855 = vmatpush1.msra.mxu0 0.0
        %1856 = vmatprep.subr.mxu0 0.0
        %1857 = vmatpush1.msra.mxu0 0.0
        %1858 = vmatprep.subr.mxu0 0.0
        %1859 = vmatpush1.msra.mxu0 0.0
        %1860 = vmatprep.subr.mxu0 0.0
        %1861 = vmatpush1.msra.mxu0 0.0
        %1862 = vmatprep.subr.mxu0 0.0
        %1863 = vmatpush1.msra.mxu0 0.0
        %1864 = vmatprep.subr.mxu0 0.0
        %1865 = vmatpush1.msra.mxu0 0.0
        %1866 = vmatprep.subr.mxu0 0.0
        %1867 = vmatpush1.msra.mxu0 0.0
        %1868 = vmatprep.subr.mxu0 0.0
        %1869 = vmatpush1.msra.mxu0 0.0
        %1870 = vmatprep.mubr.f32.mxu0 0.0
        %1871 = vmatmul.mubr.f32.gmra.mrb[0].mxu0 %v1631
        %v1872 = vpop.f32.mrb[0].mxu0
        %v1873 = vadd.f32 0.0, %v1872
        %v1874 = vpop.f32.mrb[0].mxu0
        %v1875 = vadd.f32 0.0, %v1874
        %1876 = vmatprep.mubr.f32.mxu0 0.0
        %1877 = vmatmul.mubr.f32.gmra.mrb[0].mxu0 %v1632
        %v1878 = vpop.f32.mrb[0].mxu0
        %v1879 = vadd.f32 0.0, %v1878
        %v1880 = vpop.f32.mrb[0].mxu0
        %v1881 = vadd.f32 0.0, %v1880
        %1882 = vdwg.mxu0
        %1883 = vmatprep.subr.mxu0 %v1638
        %1884 = vmatpush1.msra.mxu0 %v1637
        %1885 = vmatprep.subr.mxu0 %v1644
        %1886 = vmatpush1.msra.mxu0 %v1643
        %1887 = vmatprep.subr.mxu0 %v1650
        %1888 = vmatpush1.msra.mxu0 %v1649
        %1889 = vmatprep.subr.mxu0 %v1656
        %1890 = vmatpush1.msra.mxu0 %v1655
        %1891 = vmatprep.subr.mxu0 %v1662
        %1892 = vmatpush1.msra.mxu0 %v1661
        %1893 = vmatprep.subr.mxu0 %v1668
        %1894 = vmatpush1.msra.mxu0 %v1667
        %1895 = vmatprep.subr.mxu0 %v1674
        %1896 = vmatpush1.msra.mxu0 %v1673
        %1897 = vmatprep.subr.mxu0 %v1680
        %1898 = vmatpush1.msra.mxu0 %v1679
        %1899 = vmatprep.subr.mxu0 %v1686
        %1900 = vmatpush1.msra.mxu0 %v1685
        %1901 = vmatprep.subr.mxu0 %v1692
        %1902 = vmatpush1.msra.mxu0 %v1691
        %1903 = vmatprep.subr.mxu0 %v1698
        %1904 = vmatpush1.msra.mxu0 %v1697
        %1905 = vmatprep.subr.mxu0 %v1704
        %1906 = vmatpush1.msra.mxu0 %v1703
        %1907 = vmatprep.subr.mxu0 %v1710
        %1908 = vmatpush1.msra.mxu0 %v1709
        %1909 = vmatprep.subr.mxu0 %v1716
        %1910 = vmatpush1.msra.mxu0 %v1715
        %1911 = vmatprep.subr.mxu0 %v1722
        %1912 = vmatpush1.msra.mxu0 %v1721
        %1913 = vmatprep.subr.mxu0 %v1728
        %1914 = vmatpush1.msra.mxu0 %v1727
        %1915 = vmatprep.subr.mxu0 0.0
        %1916 = vmatpush1.msra.mxu0 0.0
        %1917 = vmatprep.subr.mxu0 0.0
        %1918 = vmatpush1.msra.mxu0 0.0
        %1919 = vmatprep.subr.mxu0 0.0
        %1920 = vmatpush1.msra.mxu0 0.0
        %1921 = vmatprep.subr.mxu0 0.0
        %1922 = vmatpush1.msra.mxu0 0.0
        %1923 = vmatprep.subr.mxu0 0.0
        %1924 = vmatpush1.msra.mxu0 0.0
        %1925 = vmatprep.subr.mxu0 0.0
        %1926 = vmatpush1.msra.mxu0 0.0
        %1927 = vmatprep.subr.mxu0 0.0
        %1928 = vmatpush1.msra.mxu0 0.0
        %1929 = vmatprep.subr.mxu0 0.0
        %1930 = vmatpush1.msra.mxu0 0.0
        %1931 = vmatprep.subr.mxu0 0.0
        %1932 = vmatpush1.msra.mxu0 0.0
        %1933 = vmatprep.subr.mxu0 0.0
        %1934 = vmatpush1.msra.mxu0 0.0
        %1935 = vmatprep.subr.mxu0 0.0
        %1936 = vmatpush1.msra.mxu0 0.0
        %1937 = vmatprep.subr.mxu0 0.0
        %1938 = vmatpush1.msra.mxu0 0.0
        %1939 = vmatprep.subr.mxu0 0.0
        %1940 = vmatpush1.msra.mxu0 0.0
        %1941 = vmatprep.subr.mxu0 0.0
        %1942 = vmatpush1.msra.mxu0 0.0
        %1943 = vmatprep.subr.mxu0 0.0
        %1944 = vmatpush1.msra.mxu0 0.0
        %1945 = vmatprep.subr.mxu0 0.0
        %1946 = vmatpush1.msra.mxu0 0.0
        %1947 = vmatprep.mubr.f32.mxu0 0.0
        %1948 = vmatmul.mubr.f32.gmra.mrb[0].mxu0 %v1631
        %v1949 = vpop.f32.mrb[0].mxu0
        %v1950 = vadd.f32 0.0, %v1949
        %v1951 = vpop.f32.mrb[0].mxu0
        %v1952 = vadd.f32 0.0, %v1951
        %1953 = vmatprep.mubr.f32.mxu0 0.0
        %1954 = vmatmul.mubr.f32.gmra.mrb[0].mxu0 %v1632
        %v1955 = vpop.f32.mrb[0].mxu0
        %v1956 = vadd.f32 0.0, %v1955
        %v1957 = vpop.f32.mrb[0].mxu0
        %v1958 = vadd.f32 0.0, %v1957
        %1959 = vdwg.mxu0
        %1960 = vmatprep.subr.mxu0 %v1798
        %1961 = vmatpush1.msra.mxu0 %v1796
        %1962 = vmatprep.subr.mxu0 %v1804
        %1963 = vmatpush1.msra.mxu0 %v1802
        %1964 = vmatprep.subr.mxu0 0.0
        %1965 = vmatpush1.msra.mxu0 0.0
        %1966 = vmatprep.subr.mxu0 0.0
        %1967 = vmatpush1.msra.mxu0 0.0
        %1968 = vmatprep.subr.mxu0 0.0
        %1969 = vmatpush1.msra.mxu0 0.0
        %1970 = vmatprep.subr.mxu0 0.0
        %1971 = vmatpush1.msra.mxu0 0.0
        %1972 = vmatprep.subr.mxu0 0.0
        %1973 = vmatpush1.msra.mxu0 0.0
        %1974 = vmatprep.subr.mxu0 0.0
        %1975 = vmatpush1.msra.mxu0 0.0
        %1976 = vmatprep.subr.mxu0 0.0
        %1977 = vmatpush1.msra.mxu0 0.0
        %1978 = vmatprep.subr.mxu0 0.0
        %1979 = vmatpush1.msra.mxu0 0.0
        %1980 = vmatprep.subr.mxu0 0.0
        %1981 = vmatpush1.msra.mxu0 0.0
        %1982 = vmatprep.subr.mxu0 0.0
        %1983 = vmatpush1.msra.mxu0 0.0
        %1984 = vmatprep.subr.mxu0 0.0
        %1985 = vmatpush1.msra.mxu0 0.0
        %1986 = vmatprep.subr.mxu0 0.0
        %1987 = vmatpush1.msra.mxu0 0.0
        %1988 = vmatprep.subr.mxu0 0.0
        %1989 = vmatpush1.msra.mxu0 0.0
        %1990 = vmatprep.subr.mxu0 0.0
        %1991 = vmatpush1.msra.mxu0 0.0
        %1992 = vmatprep.subr.mxu0 0.0
        %1993 = vmatpush1.msra.mxu0 0.0
        %1994 = vmatprep.subr.mxu0 0.0
        %1995 = vmatpush1.msra.mxu0 0.0
        %1996 = vmatprep.subr.mxu0 0.0
        %1997 = vmatpush1.msra.mxu0 0.0
        %1998 = vmatprep.subr.mxu0 0.0
        %1999 = vmatpush1.msra.mxu0 0.0
        %2000 = vmatprep.subr.mxu0 0.0
        %2001 = vmatpush1.msra.mxu0 0.0
        %2002 = vmatprep.subr.mxu0 0.0
        %2003 = vmatpush1.msra.mxu0 0.0
        %2004 = vmatprep.subr.mxu0 0.0
        %2005 = vmatpush1.msra.mxu0 0.0
        %2006 = vmatprep.subr.mxu0 0.0
        %2007 = vmatpush1.msra.mxu0 0.0
        %2008 = vmatprep.subr.mxu0 0.0
        %2009 = vmatpush1.msra.mxu0 0.0
        %2010 = vmatprep.subr.mxu0 0.0
        %2011 = vmatpush1.msra.mxu0 0.0
        %2012 = vmatprep.subr.mxu0 0.0
        %2013 = vmatpush1.msra.mxu0 0.0
        %2014 = vmatprep.subr.mxu0 0.0
        %2015 = vmatpush1.msra.mxu0 0.0
        %2016 = vmatprep.subr.mxu0 0.0
        %2017 = vmatpush1.msra.mxu0 0.0
        %2018 = vmatprep.subr.mxu0 0.0
        %2019 = vmatpush1.msra.mxu0 0.0
        %2020 = vmatprep.subr.mxu0 0.0
        %2021 = vmatpush1.msra.mxu0 0.0
        %2022 = vmatprep.subr.mxu0 0.0
        %2023 = vmatpush1.msra.mxu0 0.0
        %2024 = vmatprep.mubr.f32.mxu0 0.0
        %2025 = vmatmul.mubr.f32.gmra.mrb[0].mxu0 %v727
        %v2026 = vpop.f32.mrb[0].mxu0
        %v2027 = vadd.f32 0.0, %v2026
        %v2028 = vpop.f32.mrb[0].mxu0
        %v2029 = vadd.f32 0.0, %v2028
        %2030 = vmatprep.mubr.f32.mxu0 0.0
        %2031 = vmatmul.mubr.f32.gmra.mrb[0].mxu0 %v730
        %v2032 = vpop.f32.mrb[0].mxu0
        %v2033 = vadd.f32 0.0, %v2032
        %v2034 = vpop.f32.mrb[0].mxu0
        %v2035 = vadd.f32 0.0, %v2034
        %2036 = vdwg.mxu0
        %v2037 = vadd.f32 %v1873, %v2027
        %v2038 = vadd.f32 %v1875, %v2029
        %v2039 = vadd.f32 %v1879, %v2033
        %v2040 = vadd.f32 %v1881, %v2035
        %2041 = vmatprep.subr.mxu0 %v1952
        %2042 = vmatpush1.msra.mxu0 %v1950
        %2043 = vmatprep.subr.mxu0 %v1958
        %2044 = vmatpush1.msra.mxu0 %v1956
        %2045 = vmatprep.subr.mxu0 0.0
        %2046 = vmatpush1.msra.mxu0 0.0
        %2047 = vmatprep.subr.mxu0 0.0
        %2048 = vmatpush1.msra.mxu0 0.0
        %2049 = vmatprep.subr.mxu0 0.0
        %2050 = vmatpush1.msra.mxu0 0.0
        %2051 = vmatprep.subr.mxu0 0.0
        %2052 = vmatpush1.msra.mxu0 0.0
        %2053 = vmatprep.subr.mxu0 0.0
        %2054 = vmatpush1.msra.mxu0 0.0
        %2055 = vmatprep.subr.mxu0 0.0
        %2056 = vmatpush1.msra.mxu0 0.0
        %2057 = vmatprep.subr.mxu0 0.0
        %2058 = vmatpush1.msra.mxu0 0.0
        %2059 = vmatprep.subr.mxu0 0.0
        %2060 = vmatpush1.msra.mxu0 0.0
        %2061 = vmatprep.subr.mxu0 0.0
        %2062 = vmatpush1.msra.mxu0 0.0
        %2063 = vmatprep.subr.mxu0 0.0
        %2064 = vmatpush1.msra.mxu0 0.0
        %2065 = vmatprep.subr.mxu0 0.0
        %2066 = vmatpush1.msra.mxu0 0.0
        %2067 = vmatprep.subr.mxu0 0.0
        %2068 = vmatpush1.msra.mxu0 0.0
        %2069 = vmatprep.subr.mxu0 0.0
        %2070 = vmatpush1.msra.mxu0 0.0
        %2071 = vmatprep.subr.mxu0 0.0
        %2072 = vmatpush1.msra.mxu0 0.0
        %2073 = vmatprep.subr.mxu0 0.0
        %2074 = vmatpush1.msra.mxu0 0.0
        %2075 = vmatprep.subr.mxu0 0.0
        %2076 = vmatpush1.msra.mxu0 0.0
        %2077 = vmatprep.subr.mxu0 0.0
        %2078 = vmatpush1.msra.mxu0 0.0
        %2079 = vmatprep.subr.mxu0 0.0
        %2080 = vmatpush1.msra.mxu0 0.0
        %2081 = vmatprep.subr.mxu0 0.0
        %2082 = vmatpush1.msra.mxu0 0.0
        %2083 = vmatprep.subr.mxu0 0.0
        %2084 = vmatpush1.msra.mxu0 0.0
        %2085 = vmatprep.subr.mxu0 0.0
        %2086 = vmatpush1.msra.mxu0 0.0
        %2087 = vmatprep.subr.mxu0 0.0
        %2088 = vmatpush1.msra.mxu0 0.0
        %2089 = vmatprep.subr.mxu0 0.0
        %2090 = vmatpush1.msra.mxu0 0.0
        %2091 = vmatprep.subr.mxu0 0.0
        %2092 = vmatpush1.msra.mxu0 0.0
        %2093 = vmatprep.subr.mxu0 0.0
        %2094 = vmatpush1.msra.mxu0 0.0
        %2095 = vmatprep.subr.mxu0 0.0
        %2096 = vmatpush1.msra.mxu0 0.0
        %2097 = vmatprep.subr.mxu0 0.0
        %2098 = vmatpush1.msra.mxu0 0.0
        %2099 = vmatprep.subr.mxu0 0.0
        %2100 = vmatpush1.msra.mxu0 0.0
        %2101 = vmatprep.subr.mxu0 0.0
        %2102 = vmatpush1.msra.mxu0 0.0
        %2103 = vmatprep.subr.mxu0 0.0
        %2104 = vmatpush1.msra.mxu0 0.0
        %2105 = vmatprep.mubr.f32.mxu0 0.0
        %2106 = vmatmul.mubr.f32.gmra.mrb[0].mxu0 %v810
        %v2107 = vpop.f32.mrb[0].mxu0
        %v2108 = vadd.f32 0.0, %v2107
        %v2109 = vpop.f32.mrb[0].mxu0
        %v2110 = vadd.f32 0.0, %v2109
        %2111 = vmatprep.mubr.f32.mxu0 0.0
        %2112 = vmatmul.mubr.f32.gmra.mrb[0].mxu0 %v813
        %v2113 = vpop.f32.mrb[0].mxu0
        %v2114 = vadd.f32 0.0, %v2113
        %v2115 = vpop.f32.mrb[0].mxu0
        %v2116 = vadd.f32 0.0, %v2115
        %2117 = vdwg.mxu0
        %v2118 = vadd.f32 %v2037, %v2108
        %v2119 = vadd.f32 %v2038, %v2110
        %v2120 = vadd.f32 %v2039, %v2114
        %v2121 = vadd.f32 %v2040, %v2116
        %v2122 = vld [vmem:[%s10] sm:$0x3]
        %v2124 = vlaneseq
        %v2125 = vshrl.u32 %v2124, 7
        %v2126 = vsub.s32 0, %v2125
        %v2127 = vrot.slane %v2122, %v2126
        %v2128 = vlaneseq
        %v2129 = vshrl.u32 %v2128, 7
        %v2130 = vsub.s32 1, %v2129
        %v2131 = vrot.slane %v2122, %v2130
        %v2134 = vadd.f32 %v2118, %v2127
        %v2135 = vadd.f32 %v2119, %v2131
        %v2136 = vadd.f32 %v2120, %v2127
        %v2137 = vadd.f32 %v2121, %v2131
        %v2138 = vmax.f32 %v2134, 0.0
        %v2139 = vmax.f32 %v2135, 0.0
        %v2140 = vmax.f32 %v2136, 0.0
        %v2141 = vmax.f32 %v2137, 0.0
        %v2142 = vld [vmem:[#allocation7] sm:$0xff]
        %v2143 = vld [vmem:[#allocation7 + $0x8] sm:$0xff]
        %v2144 = vld [vmem:[#allocation7 + $0x10] sm:$0xff]
        %v2145 = vld [vmem:[#allocation7 + $0x18] sm:$0xff]
        %v2146 = vld [vmem:[#allocation7 + $0x20] sm:$0xff]
        %v2147 = vld [vmem:[#allocation7 + $0x28] sm:$0xff]
        %v2148 = vld [vmem:[#allocation7 + $0x30] sm:$0xff]
        %v2149 = vld [vmem:[#allocation7 + $0x38] sm:$0xff]
        %v2150 = vld [vmem:[#allocation7 + $0x40] sm:$0xff]
        %v2151 = vld [vmem:[#allocation7 + $0x48] sm:$0xff]
        %v2152 = vld [vmem:[#allocation7 + $0x50] sm:$0xff]
        %v2153 = vld [vmem:[#allocation7 + $0x58] sm:$0xff]
        %v2154 = vld [vmem:[#allocation7 + $0x60] sm:$0xff]
        %v2155 = vld [vmem:[#allocation7 + $0x68] sm:$0xff]
        %v2156 = vld [vmem:[#allocation7 + $0x70] sm:$0xff]
        %v2157 = vld [vmem:[#allocation7 + $0x78] sm:$0xff]
        %v2158 = vld [vmem:[#allocation7 + $0x80] sm:$0xff]
        %v2159 = vld [vmem:[#allocation7 + $0x88] sm:$0xff]
        %v2160 = vld [vmem:[#allocation7 + $0x90] sm:$0xff]
        %v2161 = vld [vmem:[#allocation7 + $0x98] sm:$0xff]
        %v2162 = vld [vmem:[#allocation7 + $0xa0] sm:$0xff]
        %v2163 = vld [vmem:[#allocation7 + $0xa8] sm:$0xff]
        %v2164 = vld [vmem:[#allocation7 + $0xb0] sm:$0xff]
        %v2165 = vld [vmem:[#allocation7 + $0xb8] sm:$0xff]
        %v2166 = vld [vmem:[#allocation7 + $0xc0] sm:$0xff]
        %v2167 = vld [vmem:[#allocation7 + $0xc8] sm:$0xff]
        %v2168 = vld [vmem:[#allocation7 + $0xd0] sm:$0xff]
        %v2169 = vld [vmem:[#allocation7 + $0xd8] sm:$0xff]
        %v2170 = vld [vmem:[#allocation7 + $0xe0] sm:$0xff]
        %v2171 = vld [vmem:[#allocation7 + $0xe8] sm:$0xff]
        %v2172 = vld [vmem:[#allocation7 + $0xf0] sm:$0xff]
        %v2173 = vld [vmem:[#allocation7 + $0xf8] sm:$0xff]
        %v2174 = vld [vmem:[#allocation7 + $0x100] sm:$0xff]
        %v2175 = vld [vmem:[#allocation7 + $0x108] sm:$0xff]
        %v2176 = vld [vmem:[#allocation7 + $0x110] sm:$0xff]
        %v2177 = vld [vmem:[#allocation7 + $0x118] sm:$0xff]
        %v2178 = vld [vmem:[#allocation7 + $0x120] sm:$0xff]
        %v2179 = vld [vmem:[#allocation7 + $0x128] sm:$0xff]
        %v2180 = vld [vmem:[#allocation7 + $0x130] sm:$0xff]
        %v2181 = vld [vmem:[#allocation7 + $0x138] sm:$0xff]
        %v2182 = vld [vmem:[#allocation7 + $0x140] sm:$0xff]
        %v2183 = vld [vmem:[#allocation7 + $0x148] sm:$0xff]
        %v2184 = vld [vmem:[#allocation7 + $0x150] sm:$0xff]
        %v2185 = vld [vmem:[#allocation7 + $0x158] sm:$0xff]
        %v2186 = vld [vmem:[#allocation7 + $0x160] sm:$0xff]
        %v2187 = vld [vmem:[#allocation7 + $0x168] sm:$0xff]
        %v2188 = vld [vmem:[#allocation7 + $0x170] sm:$0xff]
        %v2189 = vld [vmem:[#allocation7 + $0x178] sm:$0xff]
        %v2190 = vld [vmem:[#allocation7 + $0x180] sm:$0xff]
        %v2191 = vld [vmem:[#allocation7 + $0x188] sm:$0xff]
        %v2192 = vld [vmem:[#allocation7 + $0x190] sm:$0xff]
        %v2193 = vld [vmem:[#allocation7 + $0x198] sm:$0xff]
        %v2194 = vld [vmem:[#allocation7 + $0x1a0] sm:$0xff]
        %v2195 = vld [vmem:[#allocation7 + $0x1a8] sm:$0xff]
        %v2196 = vld [vmem:[#allocation7 + $0x1b0] sm:$0xff]
        %v2197 = vld [vmem:[#allocation7 + $0x1b8] sm:$0xff]
        %v2198 = vld [vmem:[#allocation7 + $0x1c0] sm:$0xff]
        %v2199 = vld [vmem:[#allocation7 + $0x1c8] sm:$0xff]
        %v2200 = vld [vmem:[#allocation7 + $0x1d0] sm:$0xff]
        %v2201 = vld [vmem:[#allocation7 + $0x1d8] sm:$0xff]
        %v2202 = vld [vmem:[#allocation7 + $0x1e0] sm:$0xff]
        %v2203 = vld [vmem:[#allocation7 + $0x1e8] sm:$0xff]
        %v2204 = vld [vmem:[#allocation7 + $0x1f0] sm:$0xff]
        %v2205 = vld [vmem:[#allocation7 + $0x1f8] sm:$0xff]
        %v2206 = vld [vmem:[#allocation7 + $0x200] sm:$0xff]
        %v2207 = vld [vmem:[#allocation7 + $0x208] sm:$0xff]
        %v2208 = vld [vmem:[#allocation7 + $0x210] sm:$0xff]
        %v2209 = vld [vmem:[#allocation7 + $0x218] sm:$0xff]
        %v2210 = vld [vmem:[#allocation7 + $0x220] sm:$0xff]
        %v2211 = vld [vmem:[#allocation7 + $0x228] sm:$0xff]
        %v2212 = vld [vmem:[#allocation7 + $0x230] sm:$0xff]
        %v2213 = vld [vmem:[#allocation7 + $0x238] sm:$0xff]
        %v2214 = vld [vmem:[#allocation7 + $0x240] sm:$0xff]
        %v2215 = vld [vmem:[#allocation7 + $0x248] sm:$0xff]
        %v2216 = vld [vmem:[#allocation7 + $0x250] sm:$0xff]
        %v2217 = vld [vmem:[#allocation7 + $0x258] sm:$0xff]
        %v2218 = vld [vmem:[#allocation7 + $0x260] sm:$0xff]
        %v2219 = vld [vmem:[#allocation7 + $0x268] sm:$0xff]
        %v2220 = vld [vmem:[#allocation7 + $0x270] sm:$0xff]
        %v2221 = vld [vmem:[#allocation7 + $0x278] sm:$0xff]
        %v2222 = vld [vmem:[#allocation7 + $0x280] sm:$0xff]
        %v2223 = vld [vmem:[#allocation7 + $0x288] sm:$0xff]
        %v2224 = vld [vmem:[#allocation7 + $0x290] sm:$0xff]
        %v2225 = vld [vmem:[#allocation7 + $0x298] sm:$0xff]
        %v2226 = vld [vmem:[#allocation7 + $0x2a0] sm:$0xff]
        %v2227 = vld [vmem:[#allocation7 + $0x2a8] sm:$0xff]
        %v2228 = vld [vmem:[#allocation7 + $0x2b0] sm:$0xff]
        %v2229 = vld [vmem:[#allocation7 + $0x2b8] sm:$0xff]
        %v2230 = vld [vmem:[#allocation7 + $0x2c0] sm:$0xff]
        %v2231 = vld [vmem:[#allocation7 + $0x2c8] sm:$0xff]
        %v2232 = vld [vmem:[#allocation7 + $0x2d0] sm:$0xff]
        %v2233 = vld [vmem:[#allocation7 + $0x2d8] sm:$0xff]
        %v2234 = vld [vmem:[#allocation7 + $0x2e0] sm:$0xff]
        %v2235 = vld [vmem:[#allocation7 + $0x2e8] sm:$0xff]
        %v2236 = vld [vmem:[#allocation7 + $0x2f0] sm:$0xff]
        %v2237 = vld [vmem:[#allocation7 + $0x2f8] sm:$0xff]
        %v2238 = vld [vmem:[#allocation7 + $0x300] sm:$0xff]
        %v2239 = vld [vmem:[#allocation7 + $0x308] sm:$0xff]
        %v2240 = vld [vmem:[#allocation7 + $0x310] sm:$0xff]
        %v2241 = vld [vmem:[#allocation7 + $0x318] sm:$0xff]
        %v2242 = vld [vmem:[#allocation7 + $0x320] sm:$0xff]
        %v2243 = vld [vmem:[#allocation7 + $0x328] sm:$0xff]
        %v2244 = vld [vmem:[#allocation7 + $0x330] sm:$0xff]
        %v2245 = vld [vmem:[#allocation7 + $0x338] sm:$0xff]
        %v2246 = vld [vmem:[#allocation7 + $0x340] sm:$0xff]
        %v2247 = vld [vmem:[#allocation7 + $0x348] sm:$0xff]
        %v2248 = vld [vmem:[#allocation7 + $0x350] sm:$0xff]
        %v2249 = vld [vmem:[#allocation7 + $0x358] sm:$0xff]
        %v2250 = vld [vmem:[#allocation7 + $0x360] sm:$0xff]
        %v2251 = vld [vmem:[#allocation7 + $0x368] sm:$0xff]
        %v2252 = vld [vmem:[#allocation7 + $0x370] sm:$0xff]
        %v2253 = vld [vmem:[#allocation7 + $0x378] sm:$0xff]
        %v2254 = vld [vmem:[#allocation7 + $0x380] sm:$0xff]
        %v2255 = vld [vmem:[#allocation7 + $0x388] sm:$0xff]
        %v2256 = vld [vmem:[#allocation7 + $0x390] sm:$0xff]
        %v2257 = vld [vmem:[#allocation7 + $0x398] sm:$0xff]
        %v2258 = vld [vmem:[#allocation7 + $0x3a0] sm:$0xff]
        %v2259 = vld [vmem:[#allocation7 + $0x3a8] sm:$0xff]
        %v2260 = vld [vmem:[#allocation7 + $0x3b0] sm:$0xff]
        %v2261 = vld [vmem:[#allocation7 + $0x3b8] sm:$0xff]
        %v2262 = vld [vmem:[#allocation7 + $0x3c0] sm:$0xff]
        %v2263 = vld [vmem:[#allocation7 + $0x3c8] sm:$0xff]
        %v2264 = vld [vmem:[#allocation7 + $0x3d0] sm:$0xff]
        %v2265 = vld [vmem:[#allocation7 + $0x3d8] sm:$0xff]
        %v2266 = vld [vmem:[#allocation7 + $0x3e0] sm:$0xff]
        %v2267 = vld [vmem:[#allocation7 + $0x3e8] sm:$0xff]
        %v2268 = vld [vmem:[#allocation7 + $0x3f0] sm:$0xff]
        %v2269 = vld [vmem:[#allocation7 + $0x3f8] sm:$0xff]
        %v2270 = vld [vmem:[#allocation7 + $0x400] sm:$0xff]
        %v2271 = vld [vmem:[#allocation7 + $0x408] sm:$0xff]
        %v2272 = vld [vmem:[#allocation7 + $0x410] sm:$0xff]
        %v2273 = vld [vmem:[#allocation7 + $0x418] sm:$0xff]
        %v2274 = vld [vmem:[#allocation7 + $0x420] sm:$0xff]
        %v2275 = vld [vmem:[#allocation7 + $0x428] sm:$0xff]
        %v2276 = vld [vmem:[#allocation7 + $0x430] sm:$0xff]
        %v2277 = vld [vmem:[#allocation7 + $0x438] sm:$0xff]
        %v2278 = vld [vmem:[#allocation7 + $0x440] sm:$0xff]
        %v2279 = vld [vmem:[#allocation7 + $0x448] sm:$0xff]
        %v2280 = vld [vmem:[#allocation7 + $0x450] sm:$0xff]
        %v2281 = vld [vmem:[#allocation7 + $0x458] sm:$0xff]
        %v2282 = vld [vmem:[#allocation7 + $0x460] sm:$0xff]
        %v2283 = vld [vmem:[#allocation7 + $0x468] sm:$0xff]
        %v2284 = vld [vmem:[#allocation7 + $0x470] sm:$0xff]
        %v2285 = vld [vmem:[#allocation7 + $0x478] sm:$0xff]
        %v2286 = vld [vmem:[#allocation7 + $0x480] sm:$0xff]
        %v2287 = vld [vmem:[#allocation7 + $0x488] sm:$0xff]
        %v2288 = vld [vmem:[#allocation7 + $0x490] sm:$0xff]
        %v2289 = vld [vmem:[#allocation7 + $0x498] sm:$0xff]
        %v2290 = vld [vmem:[#allocation7 + $0x4a0] sm:$0xff]
        %v2291 = vld [vmem:[#allocation7 + $0x4a8] sm:$0xff]
        %v2292 = vld [vmem:[#allocation7 + $0x4b0] sm:$0xff]
        %v2293 = vld [vmem:[#allocation7 + $0x4b8] sm:$0xff]
        %v2294 = vld [vmem:[#allocation7 + $0x4c0] sm:$0xff]
        %v2295 = vld [vmem:[#allocation7 + $0x4c8] sm:$0xff]
        %v2296 = vld [vmem:[#allocation7 + $0x4d0] sm:$0xff]
        %v2297 = vld [vmem:[#allocation7 + $0x4d8] sm:$0xff]
        %v2298 = vld [vmem:[#allocation7 + $0x4e0] sm:$0xff]
        %v2299 = vld [vmem:[#allocation7 + $0x4e8] sm:$0xff]
        %v2300 = vld [vmem:[#allocation7 + $0x4f0] sm:$0xff]
        %v2301 = vld [vmem:[#allocation7 + $0x4f8] sm:$0xff]
        %v2302 = vld [vmem:[#allocation7 + $0x500] sm:$0xff]
        %v2303 = vld [vmem:[#allocation7 + $0x508] sm:$0xff]
        %v2304 = vld [vmem:[#allocation7 + $0x510] sm:$0xff]
        %v2305 = vld [vmem:[#allocation7 + $0x518] sm:$0xff]
        %v2306 = vld [vmem:[#allocation7 + $0x520] sm:$0xff]
        %v2307 = vld [vmem:[#allocation7 + $0x528] sm:$0xff]
        %v2308 = vld [vmem:[#allocation7 + $0x530] sm:$0xff]
        %v2309 = vld [vmem:[#allocation7 + $0x538] sm:$0xff]
        %v2310 = vld [vmem:[#allocation7 + $0x540] sm:$0xff]
        %v2311 = vld [vmem:[#allocation7 + $0x548] sm:$0xff]
        %v2312 = vld [vmem:[#allocation7 + $0x550] sm:$0xff]
        %v2313 = vld [vmem:[#allocation7 + $0x558] sm:$0xff]
        %v2314 = vld [vmem:[#allocation7 + $0x560] sm:$0xff]
        %v2315 = vld [vmem:[#allocation7 + $0x568] sm:$0xff]
        %v2316 = vld [vmem:[#allocation7 + $0x570] sm:$0xff]
        %v2317 = vld [vmem:[#allocation7 + $0x578] sm:$0xff]
        %v2318 = vld [vmem:[#allocation7 + $0x580] sm:$0xff]
        %v2319 = vld [vmem:[#allocation7 + $0x588] sm:$0xff]
        %v2320 = vld [vmem:[#allocation7 + $0x590] sm:$0xff]
        %v2321 = vld [vmem:[#allocation7 + $0x598] sm:$0xff]
        %v2322 = vld [vmem:[#allocation7 + $0x5a0] sm:$0xff]
        %v2323 = vld [vmem:[#allocation7 + $0x5a8] sm:$0xff]
        %v2324 = vld [vmem:[#allocation7 + $0x5b0] sm:$0xff]
        %v2325 = vld [vmem:[#allocation7 + $0x5b8] sm:$0xff]
        %v2326 = vld [vmem:[#allocation7 + $0x5c0] sm:$0xff]
        %v2327 = vld [vmem:[#allocation7 + $0x5c8] sm:$0xff]
        %v2328 = vld [vmem:[#allocation7 + $0x5d0] sm:$0xff]
        %v2329 = vld [vmem:[#allocation7 + $0x5d8] sm:$0xff]
        %v2330 = vld [vmem:[#allocation7 + $0x5e0] sm:$0xff]
        %v2331 = vld [vmem:[#allocation7 + $0x5e8] sm:$0xff]
        %v2332 = vld [vmem:[#allocation7 + $0x5f0] sm:$0xff]
        %v2333 = vld [vmem:[#allocation7 + $0x5f8] sm:$0xff]
        %2334 = vmatprep.subr.mxu0 %v2143
        %2335 = vmatpush1.msra.mxu0 %v2142
        %2336 = vmatprep.subr.mxu0 %v2149
        %2337 = vmatpush1.msra.mxu0 %v2148
        %2338 = vmatprep.subr.mxu0 %v2155
        %2339 = vmatpush1.msra.mxu0 %v2154
        %2340 = vmatprep.subr.mxu0 %v2161
        %2341 = vmatpush1.msra.mxu0 %v2160
        %2342 = vmatprep.subr.mxu0 %v2167
        %2343 = vmatpush1.msra.mxu0 %v2166
        %2344 = vmatprep.subr.mxu0 %v2173
        %2345 = vmatpush1.msra.mxu0 %v2172
        %2346 = vmatprep.subr.mxu0 %v2179
        %2347 = vmatpush1.msra.mxu0 %v2178
        %2348 = vmatprep.subr.mxu0 %v2185
        %2349 = vmatpush1.msra.mxu0 %v2184
        %2350 = vmatprep.subr.mxu0 %v2191
        %2351 = vmatpush1.msra.mxu0 %v2190
        %2352 = vmatprep.subr.mxu0 %v2197
        %2353 = vmatpush1.msra.mxu0 %v2196
        %2354 = vmatprep.subr.mxu0 %v2203
        %2355 = vmatpush1.msra.mxu0 %v2202
        %2356 = vmatprep.subr.mxu0 %v2209
        %2357 = vmatpush1.msra.mxu0 %v2208
        %2358 = vmatprep.subr.mxu0 %v2215
        %2359 = vmatpush1.msra.mxu0 %v2214
        %2360 = vmatprep.subr.mxu0 %v2221
        %2361 = vmatpush1.msra.mxu0 %v2220
        %2362 = vmatprep.subr.mxu0 %v2227
        %2363 = vmatpush1.msra.mxu0 %v2226
        %2364 = vmatprep.subr.mxu0 %v2233
        %2365 = vmatpush1.msra.mxu0 %v2232
        %2366 = vmatprep.subr.mxu0 %v2239
        %2367 = vmatpush1.msra.mxu0 %v2238
        %2368 = vmatprep.subr.mxu0 %v2245
        %2369 = vmatpush1.msra.mxu0 %v2244
        %2370 = vmatprep.subr.mxu0 %v2251
        %2371 = vmatpush1.msra.mxu0 %v2250
        %2372 = vmatprep.subr.mxu0 %v2257
        %2373 = vmatpush1.msra.mxu0 %v2256
        %2374 = vmatprep.subr.mxu0 %v2263
        %2375 = vmatpush1.msra.mxu0 %v2262
        %2376 = vmatprep.subr.mxu0 %v2269
        %2377 = vmatpush1.msra.mxu0 %v2268
        %2378 = vmatprep.subr.mxu0 %v2275
        %2379 = vmatpush1.msra.mxu0 %v2274
        %2380 = vmatprep.subr.mxu0 %v2281
        %2381 = vmatpush1.msra.mxu0 %v2280
        %2382 = vmatprep.subr.mxu0 %v2287
        %2383 = vmatpush1.msra.mxu0 %v2286
        %2384 = vmatprep.subr.mxu0 %v2293
        %2385 = vmatpush1.msra.mxu0 %v2292
        %2386 = vmatprep.subr.mxu0 %v2299
        %2387 = vmatpush1.msra.mxu0 %v2298
        %2388 = vmatprep.subr.mxu0 %v2305
        %2389 = vmatpush1.msra.mxu0 %v2304
        %2390 = vmatprep.subr.mxu0 %v2311
        %2391 = vmatpush1.msra.mxu0 %v2310
        %2392 = vmatprep.subr.mxu0 %v2317
        %2393 = vmatpush1.msra.mxu0 %v2316
        %2394 = vmatprep.subr.mxu0 %v2323
        %2395 = vmatpush1.msra.mxu0 %v2322
        %2396 = vmatprep.subr.mxu0 %v2329
        %2397 = vmatpush1.msra.mxu0 %v2328
        %2398 = vmatprep.mubr.f32.mxu0 %v2139
        %2399 = vmatmul.mubr.f32.gmra.mrb[0].mxu0 %v2138
        %v2400 = vpop.f32.mrb[0].mxu0
        %v2401 = vadd.f32 0.0, %v2400
        %v2402 = vpop.f32.mrb[0].mxu0
        %v2403 = vadd.f32 0.0, %v2402
        %2404 = vmatprep.mubr.f32.mxu0 %v2141
        %2405 = vmatmul.mubr.f32.gmra.mrb[0].mxu0 %v2140
        %v2406 = vpop.f32.mrb[0].mxu0
        %v2407 = vadd.f32 0.0, %v2406
        %v2408 = vpop.f32.mrb[0].mxu0
        %v2409 = vadd.f32 0.0, %v2408
        %2410 = vdwg.mxu0
        %2411 = vmatprep.subr.mxu0 %v2145
        %2412 = vmatpush1.msra.mxu0 %v2144
        %2413 = vmatprep.subr.mxu0 %v2151
        %2414 = vmatpush1.msra.mxu0 %v2150
        %2415 = vmatprep.subr.mxu0 %v2157
        %2416 = vmatpush1.msra.mxu0 %v2156
        %2417 = vmatprep.subr.mxu0 %v2163
        %2418 = vmatpush1.msra.mxu0 %v2162
        %2419 = vmatprep.subr.mxu0 %v2169
        %2420 = vmatpush1.msra.mxu0 %v2168
        %2421 = vmatprep.subr.mxu0 %v2175
        %2422 = vmatpush1.msra.mxu0 %v2174
        %2423 = vmatprep.subr.mxu0 %v2181
        %2424 = vmatpush1.msra.mxu0 %v2180
        %2425 = vmatprep.subr.mxu0 %v2187
        %2426 = vmatpush1.msra.mxu0 %v2186
        %2427 = vmatprep.subr.mxu0 %v2193
        %2428 = vmatpush1.msra.mxu0 %v2192
        %2429 = vmatprep.subr.mxu0 %v2199
        %2430 = vmatpush1.msra.mxu0 %v2198
        %2431 = vmatprep.subr.mxu0 %v2205
        %2432 = vmatpush1.msra.mxu0 %v2204
        %2433 = vmatprep.subr.mxu0 %v2211
        %2434 = vmatpush1.msra.mxu0 %v2210
        %2435 = vmatprep.subr.mxu0 %v2217
        %2436 = vmatpush1.msra.mxu0 %v2216
        %2437 = vmatprep.subr.mxu0 %v2223
        %2438 = vmatpush1.msra.mxu0 %v2222
        %2439 = vmatprep.subr.mxu0 %v2229
        %2440 = vmatpush1.msra.mxu0 %v2228
        %2441 = vmatprep.subr.mxu0 %v2235
        %2442 = vmatpush1.msra.mxu0 %v2234
        %2443 = vmatprep.subr.mxu0 %v2241
        %2444 = vmatpush1.msra.mxu0 %v2240
        %2445 = vmatprep.subr.mxu0 %v2247
        %2446 = vmatpush1.msra.mxu0 %v2246
        %2447 = vmatprep.subr.mxu0 %v2253
        %2448 = vmatpush1.msra.mxu0 %v2252
        %2449 = vmatprep.subr.mxu0 %v2259
        %2450 = vmatpush1.msra.mxu0 %v2258
        %2451 = vmatprep.subr.mxu0 %v2265
        %2452 = vmatpush1.msra.mxu0 %v2264
        %2453 = vmatprep.subr.mxu0 %v2271
        %2454 = vmatpush1.msra.mxu0 %v2270
        %2455 = vmatprep.subr.mxu0 %v2277
        %2456 = vmatpush1.msra.mxu0 %v2276
        %2457 = vmatprep.subr.mxu0 %v2283
        %2458 = vmatpush1.msra.mxu0 %v2282
        %2459 = vmatprep.subr.mxu0 %v2289
        %2460 = vmatpush1.msra.mxu0 %v2288
        %2461 = vmatprep.subr.mxu0 %v2295
        %2462 = vmatpush1.msra.mxu0 %v2294
        %2463 = vmatprep.subr.mxu0 %v2301
        %2464 = vmatpush1.msra.mxu0 %v2300
        %2465 = vmatprep.subr.mxu0 %v2307
        %2466 = vmatpush1.msra.mxu0 %v2306
        %2467 = vmatprep.subr.mxu0 %v2313
        %2468 = vmatpush1.msra.mxu0 %v2312
        %2469 = vmatprep.subr.mxu0 %v2319
        %2470 = vmatpush1.msra.mxu0 %v2318
        %2471 = vmatprep.subr.mxu0 %v2325
        %2472 = vmatpush1.msra.mxu0 %v2324
        %2473 = vmatprep.subr.mxu0 %v2331
        %2474 = vmatpush1.msra.mxu0 %v2330
        %2475 = vmatprep.mubr.f32.mxu0 %v2139
        %2476 = vmatmul.mubr.f32.gmra.mrb[0].mxu0 %v2138
        %v2477 = vpop.f32.mrb[0].mxu0
        %v2478 = vadd.f32 0.0, %v2477
        %v2479 = vpop.f32.mrb[0].mxu0
        %v2480 = vadd.f32 0.0, %v2479
        %2481 = vmatprep.mubr.f32.mxu0 %v2141
        %2482 = vmatmul.mubr.f32.gmra.mrb[0].mxu0 %v2140
        %v2483 = vpop.f32.mrb[0].mxu0
        %v2484 = vadd.f32 0.0, %v2483
        %v2485 = vpop.f32.mrb[0].mxu0
        %v2486 = vadd.f32 0.0, %v2485
        %2487 = vdwg.mxu0
        %2488 = vmatprep.subr.mxu0 %v2147
        %2489 = vmatpush1.msra.mxu0 %v2146
        %2490 = vmatprep.subr.mxu0 %v2153
        %2491 = vmatpush1.msra.mxu0 %v2152
        %2492 = vmatprep.subr.mxu0 %v2159
        %2493 = vmatpush1.msra.mxu0 %v2158
        %2494 = vmatprep.subr.mxu0 %v2165
        %2495 = vmatpush1.msra.mxu0 %v2164
        %2496 = vmatprep.subr.mxu0 %v2171
        %2497 = vmatpush1.msra.mxu0 %v2170
        %2498 = vmatprep.subr.mxu0 %v2177
        %2499 = vmatpush1.msra.mxu0 %v2176
        %2500 = vmatprep.subr.mxu0 %v2183
        %2501 = vmatpush1.msra.mxu0 %v2182
        %2502 = vmatprep.subr.mxu0 %v2189
        %2503 = vmatpush1.msra.mxu0 %v2188
        %2504 = vmatprep.subr.mxu0 %v2195
        %2505 = vmatpush1.msra.mxu0 %v2194
        %2506 = vmatprep.subr.mxu0 %v2201
        %2507 = vmatpush1.msra.mxu0 %v2200
        %2508 = vmatprep.subr.mxu0 %v2207
        %2509 = vmatpush1.msra.mxu0 %v2206
        %2510 = vmatprep.subr.mxu0 %v2213
        %2511 = vmatpush1.msra.mxu0 %v2212
        %2512 = vmatprep.subr.mxu0 %v2219
        %2513 = vmatpush1.msra.mxu0 %v2218
        %2514 = vmatprep.subr.mxu0 %v2225
        %2515 = vmatpush1.msra.mxu0 %v2224
        %2516 = vmatprep.subr.mxu0 %v2231
        %2517 = vmatpush1.msra.mxu0 %v2230
        %2518 = vmatprep.subr.mxu0 %v2237
        %2519 = vmatpush1.msra.mxu0 %v2236
        %2520 = vmatprep.subr.mxu0 %v2243
        %2521 = vmatpush1.msra.mxu0 %v2242
        %2522 = vmatprep.subr.mxu0 %v2249
        %2523 = vmatpush1.msra.mxu0 %v2248
        %2524 = vmatprep.subr.mxu0 %v2255
        %2525 = vmatpush1.msra.mxu0 %v2254
        %2526 = vmatprep.subr.mxu0 %v2261
        %2527 = vmatpush1.msra.mxu0 %v2260
        %2528 = vmatprep.subr.mxu0 %v2267
        %2529 = vmatpush1.msra.mxu0 %v2266
        %2530 = vmatprep.subr.mxu0 %v2273
        %2531 = vmatpush1.msra.mxu0 %v2272
        %2532 = vmatprep.subr.mxu0 %v2279
        %2533 = vmatpush1.msra.mxu0 %v2278
        %2534 = vmatprep.subr.mxu0 %v2285
        %2535 = vmatpush1.msra.mxu0 %v2284
        %2536 = vmatprep.subr.mxu0 %v2291
        %2537 = vmatpush1.msra.mxu0 %v2290
        %2538 = vmatprep.subr.mxu0 %v2297
        %2539 = vmatpush1.msra.mxu0 %v2296
        %2540 = vmatprep.subr.mxu0 %v2303
        %2541 = vmatpush1.msra.mxu0 %v2302
        %2542 = vmatprep.subr.mxu0 %v2309
        %2543 = vmatpush1.msra.mxu0 %v2308
        %2544 = vmatprep.subr.mxu0 %v2315
        %2545 = vmatpush1.msra.mxu0 %v2314
        %2546 = vmatprep.subr.mxu0 %v2321
        %2547 = vmatpush1.msra.mxu0 %v2320
        %2548 = vmatprep.subr.mxu0 %v2327
        %2549 = vmatpush1.msra.mxu0 %v2326
        %2550 = vmatprep.subr.mxu0 %v2333
        %2551 = vmatpush1.msra.mxu0 %v2332
        %2552 = vmatprep.mubr.f32.mxu0 %v2139
        %2553 = vmatmul.mubr.f32.gmra.mrb[0].mxu0 %v2138
        %v2554 = vpop.f32.mrb[0].mxu0
        %v2555 = vadd.f32 0.0, %v2554
        %v2556 = vpop.f32.mrb[0].mxu0
        %v2557 = vadd.f32 0.0, %v2556
        %2558 = vmatprep.mubr.f32.mxu0 %v2141
        %2559 = vmatmul.mubr.f32.gmra.mrb[0].mxu0 %v2140
        %v2560 = vpop.f32.mrb[0].mxu0
        %v2561 = vadd.f32 0.0, %v2560
        %v2562 = vpop.f32.mrb[0].mxu0
        %v2563 = vadd.f32 0.0, %v2562
        %2564 = vdwg.mxu0
        %2565 = vmatprep.subr.mxu0 %v2403
        %2566 = vmatpush1.msra.mxu0 %v2401
        %2567 = vmatprep.subr.mxu0 %v2409
        %2568 = vmatpush1.msra.mxu0 %v2407
        %2569 = vmatprep.subr.mxu0 0.0
        %2570 = vmatpush1.msra.mxu0 0.0
        %2571 = vmatprep.subr.mxu0 0.0
        %2572 = vmatpush1.msra.mxu0 0.0
        %2573 = vmatprep.subr.mxu0 0.0
        %2574 = vmatpush1.msra.mxu0 0.0
        %2575 = vmatprep.subr.mxu0 0.0
        %2576 = vmatpush1.msra.mxu0 0.0
        %2577 = vmatprep.subr.mxu0 0.0
        %2578 = vmatpush1.msra.mxu0 0.0
        %2579 = vmatprep.subr.mxu0 0.0
        %2580 = vmatpush1.msra.mxu0 0.0
        %2581 = vmatprep.subr.mxu0 0.0
        %2582 = vmatpush1.msra.mxu0 0.0
        %2583 = vmatprep.subr.mxu0 0.0
        %2584 = vmatpush1.msra.mxu0 0.0
        %2585 = vmatprep.subr.mxu0 0.0
        %2586 = vmatpush1.msra.mxu0 0.0
        %2587 = vmatprep.subr.mxu0 0.0
        %2588 = vmatpush1.msra.mxu0 0.0
        %2589 = vmatprep.subr.mxu0 0.0
        %2590 = vmatpush1.msra.mxu0 0.0
        %2591 = vmatprep.subr.mxu0 0.0
        %2592 = vmatpush1.msra.mxu0 0.0
        %2593 = vmatprep.subr.mxu0 0.0
        %2594 = vmatpush1.msra.mxu0 0.0
        %2595 = vmatprep.subr.mxu0 0.0
        %2596 = vmatpush1.msra.mxu0 0.0
        %2597 = vmatprep.subr.mxu0 0.0
        %2598 = vmatpush1.msra.mxu0 0.0
        %2599 = vmatprep.subr.mxu0 0.0
        %2600 = vmatpush1.msra.mxu0 0.0
        %2601 = vmatprep.subr.mxu0 0.0
        %2602 = vmatpush1.msra.mxu0 0.0
        %2603 = vmatprep.subr.mxu0 0.0
        %2604 = vmatpush1.msra.mxu0 0.0
        %2605 = vmatprep.subr.mxu0 0.0
        %2606 = vmatpush1.msra.mxu0 0.0
        %2607 = vmatprep.subr.mxu0 0.0
        %2608 = vmatpush1.msra.mxu0 0.0
        %2609 = vmatprep.subr.mxu0 0.0
        %2610 = vmatpush1.msra.mxu0 0.0
        %2611 = vmatprep.subr.mxu0 0.0
        %2612 = vmatpush1.msra.mxu0 0.0
        %2613 = vmatprep.subr.mxu0 0.0
        %2614 = vmatpush1.msra.mxu0 0.0
        %2615 = vmatprep.subr.mxu0 0.0
        %2616 = vmatpush1.msra.mxu0 0.0
        %2617 = vmatprep.subr.mxu0 0.0
        %2618 = vmatpush1.msra.mxu0 0.0
        %2619 = vmatprep.subr.mxu0 0.0
        %2620 = vmatpush1.msra.mxu0 0.0
        %2621 = vmatprep.subr.mxu0 0.0
        %2622 = vmatpush1.msra.mxu0 0.0
        %2623 = vmatprep.subr.mxu0 0.0
        %2624 = vmatpush1.msra.mxu0 0.0
        %2625 = vmatprep.subr.mxu0 0.0
        %2626 = vmatpush1.msra.mxu0 0.0
        %2627 = vmatprep.subr.mxu0 0.0
        %2628 = vmatpush1.msra.mxu0 0.0
        %2629 = vmatprep.mubr.f32.mxu0 0.0
        %2630 = vmatmul.mubr.f32.gmra.mrb[0].mxu0 %v727
        %v2631 = vpop.f32.mrb[0].mxu0
        %v2632 = vadd.f32 0.0, %v2631
        %v2633 = vpop.f32.mrb[0].mxu0
        %v2634 = vadd.f32 0.0, %v2633
        %2635 = vmatprep.mubr.f32.mxu0 0.0
        %2636 = vmatmul.mubr.f32.gmra.mrb[0].mxu0 %v730
        %v2637 = vpop.f32.mrb[0].mxu0
        %v2638 = vadd.f32 0.0, %v2637
        %v2639 = vpop.f32.mrb[0].mxu0
        %v2640 = vadd.f32 0.0, %v2639
        %2641 = vdwg.mxu0
        %v2642 = vadd.f32 %v2478, %v2632
        %v2643 = vadd.f32 %v2480, %v2634
        %v2644 = vadd.f32 %v2484, %v2638
        %v2645 = vadd.f32 %v2486, %v2640
        %2646 = vmatprep.subr.mxu0 %v2557
        %2647 = vmatpush1.msra.mxu0 %v2555
        %2648 = vmatprep.subr.mxu0 %v2563
        %2649 = vmatpush1.msra.mxu0 %v2561
        %2650 = vmatprep.subr.mxu0 0.0
        %2651 = vmatpush1.msra.mxu0 0.0
        %2652 = vmatprep.subr.mxu0 0.0
        %2653 = vmatpush1.msra.mxu0 0.0
        %2654 = vmatprep.subr.mxu0 0.0
        %2655 = vmatpush1.msra.mxu0 0.0
        %2656 = vmatprep.subr.mxu0 0.0
        %2657 = vmatpush1.msra.mxu0 0.0
        %2658 = vmatprep.subr.mxu0 0.0
        %2659 = vmatpush1.msra.mxu0 0.0
        %2660 = vmatprep.subr.mxu0 0.0
        %2661 = vmatpush1.msra.mxu0 0.0
        %2662 = vmatprep.subr.mxu0 0.0
        %2663 = vmatpush1.msra.mxu0 0.0
        %2664 = vmatprep.subr.mxu0 0.0
        %2665 = vmatpush1.msra.mxu0 0.0
        %2666 = vmatprep.subr.mxu0 0.0
        %2667 = vmatpush1.msra.mxu0 0.0
        %2668 = vmatprep.subr.mxu0 0.0
        %2669 = vmatpush1.msra.mxu0 0.0
        %2670 = vmatprep.subr.mxu0 0.0
        %2671 = vmatpush1.msra.mxu0 0.0
        %2672 = vmatprep.subr.mxu0 0.0
        %2673 = vmatpush1.msra.mxu0 0.0
        %2674 = vmatprep.subr.mxu0 0.0
        %2675 = vmatpush1.msra.mxu0 0.0
        %2676 = vmatprep.subr.mxu0 0.0
        %2677 = vmatpush1.msra.mxu0 0.0
        %2678 = vmatprep.subr.mxu0 0.0
        %2679 = vmatpush1.msra.mxu0 0.0
        %2680 = vmatprep.subr.mxu0 0.0
        %2681 = vmatpush1.msra.mxu0 0.0
        %2682 = vmatprep.subr.mxu0 0.0
        %2683 = vmatpush1.msra.mxu0 0.0
        %2684 = vmatprep.subr.mxu0 0.0
        %2685 = vmatpush1.msra.mxu0 0.0
        %2686 = vmatprep.subr.mxu0 0.0
        %2687 = vmatpush1.msra.mxu0 0.0
        %2688 = vmatprep.subr.mxu0 0.0
        %2689 = vmatpush1.msra.mxu0 0.0
        %2690 = vmatprep.subr.mxu0 0.0
        %2691 = vmatpush1.msra.mxu0 0.0
        %2692 = vmatprep.subr.mxu0 0.0
        %2693 = vmatpush1.msra.mxu0 0.0
        %2694 = vmatprep.subr.mxu0 0.0
        %2695 = vmatpush1.msra.mxu0 0.0
        %2696 = vmatprep.subr.mxu0 0.0
        %2697 = vmatpush1.msra.mxu0 0.0
        %2698 = vmatprep.subr.mxu0 0.0
        %2699 = vmatpush1.msra.mxu0 0.0
        %2700 = vmatprep.subr.mxu0 0.0
        %2701 = vmatpush1.msra.mxu0 0.0
        %2702 = vmatprep.subr.mxu0 0.0
        %2703 = vmatpush1.msra.mxu0 0.0
        %2704 = vmatprep.subr.mxu0 0.0
        %2705 = vmatpush1.msra.mxu0 0.0
        %2706 = vmatprep.subr.mxu0 0.0
        %2707 = vmatpush1.msra.mxu0 0.0
        %2708 = vmatprep.subr.mxu0 0.0
        %2709 = vmatpush1.msra.mxu0 0.0
        %2710 = vmatprep.mubr.f32.mxu0 0.0
        %2711 = vmatmul.mubr.f32.gmra.mrb[0].mxu0 %v810
        %v2712 = vpop.f32.mrb[0].mxu0
        %v2713 = vadd.f32 0.0, %v2712
        %v2714 = vpop.f32.mrb[0].mxu0
        %v2715 = vadd.f32 0.0, %v2714
        %2716 = vmatprep.mubr.f32.mxu0 0.0
        %2717 = vmatmul.mubr.f32.gmra.mrb[0].mxu0 %v813
        %v2718 = vpop.f32.mrb[0].mxu0
        %v2719 = vadd.f32 0.0, %v2718
        %v2720 = vpop.f32.mrb[0].mxu0
        %v2721 = vadd.f32 0.0, %v2720
        %2722 = vdwg.mxu0
        %v2723 = vadd.f32 %v2642, %v2713
        %v2724 = vadd.f32 %v2643, %v2715
        %v2725 = vadd.f32 %v2644, %v2719
        %v2726 = vadd.f32 %v2645, %v2721
        %v2727 = vld [vmem:[%s12] sm:$0x3]
        %v2729 = vlaneseq
        %v2730 = vshrl.u32 %v2729, 7
        %v2731 = vsub.s32 0, %v2730
        %v2732 = vrot.slane %v2727, %v2731
        %v2733 = vlaneseq
        %v2734 = vshrl.u32 %v2733, 7
        %v2735 = vsub.s32 1, %v2734
        %v2736 = vrot.slane %v2727, %v2735
        %v2739 = vadd.f32 %v2723, %v2732
        %v2740 = vadd.f32 %v2724, %v2736
        %v2741 = vadd.f32 %v2725, %v2732
        %v2742 = vadd.f32 %v2726, %v2736
        %v2743 = vmax.f32 %v2739, 0.0
        %v2744 = vmax.f32 %v2740, 0.0
        %v2745 = vmax.f32 %v2741, 0.0
        %v2746 = vmax.f32 %v2742, 0.0
        %v2747 = vadd.f32 %v2743, %v2745
        %v2748 = vrot.slane %v2747, 4
        %v2749 = vadd.f32 %v2747, %v2748
        %v2750 = vrot.slane %v2749, 2
        %v2751 = vadd.f32 %v2749, %v2750
        %v2752 = vrot.slane %v2751, 1
        %v2753 = vadd.f32 %v2751, %v2752
        %v2754 = vadd.f32 %v2744, %v2746
        %v2755 = vrot.slane %v2754, 4
        %v2756 = vadd.f32 %v2754, %v2755
        %v2757 = vrot.slane %v2756, 2
        %v2758 = vadd.f32 %v2756, %v2757
        %v2759 = vrot.slane %v2758, 1
        %v2760 = vadd.f32 %v2758, %v2759
        %v2761 = vld [vmem:[%s13] sm:$0xff]
        %v2762 = vld [vmem:[%s13 + $0x8] sm:$0xff]
        %v2763 = vld [vmem:[%s13 + $0x10] sm:$0xff]
        %v2764 = vld [vmem:[%s13 + $0x18] sm:$0xff]
        %v2765 = vld [vmem:[%s13 + $0x20] sm:$0xff]
        %v2766 = vld [vmem:[%s13 + $0x28] sm:$0xff]
        %v2767 = vld [vmem:[%s13 + $0x30] sm:$0xff]
        %v2768 = vld [vmem:[%s13 + $0x38] sm:$0xff]
        %v2769 = vld [vmem:[%s13 + $0x40] sm:$0xff]
        %v2770 = vld [vmem:[%s13 + $0x48] sm:$0xff]
        %v2771 = vld [vmem:[%s13 + $0x50] sm:$0xff]
        %v2772 = vld [vmem:[%s13 + $0x58] sm:$0xff]
        %v2773 = vld [vmem:[%s13 + $0x60] sm:$0xff]
        %v2774 = vld [vmem:[%s13 + $0x68] sm:$0xff]
        %v2775 = vld [vmem:[%s13 + $0x70] sm:$0xff]
        %v2776 = vld [vmem:[%s13 + $0x78] sm:$0xff]
        %v2777 = vld [vmem:[%s13 + $0x80] sm:$0xff]
        %v2778 = vld [vmem:[%s13 + $0x88] sm:$0xff]
        %v2779 = vld [vmem:[%s13 + $0x90] sm:$0xff]
        %v2780 = vld [vmem:[%s13 + $0x98] sm:$0xff]
        %v2781 = vld [vmem:[%s13 + $0xa0] sm:$0xff]
        %v2782 = vld [vmem:[%s13 + $0xa8] sm:$0xff]
        %v2783 = vld [vmem:[%s13 + $0xb0] sm:$0xff]
        %v2784 = vld [vmem:[%s13 + $0xb8] sm:$0xff]
        %v2785 = vld [vmem:[%s13 + $0xc0] sm:$0xff]
        %v2786 = vld [vmem:[%s13 + $0xc8] sm:$0xff]
        %v2787 = vld [vmem:[%s13 + $0xd0] sm:$0xff]
        %v2788 = vld [vmem:[%s13 + $0xd8] sm:$0xff]
        %v2789 = vld [vmem:[%s13 + $0xe0] sm:$0xff]
        %v2790 = vld [vmem:[%s13 + $0xe8] sm:$0xff]
        %v2791 = vld [vmem:[%s13 + $0xf0] sm:$0xff]
        %v2792 = vld [vmem:[%s13 + $0xf8] sm:$0xff]
        %v2793 = vld [vmem:[%s14] sm:$0x1]
        %2794 = vmatprep.subr.mxu0 0.0
        %2795 = vmatpush1.msra.mxu0 %v2761
        %2796 = vmatprep.subr.mxu0 0.0
        %2797 = vmatpush1.msra.mxu0 %v2762
        %2798 = vmatprep.subr.mxu0 0.0
        %2799 = vmatpush1.msra.mxu0 %v2763
        %2800 = vmatprep.subr.mxu0 0.0
        %2801 = vmatpush1.msra.mxu0 %v2764
        %2802 = vmatprep.subr.mxu0 0.0
        %2803 = vmatpush1.msra.mxu0 %v2765
        %2804 = vmatprep.subr.mxu0 0.0
        %2805 = vmatpush1.msra.mxu0 %v2766
        %2806 = vmatprep.subr.mxu0 0.0
        %2807 = vmatpush1.msra.mxu0 %v2767
        %2808 = vmatprep.subr.mxu0 0.0
        %2809 = vmatpush1.msra.mxu0 %v2768
        %2810 = vmatprep.subr.mxu0 0.0
        %2811 = vmatpush1.msra.mxu0 %v2769
        %2812 = vmatprep.subr.mxu0 0.0
        %2813 = vmatpush1.msra.mxu0 %v2770
        %2814 = vmatprep.subr.mxu0 0.0
        %2815 = vmatpush1.msra.mxu0 %v2771
        %2816 = vmatprep.subr.mxu0 0.0
        %2817 = vmatpush1.msra.mxu0 %v2772
        %2818 = vmatprep.subr.mxu0 0.0
        %2819 = vmatpush1.msra.mxu0 %v2773
        %2820 = vmatprep.subr.mxu0 0.0
        %2821 = vmatpush1.msra.mxu0 %v2774
        %2822 = vmatprep.subr.mxu0 0.0
        %2823 = vmatpush1.msra.mxu0 %v2775
        %2824 = vmatprep.subr.mxu0 0.0
        %2825 = vmatpush1.msra.mxu0 %v2776
        %2826 = vmatprep.subr.mxu0 0.0
        %2827 = vmatpush1.msra.mxu0 %v2777
        %2828 = vmatprep.subr.mxu0 0.0
        %2829 = vmatpush1.msra.mxu0 %v2778
        %2830 = vmatprep.subr.mxu0 0.0
        %2831 = vmatpush1.msra.mxu0 %v2779
        %2832 = vmatprep.subr.mxu0 0.0
        %2833 = vmatpush1.msra.mxu0 %v2780
        %2834 = vmatprep.subr.mxu0 0.0
        %2835 = vmatpush1.msra.mxu0 %v2781
        %2836 = vmatprep.subr.mxu0 0.0
        %2837 = vmatpush1.msra.mxu0 %v2782
        %2838 = vmatprep.subr.mxu0 0.0
        %2839 = vmatpush1.msra.mxu0 %v2783
        %2840 = vmatprep.subr.mxu0 0.0
        %2841 = vmatpush1.msra.mxu0 %v2784
        %2842 = vmatprep.subr.mxu0 0.0
        %2843 = vmatpush1.msra.mxu0 %v2785
        %2844 = vmatprep.subr.mxu0 0.0
        %2845 = vmatpush1.msra.mxu0 %v2786
        %2846 = vmatprep.subr.mxu0 0.0
        %2847 = vmatpush1.msra.mxu0 %v2787
        %2848 = vmatprep.subr.mxu0 0.0
        %2849 = vmatpush1.msra.mxu0 %v2788
        %2850 = vmatprep.subr.mxu0 0.0
        %2851 = vmatpush1.msra.mxu0 %v2789
        %2852 = vmatprep.subr.mxu0 0.0
        %2853 = vmatpush1.msra.mxu0 %v2790
        %2854 = vmatprep.subr.mxu0 0.0
        %2855 = vmatpush1.msra.mxu0 %v2791
        %2856 = vmatprep.subr.mxu0 0.0
        %2857 = vmatpush1.msra.mxu0 %v2792
        %2858 = vmatprep.mubr.f32.mxu0 %v2760
        %2859 = vmatmul.mubr.f32.gmra.mrb[0].mxu0 %v2753
        %v2860 = vpop.f32.mrb[0].mxu0
        %v2861 = vadd.f32 %v2793, %v2860
        %v2862 = vpop.f32.mrb[0].mxu0
        %2863 = vdwg.mxu0
        %vm2864 = vcmask 73728
        %2865 = vst.msk [vmem:[%s530] sm:$0x1] %vm2864, %v2861
        %s2866 = sand.u32 %s359, 1
        %s2867 = scalar_lea.sflag [#allocation4], %s2866
        %s2868 = sand.u32 %s359, 1
        %s2869 = scalar_lea.vmem [#allocation8], %s2868
        // Predicated region
        $region93: #{sample_forward.1} parent=79 // pred_check
          %p2870 = pneg %p369
        $region94: #{sample_forward.1} parent=79 // pred_check_branch
          %2872 = sbr.rel (%p2870) target = $region96
        $region95: #{sample_forward.1} parent=79 // pred_region
          %s2874 = ssub.s32 16, 16
          %2875 = vsyncadd %s2867, %s2874
          %s2876 = smul.addr %s31, 16
          %s2877 = scalar_lea.hbm %s15, %s2876
          %s2879 = sshll.u32 %s2869, 4
          %s2880 = int_to_ptr.vmem [resolvable:$true] %s2879
          %2882 = dma.vmem_to_hbm [thread:$0]  %s2880, 16, %s2877, %s2867
        $region96: #{sample_forward.1} parent=79 // pred_fallthru
          _
      $region80: #{sample_forward.1} parent=5 // pred_fallthru
        _
      %p2883 = scmp.le.s32.totalorder 2, %s26
      // Predicated region
      $region97: #{sample_forward.1} parent=5 // pred_check
        %p2884 = pneg %p2883
      $region98: #{sample_forward.1} parent=5 // pred_check_branch
        %2886 = sbr.rel (%p2884) target = $region100
      $region99: #{sample_forward.1} parent=5 // pred_region
        %s2887 = ssub.s32 %s26, 2
        // Predicated region
        $region101: #{sample_forward.1} parent=99 // pred_check
          %p2888 = pneg %p375
        $region102: #{sample_forward.1} parent=99 // pred_check_branch
          %2890 = sbr.rel (%p2888) target = $region104
        $region103: #{sample_forward.1} parent=99 // pred_region
          %s2891 = sand.u32 %s360, 1
          %s2892 = scalar_lea.sflag [#allocation4], %s2891
          %s2893 = sand.u32 %s360, 1
          %s2894 = scalar_lea.vmem [#allocation8], %s2893
          %2895 = dma.done %s2892, 16
        $region104: #{sample_forward.1} parent=99 // pred_fallthru
          _
      $region100: #{sample_forward.1} parent=5 // pred_fallthru
        _
    $region6: #{sample_forward.1} parent=1 // loop_footer
      %s30 = sadd.s32 1, %s26
    $region7: #{sample_forward.1} parent=1 // loop_footer_branch
      %25 = sbr.rel target = $region3
    $region8: #{sample_forward.1} parent=1 // loop_exit
      _
    %2896 = vsyncpa [#allocation3], 1
    %s2897 = scalar_lea.sflag [#allocation3], 1
    %2898 = vsyncpa %s2897, 1
    %2899 = vsyncpa [#allocation6], 1
    %2900 = vsyncpa [#allocation4], 1
    %s2901 = scalar_lea.sflag [#allocation4], 1
    %2902 = vsyncpa %s2901, 1

</llo_original>
